<compile_context>
chip_gen: v7x
topology: tpu7x:2x2x1
jax: 0.10.0
libtpu: 0.0.40
codegen_flags: <defaults>
</compile_context>

<pallas_src>
import math

import jax
import jax.numpy as jnp
from jax.experimental import pallas as pl
from jax.experimental.pallas import tpu as pltpu

EPS = 1e-5  # BatchNorm1d eps


def _prelu(x, a):
    return jnp.where(x >= 0, x, a * x)


def _pad128(n):
    return max(128, -(-n // 128) * 128)


# ------------------------------- fused kernel -------------------------------

def _build_kernel(cfg):
    L = cfg["num_hops"]
    n1 = cfg["n_layers_1"]
    Hp = cfg["hidden_pad"]
    hid2p = cfg["hidden2_pad"]
    n_gc = cfg["n_gc"]
    xp_scale = cfg["xp_scale"]
    h0_scale = cfg["h0_scale"]

    def kernel(slopes_ref, feat_ref, *refs):
        # slopes_ref : SMEM f32[L + 2]  (per-hop FFN PReLU, SIGNV2 PReLU, FFNII PReLU)
        # feat_ref   : VMEM bf16[L, TILE_N, S*F]
        # refs       : folded bf16 weights / f32 bias rows, then out_ref last.
        out_ref = refs[-1]
        it = iter(refs[:-1])
        ffn_wb = [(next(it), next(it)) for _ in range(n1)]   # ([L,K,Hp] bf16, [L,1,Hp] f32)
        wd1_ref, bd1_ref = next(it), next(it)                # [L*Hp, hid2p], [1, hid2p]
        gc_wb = [(next(it), next(it)) for _ in range(n_gc)]  # [hid2p, hid2p], [1, hid2p]
        wdl_ref, bdl_ref = next(it), next(it)                # [hid2p, ncls_pad], [1, ncls_pad]

        tile_n = out_ref.shape[0]
        acc = jnp.zeros((tile_n, hid2p), jnp.float32)

        # ---- per-hop: aggregation+FeedForwardNet (statically unrolled) ----
        for h in range(L):
            x = feat_ref[h]                       # [TILE_N, S*F] bf16
            y = None
            for li in range(n1):
                w_ref, b_ref = ffn_wb[li]
                y = jnp.dot(x, w_ref[h],
                            preferred_element_type=jnp.float32) + b_ref[h]
                if li < n1 - 1:
                    # BatchNorm already folded into w; dropout = identity.
                    y = _prelu(y, slopes_ref[h])  # FeedForwardNet's shared PReLU
                    x = y.astype(jnp.bfloat16)
            # SIGNV2-level PReLU on the concat (elementwise -> per hop); dropout = id.
            ph = _prelu(y, slopes_ref[L])
            # torch.cat(hidden, -1) @ Wd1  ==  sum_h  hidden_h @ Wd1[h-block]
            # (Dense1 residual, when applicable, is an identity block inside wd1.)
            acc = acc + jnp.dot(ph.astype(jnp.bfloat16),
                                wd1_ref[h * Hp:(h + 1) * Hp, :],
                                preferred_element_type=jnp.float32)

        # ---- lr_output: FeedForwardNetII ----
        z = acc + bd1_ref[...]                    # Dense1 (+ folded BatchNorm / residual)
        a_ff = slopes_ref[L + 1]                  # FFNII's shared PReLU slope

        x = z
        if n_gc > 0:
            ah0 = h0_scale * z                    # hoisted out of the GC loop
            for gi in range(n_gc):                # GraphConvolution middle layers
                xp = _prelu(x, a_ff)              # dropout = identity
                support = (xp if xp_scale == 1.0 else xp_scale * xp) + ah0
                wg_ref, bg_ref = gc_wb[gi]        # (1-alpha) & BN folded into wg
                g = jnp.dot(support.astype(jnp.bfloat16), wg_ref[...],
                            preferred_element_type=jnp.float32) + bg_ref[...]
                x = g + xp                        # residual (in == out for GC)

        xp = _prelu(x, a_ff)                      # dropout = identity
        # Last Dense (+ folded BN; residual folded into wdl as identity block).
        o = jnp.dot(xp.astype(jnp.bfloat16), wdl_ref[...],
                    preferred_element_type=jnp.float32) + bdl_ref[...]
        out_ref[...] = o.astype(out_ref.dtype)    # lane-dense (128-wide) store

    return kernel


# --------------------------- parameter construction -------------------------

def build_sign_v2(key, *, subset_dim, feat_dim, hidden, nclass, num_hops,
                  n_layers_1, n_layers_2, alpha, bns=True):
    """Mirror SIGNV2's torch init, then fold agg/BatchNorm/bias/residuals into weights."""
    assert n_layers_1 >= 1
    assert n_layers_2 >= 2  # TODO(synk): n_layers_2 == 1 (single Dense head) not wired up.
    SF = subset_dim * feat_dim
    s_bn = 1.0 / math.sqrt(1.0 + EPS)   # eval BN at init: gamma=1, beta=0, mean=0, var=1
    gain_relu = math.sqrt(2.0)

    H_pad = _pad128(hidden)             # 128-lane padded hidden
    hid2 = hidden                       # FFNII hidden
    hid2_pad = H_pad
    ncls_pad = _pad128(nclass)

    n_keys = num_hops * (1 + n_layers_1) + n_layers_2 + 2
    keys = iter(jax.random.split(key, n_keys))

    def xavier(k, shape, gain=1.0):
        fan_in, fan_out = shape
        bound = gain * math.sqrt(6.0 / (fan_in + fan_out))
        return jax.random.uniform(k, shape, jnp.float32, -bound, bound)

    def dense_w(k, din, dout):
        stdv = 1.0 / math.sqrt(dout)    # torch Dense / GraphConvolution init
        return jax.random.uniform(k, (din, dout), jnp.float32, -stdv, stdv)

    def pad_to(w, rows, cols):
        return jnp.pad(w, ((0, rows - w.shape[0]), (0, cols - w.shape[1])))

    # ---- per-hop FeedForwardNet, with agg weight and eval-BN folded in ----
    w_layers = [[] for _ in range(n_layers_1)]
    b_layers = [[] for _ in range(n_layers_1)]
    for _ in range(num_hops):
        agg = xavier(next(keys), (subset_dim, feat_dim))
        for li in range(n_layers_1):
            din = feat_dim if li == 0 else hidden
            w = xavier(next(keys), (din, hidden), gain_relu)
            if li == 0:
                # (feat * agg).sum(1) @ W  ==  feat.reshape(N, S*F) @ W_folded
                w = (agg[:, :, None] * w[None, :, :]).reshape(SF, hidden)
            if li < n_layers_1 - 1 and bns:
                w = w * s_bn                                  # BN beta is 0 at eval init
            rows = SF if li == 0 else H_pad
            w_layers[li].append(pad_to(w, rows, H_pad))       # zero-pad to 128 lanes
            b_layers[li].append(jnp.zeros((1, H_pad), jnp.float32))  # nn.init.zeros_

    operands = []
    for li in range(n_layers_1):
        operands.append(jnp.stack(w_layers[li]).astype(jnp.bfloat16))  # [L, K, Hp]
        operands.append(jnp.stack(b_layers[li]))                       # [L, 1, Hp]

    # ---- lr_output: FeedForwardNetII(num_hops*hidden, hidden, nclass) ----
    din0 = num_hops * hidden
    res_d1 = (din0 == hid2)                                   # torch Dense residual cond.
    wd1 = dense_w(next(keys), din0, hid2) * s_bn              # Dense "bias" == BatchNorm
    if res_d1:
        wd1 = wd1 + jnp.eye(hid2, dtype=jnp.float32)          # fold residual add
    # Re-block rows so hop h occupies rows [h*H_pad, h*H_pad + hidden).
    wd1_pad = jnp.zeros((num_hops * H_pad, hid2_pad), jnp.float32)
    for h in range(num_hops):
        wd1_pad = wd1_pad.at[h * H_pad:h * H_pad + hidden, :hid2].set(
            wd1[h * hidden:(h + 1) * hidden, :])
    operands += [wd1_pad.astype(jnp.bfloat16), jnp.zeros((1, hid2_pad), jnp.float32)]

    n_gc = n_layers_2 - 2
    fold_alpha = (n_gc > 0) and (abs(1.0 - float(alpha)) > 1e-6)
    xp_scale = 1.0 if fold_alpha else (1.0 - float(alpha))
    h0_scale = (float(alpha) / (1.0 - float(alpha))) if fold_alpha else float(alpha)
    for _ in range(n_gc):
        wg = dense_w(next(keys), hid2, hid2)
        if bns:
            wg = wg * s_bn
        if fold_alpha:
            wg = wg * (1.0 - float(alpha))                    # fold (1-alpha) scale
        operands += [pad_to(wg, hid2_pad, hid2_pad).astype(jnp.bfloat16),
                     jnp.zeros((1, hid2_pad), jnp.float32)]

    res_dl = (hid2 == nclass)
    wdl = dense_w(next(keys), hid2, nclass) * s_bn
    if res_dl:
        wdl = wdl + jnp.eye(hid2, dtype=jnp.float32)          # fold residual add
    operands += [pad_to(wdl, hid2_pad, ncls_pad).astype(jnp.bfloat16),
                 jnp.zeros((1, ncls_pad), jnp.float32)]

    # PReLU slopes (each nn.PReLU() inits to 0.25): [hop FFNs..., SIGNV2, FFNII]
    slopes = jnp.full((num_hops + 2,), 0.25, jnp.float32)

    cfg = dict(num_hops=num_hops, n_layers_1=n_layers_1,
               hidden=hidden, hidden_pad=H_pad, hidden2=hid2, hidden2_pad=hid2_pad,
               n_gc=n_gc, nclass=nclass, nclass_pad=ncls_pad,
               subset_dim=subset_dim, feat_dim=feat_dim,
               alpha=float(alpha), xp_scale=float(xp_scale), h0_scale=float(h0_scale))
    return dict(cfg=cfg, slopes=slopes, operands=operands)


# --------------------------------- forward ----------------------------------

def _pick_tile_n(N, max_tile=512):
    """128-multiple tile; prefer >=2 tiles and an even tile count (v7x 2-TC balance)."""
    best_even, best_multi = None, None
    for t in range(128, max_tile + 1, 128):
        n_tiles = -(-N // t)
        if n_tiles >= 2:
            best_multi = t
            if n_tiles % 2 == 0:
                best_even = t
    if best_even is not None:
        return best_even
    if best_multi is not None:
        return best_multi
    return 128


def prepare_feats(feats, model, tile_n=None):
    """One-time host-side packing to [L, N_pad, S*F] bf16. Reuse across forward calls."""
    cfg = model["cfg"]
    S, F = cfg["subset_dim"], cfg["feat_dim"]
    SF = S * F
    N = feats[0].shape[0]
    if tile_n is None:
        tile_n = _pick_tile_n(N)
    n_pad = -(-N // tile_n) * tile_n
    feat = jnp.stack([f.reshape(N, SF) for f in feats], axis=0).astype(jnp.bfloat16)
    if n_pad != N:
        feat = jnp.pad(feat, ((0, 0), (0, n_pad - N), (0, 0)))
    return dict(feat=feat, n=N, tile_n=tile_n)


def sign_v2_forward(feats, model, *, tile_n=None, out_dtype=jnp.float32,
                    vmem_limit_bytes=None):
    cfg = model["cfg"]
    operands = model["operands"]
    slopes = model["slopes"]
    if not isinstance(feats, dict):
        feats = prepare_feats(feats, model, tile_n)   # slow path: per-call packing
    feat, N, tile_n = feats["feat"], feats["n"], feats["tile_n"]

    L = cfg["num_hops"]
    SF = cfg["subset_dim"] * cfg["feat_dim"]
    ncls_pad = cfg["nclass_pad"]
    n_pad = feat.shape[1]

    def _const_spec(arr):
        nd = arr.ndim
        # Constant weights: block index never changes -> single-buffered in VMEM.
        return pl.BlockSpec(arr.shape, lambda i, s: (0,) * nd,
                            pipeline_mode=pl.Buffered(1))

    in_specs = [pl.BlockSpec((L, tile_n, SF), lambda i, s: (0, i, 0))]
    in_specs += [_const_spec(a) for a in operands]
    out_spec = pl.BlockSpec((tile_n, ncls_pad), lambda i, s: (i, 0))

    if vmem_limit_bytes is None:
        out_bytes = jnp.dtype(out_dtype).itemsize
        weight_bytes = sum(int(a.size) * a.dtype.itemsize for a in operands)
        est = (2 * L * tile_n * SF * 2                      # double-buffered feat block
               + 2 * tile_n * ncls_pad * out_bytes          # double-buffered out block
               + weight_bytes                               # single-buffered constants
               + 6 * tile_n * cfg["hidden2_pad"] * 4)       # live f32 intermediates
        # 2x headroom, clamped so the default is safe on v7x's 64 MiB VMEM.
        # On v5e/v6e (128 MiB) pass vmem_limit_bytes=64-100 MiB and a larger tile_n.
        vmem_limit_bytes = int(min(48 << 20, max(32 << 20, 2 * est)))

    out = pl.pallas_call(
        _build_kernel(cfg),
        out_shape=jax.ShapeDtypeStruct((n_pad, ncls_pad), out_dtype),
        grid_spec=pltpu.PrefetchScalarGridSpec(
            num_scalar_prefetch=1,          # PReLU slopes -> SMEM
            grid=(n_pad // tile_n,),
            in_specs=in_specs,
            out_specs=out_spec),
        compiler_params=pltpu.CompilerParams(
            dimension_semantics=("parallel",),     # shard node tiles on v7x's 2 TCs
            vmem_limit_bytes=vmem_limit_bytes),
    )(slopes, feat, *operands)

    return out[:N, :cfg["nclass"]]


if __name__ == "__main__":
    # Small config: subset_dim=3, feat_dim=16, hidden=32, nclass=4, num_hops=2,
    # n_layers_1=2, n_layers_2=3 (one GraphConvolution), alpha=0.5, bns=True.
    S, F, H, C, L = 3, 16, 32, 4, 2
    N = 300                      # not a tile multiple -> exercises padding path
    key = jax.random.PRNGKey(0)
    kp, kf = jax.random.split(key)
    model = build_sign_v2(kp, subset_dim=S, feat_dim=F, hidden=H, nclass=C,
                          num_hops=L, n_layers_1=2, n_layers_2=3,
                          alpha=0.5, bns=True)
    fkeys = jax.random.split(kf, L)
    feats = [jax.random.normal(fkeys[i], (N, S, F), jnp.float32)
             for i in range(L)]

    prepared = prepare_feats(feats, model)        # one-time host-side packing
    # auto tile_n -> 256 (2 node tiles, even count for v7x's 2 TensorCores)
    out = sign_v2_forward(prepared, model)
    out = jax.block_until_ready(out)
    assert out.shape == (N, C), out.shape
    assert bool(jnp.all(jnp.isfinite(out)))
    print("KERNEL_OK")
</pallas_src>

<mosaic_0001>
module attributes {stable_mosaic.version = 11 : i64} {
  func.func @kernel(%arg0: i32, %arg1: memref<4xf32, #tpu.memory_space<smem>>, %arg2: memref<2x256x48xbf16, #tpu.memory_space<vmem>>, %arg3: memref<2x48x128xbf16, #tpu.memory_space<vmem>>, %arg4: memref<2x1x128xf32, #tpu.memory_space<vmem>>, %arg5: memref<2x128x128xbf16, #tpu.memory_space<vmem>>, %arg6: memref<2x1x128xf32, #tpu.memory_space<vmem>>, %arg7: memref<256x128xbf16, #tpu.memory_space<vmem>>, %arg8: memref<1x128xf32, #tpu.memory_space<vmem>>, %arg9: memref<128x128xbf16, #tpu.memory_space<vmem>>, %arg10: memref<1x128xf32, #tpu.memory_space<vmem>>, %arg11: memref<128x128xbf16, #tpu.memory_space<vmem>>, %arg12: memref<1x128xf32, #tpu.memory_space<vmem>>, %arg13: memref<256x128xf32, #tpu.memory_space<vmem>>) attributes {dimension_semantics = [#tpu.dimension_semantics<parallel>], iteration_bounds = array<i64: 2>, scalar_prefetch = 1 : i64, scratch_operands = 0 : i64, tpu.core_type = #tpu.core_type<tc>, window_params = [{transform_indices = @transform_0, window_bounds = array<i64: 2, 256, 48>}, {pipeline_mode = #tpu.pipeline_mode<synchronous>, transform_indices = @transform_1, window_bounds = array<i64: 2, 48, 128>}, {pipeline_mode = #tpu.pipeline_mode<synchronous>, transform_indices = @transform_2, window_bounds = array<i64: 2, 1, 128>}, {pipeline_mode = #tpu.pipeline_mode<synchronous>, transform_indices = @transform_3, window_bounds = array<i64: 2, 128, 128>}, {pipeline_mode = #tpu.pipeline_mode<synchronous>, transform_indices = @transform_4, window_bounds = array<i64: 2, 1, 128>}, {pipeline_mode = #tpu.pipeline_mode<synchronous>, transform_indices = @transform_5, window_bounds = array<i64: 256, 128>}, {pipeline_mode = #tpu.pipeline_mode<synchronous>, transform_indices = @transform_6, window_bounds = array<i64: 1, 128>}, {pipeline_mode = #tpu.pipeline_mode<synchronous>, transform_indices = @transform_7, window_bounds = array<i64: 128, 128>}, {pipeline_mode = #tpu.pipeline_mode<synchronous>, transform_indices = @transform_8, window_bounds = array<i64: 1, 128>}, {pipeline_mode = #tpu.pipeline_mode<synchronous>, transform_indices = @transform_9, window_bounds = array<i64: 128, 128>}, {pipeline_mode = #tpu.pipeline_mode<synchronous>, transform_indices = @transform_10, window_bounds = array<i64: 1, 128>}, {transform_indices = @transform_11, window_bounds = array<i64: 256, 128>}]} {
    %cst = arith.constant 0.000000e+00 : f32
    %0 = vector.broadcast %cst : f32 to vector<256x128xf32>
    %c0 = arith.constant 0 : index
    %c0_0 = arith.constant 0 : index
    %c0_1 = arith.constant 0 : index
    %1 = vector.load %arg2[%c0, %c0_0, %c0_1] : memref<2x256x48xbf16, #tpu.memory_space<vmem>>, vector<1x256x48xbf16>
    %2 = vector.shape_cast %1 : vector<1x256x48xbf16> to vector<256x48xbf16>
    %c0_2 = arith.constant 0 : index
    %c0_3 = arith.constant 0 : index
    %c0_4 = arith.constant 0 : index
    %3 = vector.load %arg3[%c0_2, %c0_3, %c0_4] : memref<2x48x128xbf16, #tpu.memory_space<vmem>>, vector<1x48x128xbf16>
    %4 = vector.shape_cast %3 : vector<1x48x128xbf16> to vector<48x128xbf16>
    %cst_5 = arith.constant dense<0.000000e+00> : vector<256x128xf32>
    %5 = tpu.matmul %2, %4, %cst_5 {dimension_numbers = #tpu.dot_dimension_numbers<[1], [0], [0], [1], [0, 0, 1, 1], [], []>} : vector<256x48xbf16>, vector<48x128xbf16>, vector<256x128xf32> -> vector<256x128xf32>
    %c0_6 = arith.constant 0 : index
    %c0_7 = arith.constant 0 : index
    %c0_8 = arith.constant 0 : index
    %6 = vector.load %arg4[%c0_6, %c0_7, %c0_8] : memref<2x1x128xf32, #tpu.memory_space<vmem>>, vector<1x1x128xf32>
    %7 = vector.shape_cast %6 : vector<1x1x128xf32> to vector<1x128xf32>
    %8 = vector.broadcast %7 : vector<1x128xf32> to vector<256x128xf32>
    %9 = arith.addf %5, %8 : vector<256x128xf32>
    %c0_9 = arith.constant 0 : index
    %10 = memref.load %arg1[%c0_9] : memref<4xf32, #tpu.memory_space<smem>>
    %cst_10 = arith.constant 0.000000e+00 : f32
    %11 = vector.broadcast %cst_10 : f32 to vector<256x128xf32>
    %12 = arith.cmpf oge, %9, %11 : vector<256x128xf32>
    %13 = vector.broadcast %10 : f32 to vector<256x128xf32>
    %14 = arith.mulf %13, %9 : vector<256x128xf32>
    %15 = arith.select %12, %9, %14 : vector<256x128xi1>, vector<256x128xf32>
    %16 = arith.truncf %15 : vector<256x128xf32> to vector<256x128xbf16>
    %c0_11 = arith.constant 0 : index
    %c0_12 = arith.constant 0 : index
    %c0_13 = arith.constant 0 : index
    %17 = vector.load %arg5[%c0_11, %c0_12, %c0_13] : memref<2x128x128xbf16, #tpu.memory_space<vmem>>, vector<1x128x128xbf16>
    %18 = vector.shape_cast %17 : vector<1x128x128xbf16> to vector<128x128xbf16>
    %cst_14 = arith.constant dense<0.000000e+00> : vector<256x128xf32>
    %19 = tpu.matmul %16, %18, %cst_14 {dimension_numbers = #tpu.dot_dimension_numbers<[1], [0], [0], [1], [0, 0, 1, 1], [], []>} : vector<256x128xbf16>, vector<128x128xbf16>, vector<256x128xf32> -> vector<256x128xf32>
    %c0_15 = arith.constant 0 : index
    %c0_16 = arith.constant 0 : index
    %c0_17 = arith.constant 0 : index
    %20 = vector.load %arg6[%c0_15, %c0_16, %c0_17] : memref<2x1x128xf32, #tpu.memory_space<vmem>>, vector<1x1x128xf32>
    %21 = vector.shape_cast %20 : vector<1x1x128xf32> to vector<1x128xf32>
    %22 = vector.broadcast %21 : vector<1x128xf32> to vector<256x128xf32>
    %23 = arith.addf %19, %22 : vector<256x128xf32>
    %c2 = arith.constant 2 : index
    %24 = memref.load %arg1[%c2] : memref<4xf32, #tpu.memory_space<smem>>
    %cst_18 = arith.constant 0.000000e+00 : f32
    %25 = vector.broadcast %cst_18 : f32 to vector<256x128xf32>
    %26 = arith.cmpf oge, %23, %25 : vector<256x128xf32>
    %27 = vector.broadcast %24 : f32 to vector<256x128xf32>
    %28 = arith.mulf %27, %23 : vector<256x128xf32>
    %29 = arith.select %26, %23, %28 : vector<256x128xi1>, vector<256x128xf32>
    %30 = arith.truncf %29 : vector<256x128xf32> to vector<256x128xbf16>
    %c0_19 = arith.constant 0 : index
    %c0_20 = arith.constant 0 : index
    %31 = vector.load %arg7[%c0_19, %c0_20] : memref<256x128xbf16, #tpu.memory_space<vmem>>, vector<128x128xbf16>
    %cst_21 = arith.constant dense<0.000000e+00> : vector<256x128xf32>
    %32 = tpu.matmul %30, %31, %cst_21 {dimension_numbers = #tpu.dot_dimension_numbers<[1], [0], [0], [1], [0, 0, 1, 1], [], []>} : vector<256x128xbf16>, vector<128x128xbf16>, vector<256x128xf32> -> vector<256x128xf32>
    %33 = arith.addf %0, %32 : vector<256x128xf32>
    %c1 = arith.constant 1 : index
    %c0_22 = arith.constant 0 : index
    %c0_23 = arith.constant 0 : index
    %34 = vector.load %arg2[%c1, %c0_22, %c0_23] : memref<2x256x48xbf16, #tpu.memory_space<vmem>>, vector<1x256x48xbf16>
    %35 = vector.shape_cast %34 : vector<1x256x48xbf16> to vector<256x48xbf16>
    %c1_24 = arith.constant 1 : index
    %c0_25 = arith.constant 0 : index
    %c0_26 = arith.constant 0 : index
    %36 = vector.load %arg3[%c1_24, %c0_25, %c0_26] : memref<2x48x128xbf16, #tpu.memory_space<vmem>>, vector<1x48x128xbf16>
    %37 = vector.shape_cast %36 : vector<1x48x128xbf16> to vector<48x128xbf16>
    %cst_27 = arith.constant dense<0.000000e+00> : vector<256x128xf32>
    %38 = tpu.matmul %35, %37, %cst_27 {dimension_numbers = #tpu.dot_dimension_numbers<[1], [0], [0], [1], [0, 0, 1, 1], [], []>} : vector<256x48xbf16>, vector<48x128xbf16>, vector<256x128xf32> -> vector<256x128xf32>
    %c1_28 = arith.constant 1 : index
    %c0_29 = arith.constant 0 : index
    %c0_30 = arith.constant 0 : index
    %39 = vector.load %arg4[%c1_28, %c0_29, %c0_30] : memref<2x1x128xf32, #tpu.memory_space<vmem>>, vector<1x1x128xf32>
    %40 = vector.shape_cast %39 : vector<1x1x128xf32> to vector<1x128xf32>
    %41 = vector.broadcast %40 : vector<1x128xf32> to vector<256x128xf32>
    %42 = arith.addf %38, %41 : vector<256x128xf32>
    %c1_31 = arith.constant 1 : index
    %43 = memref.load %arg1[%c1_31] : memref<4xf32, #tpu.memory_space<smem>>
    %cst_32 = arith.constant 0.000000e+00 : f32
    %44 = vector.broadcast %cst_32 : f32 to vector<256x128xf32>
    %45 = arith.cmpf oge, %42, %44 : vector<256x128xf32>
    %46 = vector.broadcast %43 : f32 to vector<256x128xf32>
    %47 = arith.mulf %46, %42 : vector<256x128xf32>
    %48 = arith.select %45, %42, %47 : vector<256x128xi1>, vector<256x128xf32>
    %49 = arith.truncf %48 : vector<256x128xf32> to vector<256x128xbf16>
    %c1_33 = arith.constant 1 : index
    %c0_34 = arith.constant 0 : index
    %c0_35 = arith.constant 0 : index
    %50 = vector.load %arg5[%c1_33, %c0_34, %c0_35] : memref<2x128x128xbf16, #tpu.memory_space<vmem>>, vector<1x128x128xbf16>
    %51 = vector.shape_cast %50 : vector<1x128x128xbf16> to vector<128x128xbf16>
    %cst_36 = arith.constant dense<0.000000e+00> : vector<256x128xf32>
    %52 = tpu.matmul %49, %51, %cst_36 {dimension_numbers = #tpu.dot_dimension_numbers<[1], [0], [0], [1], [0, 0, 1, 1], [], []>} : vector<256x128xbf16>, vector<128x128xbf16>, vector<256x128xf32> -> vector<256x128xf32>
    %c1_37 = arith.constant 1 : index
    %c0_38 = arith.constant 0 : index
    %c0_39 = arith.constant 0 : index
    %53 = vector.load %arg6[%c1_37, %c0_38, %c0_39] : memref<2x1x128xf32, #tpu.memory_space<vmem>>, vector<1x1x128xf32>
    %54 = vector.shape_cast %53 : vector<1x1x128xf32> to vector<1x128xf32>
    %55 = vector.broadcast %54 : vector<1x128xf32> to vector<256x128xf32>
    %56 = arith.addf %52, %55 : vector<256x128xf32>
    %c2_40 = arith.constant 2 : index
    %57 = memref.load %arg1[%c2_40] : memref<4xf32, #tpu.memory_space<smem>>
    %cst_41 = arith.constant 0.000000e+00 : f32
    %58 = vector.broadcast %cst_41 : f32 to vector<256x128xf32>
    %59 = arith.cmpf oge, %56, %58 : vector<256x128xf32>
    %60 = vector.broadcast %57 : f32 to vector<256x128xf32>
    %61 = arith.mulf %60, %56 : vector<256x128xf32>
    %62 = arith.select %59, %56, %61 : vector<256x128xi1>, vector<256x128xf32>
    %63 = arith.truncf %62 : vector<256x128xf32> to vector<256x128xbf16>
    %c128 = arith.constant 128 : index
    %c0_42 = arith.constant 0 : index
    %64 = vector.load %arg7[%c128, %c0_42] : memref<256x128xbf16, #tpu.memory_space<vmem>>, vector<128x128xbf16>
    %cst_43 = arith.constant dense<0.000000e+00> : vector<256x128xf32>
    %65 = tpu.matmul %63, %64, %cst_43 {dimension_numbers = #tpu.dot_dimension_numbers<[1], [0], [0], [1], [0, 0, 1, 1], [], []>} : vector<256x128xbf16>, vector<128x128xbf16>, vector<256x128xf32> -> vector<256x128xf32>
    %66 = arith.addf %33, %65 : vector<256x128xf32>
    %c0_44 = arith.constant 0 : index
    %c0_45 = arith.constant 0 : index
    %67 = vector.load %arg8[%c0_44, %c0_45] : memref<1x128xf32, #tpu.memory_space<vmem>>, vector<1x128xf32>
    %68 = vector.broadcast %67 : vector<1x128xf32> to vector<256x128xf32>
    %69 = arith.addf %66, %68 : vector<256x128xf32>
    %c3 = arith.constant 3 : index
    %70 = memref.load %arg1[%c3] : memref<4xf32, #tpu.memory_space<smem>>
    %cst_46 = arith.constant 1.000000e+00 : f32
    %71 = vector.broadcast %cst_46 : f32 to vector<256x128xf32>
    %72 = arith.mulf %71, %69 : vector<256x128xf32>
    %cst_47 = arith.constant 0.000000e+00 : f32
    %73 = vector.broadcast %cst_47 : f32 to vector<256x128xf32>
    %74 = arith.cmpf oge, %69, %73 : vector<256x128xf32>
    %75 = vector.broadcast %70 : f32 to vector<256x128xf32>
    %76 = arith.mulf %75, %69 : vector<256x128xf32>
    %77 = arith.select %74, %69, %76 : vector<256x128xi1>, vector<256x128xf32>
    %78 = arith.addf %77, %72 : vector<256x128xf32>
    %79 = arith.truncf %78 : vector<256x128xf32> to vector<256x128xbf16>
    %c0_48 = arith.constant 0 : index
    %c0_49 = arith.constant 0 : index
    %80 = vector.load %arg9[%c0_48, %c0_49] : memref<128x128xbf16, #tpu.memory_space<vmem>>, vector<128x128xbf16>
    %cst_50 = arith.constant dense<0.000000e+00> : vector<256x128xf32>
    %81 = tpu.matmul %79, %80, %cst_50 {dimension_numbers = #tpu.dot_dimension_numbers<[1], [0], [0], [1], [0, 0, 1, 1], [], []>} : vector<256x128xbf16>, vector<128x128xbf16>, vector<256x128xf32> -> vector<256x128xf32>
    %c0_51 = arith.constant 0 : index
    %c0_52 = arith.constant 0 : index
    %82 = vector.load %arg10[%c0_51, %c0_52] : memref<1x128xf32, #tpu.memory_space<vmem>>, vector<1x128xf32>
    %83 = vector.broadcast %82 : vector<1x128xf32> to vector<256x128xf32>
    %84 = arith.addf %81, %83 : vector<256x128xf32>
    %85 = arith.addf %84, %77 : vector<256x128xf32>
    %cst_53 = arith.constant 0.000000e+00 : f32
    %86 = vector.broadcast %cst_53 : f32 to vector<256x128xf32>
    %87 = arith.cmpf oge, %85, %86 : vector<256x128xf32>
    %88 = vector.broadcast %70 : f32 to vector<256x128xf32>
    %89 = arith.mulf %88, %85 : vector<256x128xf32>
    %90 = arith.select %87, %85, %89 : vector<256x128xi1>, vector<256x128xf32>
    %91 = arith.truncf %90 : vector<256x128xf32> to vector<256x128xbf16>
    %c0_54 = arith.constant 0 : index
    %c0_55 = arith.constant 0 : index
    %92 = vector.load %arg11[%c0_54, %c0_55] : memref<128x128xbf16, #tpu.memory_space<vmem>>, vector<128x128xbf16>
    %cst_56 = arith.constant dense<0.000000e+00> : vector<256x128xf32>
    %93 = tpu.matmul %91, %92, %cst_56 {dimension_numbers = #tpu.dot_dimension_numbers<[1], [0], [0], [1], [0, 0, 1, 1], [], []>} : vector<256x128xbf16>, vector<128x128xbf16>, vector<256x128xf32> -> vector<256x128xf32>
    %c0_57 = arith.constant 0 : index
    %c0_58 = arith.constant 0 : index
    %94 = vector.load %arg12[%c0_57, %c0_58] : memref<1x128xf32, #tpu.memory_space<vmem>>, vector<1x128xf32>
    %95 = vector.broadcast %94 : vector<1x128xf32> to vector<256x128xf32>
    %96 = arith.addf %93, %95 : vector<256x128xf32>
    %c0_59 = arith.constant 0 : index
    %c0_60 = arith.constant 0 : index
    %97 = vector.load %arg13[%c0_59, %c0_60] : memref<256x128xf32, #tpu.memory_space<vmem>>, vector<256x128xf32>
    tpu.vector_store %arg13[%c0_59, %c0_60], %96 {strides = array<i32>} : memref<256x128xf32, #tpu.memory_space<vmem>>, vector<256x128xf32>,
    return
  }
  func.func @transform_0(%arg0: i32, %arg1: memref<4xf32, #tpu.memory_space<smem>>) -> (i32, i32, i32) {
    %c0_i32 = arith.constant 0 : i32
    %c0_i32_0 = arith.constant 0 : i32
    %c0_i32_1 = arith.constant 0 : i32
    return %c0_i32, %arg0, %c0_i32_0 : i32, i32, i32
  }
  func.func @transform_1(%arg0: i32, %arg1: memref<4xf32, #tpu.memory_space<smem>>) -> (i32, i32, i32) {
    %c0_i32 = arith.constant 0 : i32
    %c0_i32_0 = arith.constant 0 : i32
    %c0_i32_1 = arith.constant 0 : i32
    %c0_i32_2 = arith.constant 0 : i32
    return %c0_i32, %c0_i32_0, %c0_i32_1 : i32, i32, i32
  }
  func.func @transform_2(%arg0: i32, %arg1: memref<4xf32, #tpu.memory_space<smem>>) -> (i32, i32, i32) {
    %c0_i32 = arith.constant 0 : i32
    %c0_i32_0 = arith.constant 0 : i32
    %c0_i32_1 = arith.constant 0 : i32
    %c0_i32_2 = arith.constant 0 : i32
    return %c0_i32, %c0_i32_0, %c0_i32_1 : i32, i32, i32
  }
  func.func @transform_3(%arg0: i32, %arg1: memref<4xf32, #tpu.memory_space<smem>>) -> (i32, i32, i32) {
    %c0_i32 = arith.constant 0 : i32
    %c0_i32_0 = arith.constant 0 : i32
    %c0_i32_1 = arith.constant 0 : i32
    %c0_i32_2 = arith.constant 0 : i32
    return %c0_i32, %c0_i32_0, %c0_i32_1 : i32, i32, i32
  }
  func.func @transform_4(%arg0: i32, %arg1: memref<4xf32, #tpu.memory_space<smem>>) -> (i32, i32, i32) {
    %c0_i32 = arith.constant 0 : i32
    %c0_i32_0 = arith.constant 0 : i32
    %c0_i32_1 = arith.constant 0 : i32
    %c0_i32_2 = arith.constant 0 : i32
    return %c0_i32, %c0_i32_0, %c0_i32_1 : i32, i32, i32
  }
  func.func @transform_5(%arg0: i32, %arg1: memref<4xf32, #tpu.memory_space<smem>>) -> (i32, i32) {
    %c0_i32 = arith.constant 0 : i32
    %c0_i32_0 = arith.constant 0 : i32
    %c0_i32_1 = arith.constant 0 : i32
    return %c0_i32, %c0_i32_0 : i32, i32
  }
  func.func @transform_6(%arg0: i32, %arg1: memref<4xf32, #tpu.memory_space<smem>>) -> (i32, i32) {
    %c0_i32 = arith.constant 0 : i32
    %c0_i32_0 = arith.constant 0 : i32
    %c0_i32_1 = arith.constant 0 : i32
    return %c0_i32, %c0_i32_0 : i32, i32
  }
  func.func @transform_7(%arg0: i32, %arg1: memref<4xf32, #tpu.memory_space<smem>>) -> (i32, i32) {
    %c0_i32 = arith.constant 0 : i32
    %c0_i32_0 = arith.constant 0 : i32
    %c0_i32_1 = arith.constant 0 : i32
    return %c0_i32, %c0_i32_0 : i32, i32
  }
  func.func @transform_8(%arg0: i32, %arg1: memref<4xf32, #tpu.memory_space<smem>>) -> (i32, i32) {
    %c0_i32 = arith.constant 0 : i32
    %c0_i32_0 = arith.constant 0 : i32
    %c0_i32_1 = arith.constant 0 : i32
    return %c0_i32, %c0_i32_0 : i32, i32
  }
  func.func @transform_9(%arg0: i32, %arg1: memref<4xf32, #tpu.memory_space<smem>>) -> (i32, i32) {
    %c0_i32 = arith.constant 0 : i32
    %c0_i32_0 = arith.constant 0 : i32
    %c0_i32_1 = arith.constant 0 : i32
    return %c0_i32, %c0_i32_0 : i32, i32
  }
  func.func @transform_10(%arg0: i32, %arg1: memref<4xf32, #tpu.memory_space<smem>>) -> (i32, i32) {
    %c0_i32 = arith.constant 0 : i32
    %c0_i32_0 = arith.constant 0 : i32
    %c0_i32_1 = arith.constant 0 : i32
    return %c0_i32, %c0_i32_0 : i32, i32
  }
  func.func @transform_11(%arg0: i32, %arg1: memref<4xf32, #tpu.memory_space<smem>>) -> (i32, i32) {
    %c0_i32 = arith.constant 0 : i32
    %c0_i32_0 = arith.constant 0 : i32
    return %arg0, %c0_i32 : i32, i32
  }
}

</mosaic_0001>

<llo_original>
// kernel: tpu_custom_call.1
$region0: #{tpu_custom_call.1}
  #allocation0 [shape = 'u32[]', space=smem, size = 0x4, offset = 0x4, fixed_abs, tag = 'smem constant byte address 0x4 - core index']
  #allocation1 [shape = 'u32[144,128]{1,0:T(1,128)}', space=vmem, size = 0x12000, scoped, tag = 'internal scratch']
  #allocation2 [shape = 's32[1]{0}', space=sflag, size = 0x4, scoped, tag = 'scoped memory for tpu_custom_call.1']
  #allocation3 [shape = 'u8[512]{0}', space=smem, size = 0x200, scoped, tag = 'prefetched SMEM operand 0']
  %s0 = inlined_call_operand.vmem [shape: f32[4], index: 0, kind: input, shape index: {}]
  %s1 = inlined_call_operand.vmem [shape: bf16[2,512,48], index: 1, kind: input, shape index: {}]
  %s2 = inlined_call_operand.vmem [shape: bf16[2,48,128], index: 2, kind: input, shape index: {}]
  %s3 = inlined_call_operand.vmem [shape: f32[2,1,128], index: 3, kind: input, shape index: {}]
  %s4 = inlined_call_operand.vmem [shape: bf16[2,128,128], index: 4, kind: input, shape index: {}]
  %s5 = inlined_call_operand.vmem [shape: f32[2,1,128], index: 5, kind: input, shape index: {}]
  %s6 = inlined_call_operand.vmem [shape: bf16[256,128], index: 6, kind: input, shape index: {}]
  %s7 = inlined_call_operand.vmem [shape: f32[1,128], index: 7, kind: input, shape index: {}]
  %s8 = inlined_call_operand.vmem [shape: bf16[128,128], index: 8, kind: input, shape index: {}]
  %s9 = inlined_call_operand.vmem [shape: f32[1,128], index: 9, kind: input, shape index: {}]
  %s10 = inlined_call_operand.vmem [shape: bf16[128,128], index: 10, kind: input, shape index: {}]
  %s11 = inlined_call_operand.vmem [shape: f32[1,128], index: 11, kind: input, shape index: {}]
  %s12 = inlined_call_operand.hbm [shape: f32[512,128], index: 12, kind: output, shape index: {}]
  %s13 = sld [smem:[#allocation0]]
  $region118: #{tpu_custom_call.1} parent=0
    _
  %s15 = ssub.s32 1, %s13
  %s16 = scalar_select 0, %s15, %s13
  %s17 = sshll.u32 %s0, 4
  %s18 = int_to_ptr.vmem [resolvable:$true] %s17
  %20 = dma.vmem_to_smem %s18, 16, [#allocation3], [#allocation2]
  %21 = dma.done [#allocation2], 16
  %22 = sfence
  $region1: #{tpu_custom_call.1} parent=0
    #allocation4 [shape = 'u8[262144]{0}', space=vmem, size = 0x40000, scoped, tag = 'input window, operand 1']
    #allocation5 [shape = 'u8[262144]{0}', space=vmem, size = 0x40000, scoped, tag = 'output window, operand 0']
    #allocation6 [shape = 's32[2]{0}', space=sflag, size = 0x8, scoped, tag = 'scoped memory for tpu_custom_call.1']
    %23 = vsyncpa [#allocation6], 0
    %s24 = scalar_lea.sflag [#allocation6], 1
    %25 = vsyncpa %s24, 0
    loop: start=0, step=1, limit=4
    $region2: #{tpu_custom_call.1} parent=1 // loop_pre_header
      _
    $region3: #{tpu_custom_call.1} parent=1 // loop_header
      %s27 = sphi 0, %s31
      %p28 = scmp.ge.s32.totalorder %s27, 4
      %s37 = sphi 0, %s39
      %s40 = sphi 0, %s37
      %s41 = sphi 0, %s40
      %s57 = sphi 0, %s41
      %s61 = sphi 0, %s61
      %s63 = sphi 0, %s61
      %s64 = sphi 0, %s63
      %s78 = sphi 0, %s64
      %s82 = sphi 0, %s82
      %s84 = sphi 0, %s82
      %s85 = sphi 0, %s84
      %s99 = sphi 0, %s85
      %s103 = sphi 0, %s103
      %s105 = sphi 0, %s103
      %s106 = sphi 0, %s105
      %s120 = sphi 0, %s106
      %s124 = sphi 0, %s124
      %s126 = sphi 0, %s124
      %s127 = sphi 0, %s126
      %s141 = sphi 0, %s127
      %s145 = sphi 0, %s145
      %s147 = sphi 0, %s145
      %s148 = sphi 0, %s147
      %s162 = sphi 0, %s148
      %s166 = sphi 0, %s166
      %s168 = sphi 0, %s166
      %s169 = sphi 0, %s168
      %s183 = sphi 0, %s169
      %s187 = sphi 0, %s187
      %s189 = sphi 0, %s187
      %s190 = sphi 0, %s189
      %s204 = sphi 0, %s190
      %s208 = sphi 0, %s208
      %s210 = sphi 0, %s208
      %s211 = sphi 0, %s210
      %s225 = sphi 0, %s211
      %s229 = sphi 0, %s229
      %s231 = sphi 0, %s229
      %s232 = sphi 0, %s231
      %s246 = sphi 0, %s232
      %s250 = sphi 0, %s250
      %s252 = sphi 0, %s250
      %s253 = sphi 0, %s252
      %s267 = sphi 0, %s253
      %s273 = sphi 0, %s275
      %s276 = sphi 0, %s273
      %s277 = sphi 0, %s276
      %s293 = sphi 0, %s277
    $region4: #{tpu_custom_call.1} parent=1 // loop_header_branch
      %30 = sbr.rel (%p28) target = $region8
    $region5: #{tpu_custom_call.1} parent=1 // loop_body
      %s32 = ssub.s32 %s27, 1
      %s33 = ssub.s32 %s27, 2
      %s34 = sadd.s32 %s27, 1
      %s35 = ssub.s32 %s27, %s34
      %p36 = scmp.eq.s32.totalorder %s35, 0
      %s38 = sadd.s32 %s37, 1
      %s39 = scalar_select %p36, %s37, %s38
      %p42 = pneg %p36
      %p43 = scmp.eq.s32.totalorder %s27, 1
      %p44 = por %p42, %p43
      %p45 = scmp.ne.s32.totalorder %s37, %s40
      %p46 = scmp.eq.s32.totalorder %s27, 0
      %p47 = por %p45, %p46
      %p48 = scmp.ne.s32.totalorder %s37, %s40
      %p49 = scmp.eq.s32.totalorder %s32, 1
      %p50 = por %p48, %p49
      %p51 = scmp.ne.s32.totalorder %s40, %s41
      %p52 = scmp.eq.s32.totalorder %s32, 0
      %p53 = por %p51, %p52
      %p54 = scmp.ne.s32.totalorder %s40, %s41
      %p55 = scmp.eq.s32.totalorder %s33, 1
      %p56 = por %p54, %p55
      %p58 = scmp.ne.s32.totalorder %s41, %s57
      %p59 = scmp.eq.s32.totalorder %s33, 0
      %p60 = por %p58, %p59
      %s62 = sadd.s32 %s61, 1
      %p65 = scmp.eq.s32.totalorder %s27, 1
      %p66 = scmp.ne.s32.totalorder %s61, %s63
      %p67 = scmp.eq.s32.totalorder %s27, 0
      %p68 = por %p66, %p67
      %p69 = scmp.ne.s32.totalorder %s61, %s63
      %p70 = scmp.eq.s32.totalorder %s32, 1
      %p71 = por %p69, %p70
      %p72 = scmp.ne.s32.totalorder %s63, %s64
      %p73 = scmp.eq.s32.totalorder %s32, 0
      %p74 = por %p72, %p73
      %p75 = scmp.ne.s32.totalorder %s63, %s64
      %p76 = scmp.eq.s32.totalorder %s33, 1
      %p77 = por %p75, %p76
      %p79 = scmp.ne.s32.totalorder %s64, %s78
      %p80 = scmp.eq.s32.totalorder %s33, 0
      %p81 = por %p79, %p80
      %s83 = sadd.s32 %s82, 1
      %p86 = scmp.eq.s32.totalorder %s27, 1
      %p87 = scmp.ne.s32.totalorder %s82, %s84
      %p88 = scmp.eq.s32.totalorder %s27, 0
      %p89 = por %p87, %p88
      %p90 = scmp.ne.s32.totalorder %s82, %s84
      %p91 = scmp.eq.s32.totalorder %s32, 1
      %p92 = por %p90, %p91
      %p93 = scmp.ne.s32.totalorder %s84, %s85
      %p94 = scmp.eq.s32.totalorder %s32, 0
      %p95 = por %p93, %p94
      %p96 = scmp.ne.s32.totalorder %s84, %s85
      %p97 = scmp.eq.s32.totalorder %s33, 1
      %p98 = por %p96, %p97
      %p100 = scmp.ne.s32.totalorder %s85, %s99
      %p101 = scmp.eq.s32.totalorder %s33, 0
      %p102 = por %p100, %p101
      %s104 = sadd.s32 %s103, 1
      %p107 = scmp.eq.s32.totalorder %s27, 1
      %p108 = scmp.ne.s32.totalorder %s103, %s105
      %p109 = scmp.eq.s32.totalorder %s27, 0
      %p110 = por %p108, %p109
      %p111 = scmp.ne.s32.totalorder %s103, %s105
      %p112 = scmp.eq.s32.totalorder %s32, 1
      %p113 = por %p111, %p112
      %p114 = scmp.ne.s32.totalorder %s105, %s106
      %p115 = scmp.eq.s32.totalorder %s32, 0
      %p116 = por %p114, %p115
      %p117 = scmp.ne.s32.totalorder %s105, %s106
      %p118 = scmp.eq.s32.totalorder %s33, 1
      %p119 = por %p117, %p118
      %p121 = scmp.ne.s32.totalorder %s106, %s120
      %p122 = scmp.eq.s32.totalorder %s33, 0
      %p123 = por %p121, %p122
      %s125 = sadd.s32 %s124, 1
      %p128 = scmp.eq.s32.totalorder %s27, 1
      %p129 = scmp.ne.s32.totalorder %s124, %s126
      %p130 = scmp.eq.s32.totalorder %s27, 0
      %p131 = por %p129, %p130
      %p132 = scmp.ne.s32.totalorder %s124, %s126
      %p133 = scmp.eq.s32.totalorder %s32, 1
      %p134 = por %p132, %p133
      %p135 = scmp.ne.s32.totalorder %s126, %s127
      %p136 = scmp.eq.s32.totalorder %s32, 0
      %p137 = por %p135, %p136
      %p138 = scmp.ne.s32.totalorder %s126, %s127
      %p139 = scmp.eq.s32.totalorder %s33, 1
      %p140 = por %p138, %p139
      %p142 = scmp.ne.s32.totalorder %s127, %s141
      %p143 = scmp.eq.s32.totalorder %s33, 0
      %p144 = por %p142, %p143
      %s146 = sadd.s32 %s145, 1
      %p149 = scmp.eq.s32.totalorder %s27, 1
      %p150 = scmp.ne.s32.totalorder %s145, %s147
      %p151 = scmp.eq.s32.totalorder %s27, 0
      %p152 = por %p150, %p151
      %p153 = scmp.ne.s32.totalorder %s145, %s147
      %p154 = scmp.eq.s32.totalorder %s32, 1
      %p155 = por %p153, %p154
      %p156 = scmp.ne.s32.totalorder %s147, %s148
      %p157 = scmp.eq.s32.totalorder %s32, 0
      %p158 = por %p156, %p157
      %p159 = scmp.ne.s32.totalorder %s147, %s148
      %p160 = scmp.eq.s32.totalorder %s33, 1
      %p161 = por %p159, %p160
      %p163 = scmp.ne.s32.totalorder %s148, %s162
      %p164 = scmp.eq.s32.totalorder %s33, 0
      %p165 = por %p163, %p164
      %s167 = sadd.s32 %s166, 1
      %p170 = scmp.eq.s32.totalorder %s27, 1
      %p171 = scmp.ne.s32.totalorder %s166, %s168
      %p172 = scmp.eq.s32.totalorder %s27, 0
      %p173 = por %p171, %p172
      %p174 = scmp.ne.s32.totalorder %s166, %s168
      %p175 = scmp.eq.s32.totalorder %s32, 1
      %p176 = por %p174, %p175
      %p177 = scmp.ne.s32.totalorder %s168, %s169
      %p178 = scmp.eq.s32.totalorder %s32, 0
      %p179 = por %p177, %p178
      %p180 = scmp.ne.s32.totalorder %s168, %s169
      %p181 = scmp.eq.s32.totalorder %s33, 1
      %p182 = por %p180, %p181
      %p184 = scmp.ne.s32.totalorder %s169, %s183
      %p185 = scmp.eq.s32.totalorder %s33, 0
      %p186 = por %p184, %p185
      %s188 = sadd.s32 %s187, 1
      %p191 = scmp.eq.s32.totalorder %s27, 1
      %p192 = scmp.ne.s32.totalorder %s187, %s189
      %p193 = scmp.eq.s32.totalorder %s27, 0
      %p194 = por %p192, %p193
      %p195 = scmp.ne.s32.totalorder %s187, %s189
      %p196 = scmp.eq.s32.totalorder %s32, 1
      %p197 = por %p195, %p196
      %p198 = scmp.ne.s32.totalorder %s189, %s190
      %p199 = scmp.eq.s32.totalorder %s32, 0
      %p200 = por %p198, %p199
      %p201 = scmp.ne.s32.totalorder %s189, %s190
      %p202 = scmp.eq.s32.totalorder %s33, 1
      %p203 = por %p201, %p202
      %p205 = scmp.ne.s32.totalorder %s190, %s204
      %p206 = scmp.eq.s32.totalorder %s33, 0
      %p207 = por %p205, %p206
      %s209 = sadd.s32 %s208, 1
      %p212 = scmp.eq.s32.totalorder %s27, 1
      %p213 = scmp.ne.s32.totalorder %s208, %s210
      %p214 = scmp.eq.s32.totalorder %s27, 0
      %p215 = por %p213, %p214
      %p216 = scmp.ne.s32.totalorder %s208, %s210
      %p217 = scmp.eq.s32.totalorder %s32, 1
      %p218 = por %p216, %p217
      %p219 = scmp.ne.s32.totalorder %s210, %s211
      %p220 = scmp.eq.s32.totalorder %s32, 0
      %p221 = por %p219, %p220
      %p222 = scmp.ne.s32.totalorder %s210, %s211
      %p223 = scmp.eq.s32.totalorder %s33, 1
      %p224 = por %p222, %p223
      %p226 = scmp.ne.s32.totalorder %s211, %s225
      %p227 = scmp.eq.s32.totalorder %s33, 0
      %p228 = por %p226, %p227
      %s230 = sadd.s32 %s229, 1
      %p233 = scmp.eq.s32.totalorder %s27, 1
      %p234 = scmp.ne.s32.totalorder %s229, %s231
      %p235 = scmp.eq.s32.totalorder %s27, 0
      %p236 = por %p234, %p235
      %p237 = scmp.ne.s32.totalorder %s229, %s231
      %p238 = scmp.eq.s32.totalorder %s32, 1
      %p239 = por %p237, %p238
      %p240 = scmp.ne.s32.totalorder %s231, %s232
      %p241 = scmp.eq.s32.totalorder %s32, 0
      %p242 = por %p240, %p241
      %p243 = scmp.ne.s32.totalorder %s231, %s232
      %p244 = scmp.eq.s32.totalorder %s33, 1
      %p245 = por %p243, %p244
      %p247 = scmp.ne.s32.totalorder %s232, %s246
      %p248 = scmp.eq.s32.totalorder %s33, 0
      %p249 = por %p247, %p248
      %s251 = sadd.s32 %s250, 1
      %p254 = scmp.eq.s32.totalorder %s27, 1
      %p255 = scmp.ne.s32.totalorder %s250, %s252
      %p256 = scmp.eq.s32.totalorder %s27, 0
      %p257 = por %p255, %p256
      %p258 = scmp.ne.s32.totalorder %s250, %s252
      %p259 = scmp.eq.s32.totalorder %s32, 1
      %p260 = por %p258, %p259
      %p261 = scmp.ne.s32.totalorder %s252, %s253
      %p262 = scmp.eq.s32.totalorder %s32, 0
      %p263 = por %p261, %p262
      %p264 = scmp.ne.s32.totalorder %s252, %s253
      %p265 = scmp.eq.s32.totalorder %s33, 1
      %p266 = por %p264, %p265
      %p268 = scmp.ne.s32.totalorder %s253, %s267
      %p269 = scmp.eq.s32.totalorder %s33, 0
      %p270 = por %p268, %p269
      %s271 = ssub.s32 %s27, %s34
      %p272 = scmp.eq.s32.totalorder %s271, 0
      %s274 = sadd.s32 %s273, 1
      %s275 = scalar_select %p272, %s273, %s274
      %p278 = pneg %p272
      %p279 = scmp.eq.s32.totalorder %s27, 1
      %p280 = por %p278, %p279
      %p281 = scmp.ne.s32.totalorder %s273, %s276
      %p282 = scmp.eq.s32.totalorder %s27, 0
      %p283 = por %p281, %p282
      %p284 = scmp.ne.s32.totalorder %s273, %s276
      %p285 = scmp.eq.s32.totalorder %s32, 1
      %p286 = por %p284, %p285
      %p287 = scmp.ne.s32.totalorder %s276, %s277
      %p288 = scmp.eq.s32.totalorder %s32, 0
      %p289 = por %p287, %p288
      %p290 = scmp.ne.s32.totalorder %s276, %s277
      %p291 = scmp.eq.s32.totalorder %s33, 1
      %p292 = por %p290, %p291
      %p294 = scmp.ne.s32.totalorder %s277, %s293
      %p295 = scmp.eq.s32.totalorder %s33, 0
      %p296 = por %p294, %p295
      %p297 = scmp.le.s32.totalorder 1, %s27
      %p298 = scmp.lt.s32.totalorder %s27, 3
      %p299 = pnand %p297, %p298
      %p300 = pneg %p299
      // Predicated region
      $region9: #{tpu_custom_call.1} parent=5 // pred_check
        _
      $region10: #{tpu_custom_call.1} parent=5 // pred_check_branch
        %302 = sbr.rel (%p299) target = $region12
      $region11: #{tpu_custom_call.1} parent=5 // pred_region
        %s303 = ssub.s32 %s27, 1
        // Predicated region
        $region13: #{tpu_custom_call.1} parent=11 // pred_check
          %p304 = pneg %p74
        $region14: #{tpu_custom_call.1} parent=11 // pred_check_branch
          %306 = sbr.rel (%p304) target = $region16
        $region15: #{tpu_custom_call.1} parent=11 // pred_region
          _
        $region16: #{tpu_custom_call.1} parent=11 // pred_fallthru
          _
        // Predicated region
        $region17: #{tpu_custom_call.1} parent=11 // pred_check
          %p307 = pneg %p95
        $region18: #{tpu_custom_call.1} parent=11 // pred_check_branch
          %309 = sbr.rel (%p307) target = $region20
        $region19: #{tpu_custom_call.1} parent=11 // pred_region
          _
        $region20: #{tpu_custom_call.1} parent=11 // pred_fallthru
          _
        // Predicated region
        $region21: #{tpu_custom_call.1} parent=11 // pred_check
          %p310 = pneg %p116
        $region22: #{tpu_custom_call.1} parent=11 // pred_check_branch
          %312 = sbr.rel (%p310) target = $region24
        $region23: #{tpu_custom_call.1} parent=11 // pred_region
          _
        $region24: #{tpu_custom_call.1} parent=11 // pred_fallthru
          _
        // Predicated region
        $region25: #{tpu_custom_call.1} parent=11 // pred_check
          %p313 = pneg %p137
        $region26: #{tpu_custom_call.1} parent=11 // pred_check_branch
          %315 = sbr.rel (%p313) target = $region28
        $region27: #{tpu_custom_call.1} parent=11 // pred_region
          _
        $region28: #{tpu_custom_call.1} parent=11 // pred_fallthru
          _
        // Predicated region
        $region29: #{tpu_custom_call.1} parent=11 // pred_check
          %p316 = pneg %p158
        $region30: #{tpu_custom_call.1} parent=11 // pred_check_branch
          %318 = sbr.rel (%p316) target = $region32
        $region31: #{tpu_custom_call.1} parent=11 // pred_region
          _
        $region32: #{tpu_custom_call.1} parent=11 // pred_fallthru
          _
        // Predicated region
        $region33: #{tpu_custom_call.1} parent=11 // pred_check
          %p319 = pneg %p179
        $region34: #{tpu_custom_call.1} parent=11 // pred_check_branch
          %321 = sbr.rel (%p319) target = $region36
        $region35: #{tpu_custom_call.1} parent=11 // pred_region
          _
        $region36: #{tpu_custom_call.1} parent=11 // pred_fallthru
          _
        // Predicated region
        $region37: #{tpu_custom_call.1} parent=11 // pred_check
          %p322 = pneg %p200
        $region38: #{tpu_custom_call.1} parent=11 // pred_check_branch
          %324 = sbr.rel (%p322) target = $region40
        $region39: #{tpu_custom_call.1} parent=11 // pred_region
          _
        $region40: #{tpu_custom_call.1} parent=11 // pred_fallthru
          _
        // Predicated region
        $region41: #{tpu_custom_call.1} parent=11 // pred_check
          %p325 = pneg %p221
        $region42: #{tpu_custom_call.1} parent=11 // pred_check_branch
          %327 = sbr.rel (%p325) target = $region44
        $region43: #{tpu_custom_call.1} parent=11 // pred_region
          _
        $region44: #{tpu_custom_call.1} parent=11 // pred_fallthru
          _
        // Predicated region
        $region45: #{tpu_custom_call.1} parent=11 // pred_check
          %p328 = pneg %p242
        $region46: #{tpu_custom_call.1} parent=11 // pred_check_branch
          %330 = sbr.rel (%p328) target = $region48
        $region47: #{tpu_custom_call.1} parent=11 // pred_region
          _
        $region48: #{tpu_custom_call.1} parent=11 // pred_fallthru
          _
        // Predicated region
        $region49: #{tpu_custom_call.1} parent=11 // pred_check
          %p331 = pneg %p263
        $region50: #{tpu_custom_call.1} parent=11 // pred_check_branch
          %333 = sbr.rel (%p331) target = $region52
        $region51: #{tpu_custom_call.1} parent=11 // pred_region
          _
        $region52: #{tpu_custom_call.1} parent=11 // pred_fallthru
          _
      $region12: #{tpu_custom_call.1} parent=5 // pred_fallthru
        _
      %p334 = scmp.lt.s32.totalorder %s27, 2
      // Predicated region
      $region53: #{tpu_custom_call.1} parent=5 // pred_check
        %p335 = pneg %p334
      $region54: #{tpu_custom_call.1} parent=5 // pred_check_branch
        %337 = sbr.rel (%p335) target = $region56
      $region55: #{tpu_custom_call.1} parent=5 // pred_region
        // Predicated region
        $region57: #{tpu_custom_call.1} parent=55 // pred_check
          %p338 = pneg %p47
        $region58: #{tpu_custom_call.1} parent=55 // pred_check_branch
          %340 = sbr.rel (%p338) target = $region60
        $region59: #{tpu_custom_call.1} parent=55 // pred_region
          %s341 = sand.u32 %s37, 1
          %s342 = sand.u32 %s37, 1
          %s343 = smul.addr %s342, 256
          %s344 = scalar_lea.vmem [#allocation4], %s343
          %s345 = smul.u32 32, %s27
          %s346 = smul.addr %s345, 4
          %s347 = scalar_lea.vmem %s1, %s346
          // Predicated region
          $region61: #{tpu_custom_call.1} parent=59 // pred_check
            _
          $region62: #{tpu_custom_call.1} parent=59 // pred_check_branch
            %349 = sbr.rel (0) target = $region64
          $region63: #{tpu_custom_call.1} parent=59 // pred_region
            // Predicated region
            $region65: #{tpu_custom_call.1} parent=63 // pred_check
              _
            $region66: #{tpu_custom_call.1} parent=63 // pred_check_branch
              %351 = sbr.rel target = $region68
            $region67: #{tpu_custom_call.1} parent=63 // pred_region
              // Predicated region
              $region80: #{tpu_custom_call.1} parent=67 // pred_check
                _
              $region81: #{tpu_custom_call.1} parent=67 // pred_check_branch
                %492 = sbr.rel (0) target = $region83
              $region82: #{tpu_custom_call.1} parent=67 // pred_region
                loop: start=0, step=1, limit=1
                $region84: #{tpu_custom_call.1} parent=82 // loop_pre_header
                  _
                $region85: #{tpu_custom_call.1} parent=82 // loop_header
                  %s494 = sphi 0, %s498
                  %p495 = scmp.ge.s32.totalorder %s494, 1
                  %s499 = sphi %s347, %s347
                  %s500 = sphi %s344, %s344
                $region86: #{tpu_custom_call.1} parent=82 // loop_header_branch
                  %497 = sbr.rel (%p495) target = $region90
                $region87: #{tpu_custom_call.1} parent=82 // loop_body
                  _
                $region88: #{tpu_custom_call.1} parent=82 // loop_footer
                  %s498 = sadd.s32 1, %s494
                $region89: #{tpu_custom_call.1} parent=82 // loop_footer_branch
                  %493 = sbr.rel target = $region85
                $region90: #{tpu_custom_call.1} parent=82 // loop_exit
                  _
                loop: start=0, step=1, limit=1
                $region91: #{tpu_custom_call.1} parent=82 // loop_pre_header
                  _
                $region92: #{tpu_custom_call.1} parent=82 // loop_header
                  %s503 = sphi 0, %s507
                  %p504 = scmp.ge.s32.totalorder %s503, 1
                  %s508 = sphi %s347, %s347
                  %s509 = sphi %s344, %s344
                $region93: #{tpu_custom_call.1} parent=82 // loop_header_branch
                  %506 = sbr.rel (%p504) target = $region97
                $region94: #{tpu_custom_call.1} parent=82 // loop_body
                  %v510 = vld [vmem:[%s508] sm:$0xf]
                  %511 = vst [vmem:[%s509] sm:$0xf] %v510
                  %v512 = vld [vmem:[%s508 + $0x4] sm:$0xf]
                  %513 = vst [vmem:[%s509 + $0x4] sm:$0xf] %v512
                  %v514 = vld [vmem:[%s508 + $0x8] sm:$0xf]
                  %515 = vst [vmem:[%s509 + $0x8] sm:$0xf] %v514
                  %v516 = vld [vmem:[%s508 + $0xc] sm:$0xf]
                  %517 = vst [vmem:[%s509 + $0xc] sm:$0xf] %v516
                  %v518 = vld [vmem:[%s508 + $0x10] sm:$0xf]
                  %519 = vst [vmem:[%s509 + $0x10] sm:$0xf] %v518
                  %v520 = vld [vmem:[%s508 + $0x14] sm:$0xf]
                  %521 = vst [vmem:[%s509 + $0x14] sm:$0xf] %v520
                  %v522 = vld [vmem:[%s508 + $0x18] sm:$0xf]
                  %523 = vst [vmem:[%s509 + $0x18] sm:$0xf] %v522
                  %v524 = vld [vmem:[%s508 + $0x1c] sm:$0xf]
                  %525 = vst [vmem:[%s509 + $0x1c] sm:$0xf] %v524
                  %v526 = vld [vmem:[%s508 + $0x20] sm:$0xf]
                  %527 = vst [vmem:[%s509 + $0x20] sm:$0xf] %v526
                  %v528 = vld [vmem:[%s508 + $0x24] sm:$0xf]
                  %529 = vst [vmem:[%s509 + $0x24] sm:$0xf] %v528
                  %v530 = vld [vmem:[%s508 + $0x28] sm:$0xf]
                  %531 = vst [vmem:[%s509 + $0x28] sm:$0xf] %v530
                  %v532 = vld [vmem:[%s508 + $0x2c] sm:$0xf]
                  %533 = vst [vmem:[%s509 + $0x2c] sm:$0xf] %v532
                  %v534 = vld [vmem:[%s508 + $0x30] sm:$0xf]
                  %535 = vst [vmem:[%s509 + $0x30] sm:$0xf] %v534
                  %v536 = vld [vmem:[%s508 + $0x34] sm:$0xf]
                  %537 = vst [vmem:[%s509 + $0x34] sm:$0xf] %v536
                  %v538 = vld [vmem:[%s508 + $0x38] sm:$0xf]
                  %539 = vst [vmem:[%s509 + $0x38] sm:$0xf] %v538
                  %v540 = vld [vmem:[%s508 + $0x3c] sm:$0xf]
                  %541 = vst [vmem:[%s509 + $0x3c] sm:$0xf] %v540
                  %v542 = vld [vmem:[%s508 + $0x40] sm:$0xf]
                  %543 = vst [vmem:[%s509 + $0x40] sm:$0xf] %v542
                  %v544 = vld [vmem:[%s508 + $0x44] sm:$0xf]
                  %545 = vst [vmem:[%s509 + $0x44] sm:$0xf] %v544
                  %v546 = vld [vmem:[%s508 + $0x48] sm:$0xf]
                  %547 = vst [vmem:[%s509 + $0x48] sm:$0xf] %v546
                  %v548 = vld [vmem:[%s508 + $0x4c] sm:$0xf]
                  %549 = vst [vmem:[%s509 + $0x4c] sm:$0xf] %v548
                  %v550 = vld [vmem:[%s508 + $0x50] sm:$0xf]
                  %551 = vst [vmem:[%s509 + $0x50] sm:$0xf] %v550
                  %v552 = vld [vmem:[%s508 + $0x54] sm:$0xf]
                  %553 = vst [vmem:[%s509 + $0x54] sm:$0xf] %v552
                  %v554 = vld [vmem:[%s508 + $0x58] sm:$0xf]
                  %555 = vst [vmem:[%s509 + $0x58] sm:$0xf] %v554
                  %v556 = vld [vmem:[%s508 + $0x5c] sm:$0xf]
                  %557 = vst [vmem:[%s509 + $0x5c] sm:$0xf] %v556
                  %v558 = vld [vmem:[%s508 + $0x60] sm:$0xf]
                  %559 = vst [vmem:[%s509 + $0x60] sm:$0xf] %v558
                  %v560 = vld [vmem:[%s508 + $0x64] sm:$0xf]
                  %561 = vst [vmem:[%s509 + $0x64] sm:$0xf] %v560
                  %v562 = vld [vmem:[%s508 + $0x68] sm:$0xf]
                  %563 = vst [vmem:[%s509 + $0x68] sm:$0xf] %v562
                  %v564 = vld [vmem:[%s508 + $0x6c] sm:$0xf]
                  %565 = vst [vmem:[%s509 + $0x6c] sm:$0xf] %v564
                  %v566 = vld [vmem:[%s508 + $0x70] sm:$0xf]
                  %567 = vst [vmem:[%s509 + $0x70] sm:$0xf] %v566
                  %v568 = vld [vmem:[%s508 + $0x74] sm:$0xf]
                  %569 = vst [vmem:[%s509 + $0x74] sm:$0xf] %v568
                  %v570 = vld [vmem:[%s508 + $0x78] sm:$0xf]
                  %571 = vst [vmem:[%s509 + $0x78] sm:$0xf] %v570
                  %v572 = vld [vmem:[%s508 + $0x7c] sm:$0xf]
                  %573 = vst [vmem:[%s509 + $0x7c] sm:$0xf] %v572
                  %v574 = vld [vmem:[%s508 + $0x100] sm:$0xf]
                  %575 = vst [vmem:[%s509 + $0x80] sm:$0xf] %v574
                  %v576 = vld [vmem:[%s508 + $0x104] sm:$0xf]
                  %577 = vst [vmem:[%s509 + $0x84] sm:$0xf] %v576
                  %v578 = vld [vmem:[%s508 + $0x108] sm:$0xf]
                  %579 = vst [vmem:[%s509 + $0x88] sm:$0xf] %v578
                  %v580 = vld [vmem:[%s508 + $0x10c] sm:$0xf]
                  %581 = vst [vmem:[%s509 + $0x8c] sm:$0xf] %v580
                  %v582 = vld [vmem:[%s508 + $0x110] sm:$0xf]
                  %583 = vst [vmem:[%s509 + $0x90] sm:$0xf] %v582
                  %v584 = vld [vmem:[%s508 + $0x114] sm:$0xf]
                  %585 = vst [vmem:[%s509 + $0x94] sm:$0xf] %v584
                  %v586 = vld [vmem:[%s508 + $0x118] sm:$0xf]
                  %587 = vst [vmem:[%s509 + $0x98] sm:$0xf] %v586
                  %v588 = vld [vmem:[%s508 + $0x11c] sm:$0xf]
                  %589 = vst [vmem:[%s509 + $0x9c] sm:$0xf] %v588
                  %v590 = vld [vmem:[%s508 + $0x120] sm:$0xf]
                  %591 = vst [vmem:[%s509 + $0xa0] sm:$0xf] %v590
                  %v592 = vld [vmem:[%s508 + $0x124] sm:$0xf]
                  %593 = vst [vmem:[%s509 + $0xa4] sm:$0xf] %v592
                  %v594 = vld [vmem:[%s508 + $0x128] sm:$0xf]
                  %595 = vst [vmem:[%s509 + $0xa8] sm:$0xf] %v594
                  %v596 = vld [vmem:[%s508 + $0x12c] sm:$0xf]
                  %597 = vst [vmem:[%s509 + $0xac] sm:$0xf] %v596
                  %v598 = vld [vmem:[%s508 + $0x130] sm:$0xf]
                  %599 = vst [vmem:[%s509 + $0xb0] sm:$0xf] %v598
                  %v600 = vld [vmem:[%s508 + $0x134] sm:$0xf]
                  %601 = vst [vmem:[%s509 + $0xb4] sm:$0xf] %v600
                  %v602 = vld [vmem:[%s508 + $0x138] sm:$0xf]
                  %603 = vst [vmem:[%s509 + $0xb8] sm:$0xf] %v602
                  %v604 = vld [vmem:[%s508 + $0x13c] sm:$0xf]
                  %605 = vst [vmem:[%s509 + $0xbc] sm:$0xf] %v604
                  %v606 = vld [vmem:[%s508 + $0x140] sm:$0xf]
                  %607 = vst [vmem:[%s509 + $0xc0] sm:$0xf] %v606
                  %v608 = vld [vmem:[%s508 + $0x144] sm:$0xf]
                  %609 = vst [vmem:[%s509 + $0xc4] sm:$0xf] %v608
                  %v610 = vld [vmem:[%s508 + $0x148] sm:$0xf]
                  %611 = vst [vmem:[%s509 + $0xc8] sm:$0xf] %v610
                  %v612 = vld [vmem:[%s508 + $0x14c] sm:$0xf]
                  %613 = vst [vmem:[%s509 + $0xcc] sm:$0xf] %v612
                  %v614 = vld [vmem:[%s508 + $0x150] sm:$0xf]
                  %615 = vst [vmem:[%s509 + $0xd0] sm:$0xf] %v614
                  %v616 = vld [vmem:[%s508 + $0x154] sm:$0xf]
                  %617 = vst [vmem:[%s509 + $0xd4] sm:$0xf] %v616
                  %v618 = vld [vmem:[%s508 + $0x158] sm:$0xf]
                  %619 = vst [vmem:[%s509 + $0xd8] sm:$0xf] %v618
                  %v620 = vld [vmem:[%s508 + $0x15c] sm:$0xf]
                  %621 = vst [vmem:[%s509 + $0xdc] sm:$0xf] %v620
                  %v622 = vld [vmem:[%s508 + $0x160] sm:$0xf]
                  %623 = vst [vmem:[%s509 + $0xe0] sm:$0xf] %v622
                  %v624 = vld [vmem:[%s508 + $0x164] sm:$0xf]
                  %625 = vst [vmem:[%s509 + $0xe4] sm:$0xf] %v624
                  %v626 = vld [vmem:[%s508 + $0x168] sm:$0xf]
                  %627 = vst [vmem:[%s509 + $0xe8] sm:$0xf] %v626
                  %v628 = vld [vmem:[%s508 + $0x16c] sm:$0xf]
                  %629 = vst [vmem:[%s509 + $0xec] sm:$0xf] %v628
                  %v630 = vld [vmem:[%s508 + $0x170] sm:$0xf]
                  %631 = vst [vmem:[%s509 + $0xf0] sm:$0xf] %v630
                  %v632 = vld [vmem:[%s508 + $0x174] sm:$0xf]
                  %633 = vst [vmem:[%s509 + $0xf4] sm:$0xf] %v632
                  %v634 = vld [vmem:[%s508 + $0x178] sm:$0xf]
                  %635 = vst [vmem:[%s509 + $0xf8] sm:$0xf] %v634
                  %v636 = vld [vmem:[%s508 + $0x17c] sm:$0xf]
                  %637 = vst [vmem:[%s509 + $0xfc] sm:$0xf] %v636
                $region95: #{tpu_custom_call.1} parent=82 // loop_footer
                  %s507 = sadd.s32 1, %s503
                $region96: #{tpu_custom_call.1} parent=82 // loop_footer_branch
                  %502 = sbr.rel target = $region92
                $region97: #{tpu_custom_call.1} parent=82 // loop_exit
                  _
              $region83: #{tpu_custom_call.1} parent=67 // pred_fallthru
                _
            $region68: #{tpu_custom_call.1} parent=63 // pred_fallthru
              _
            // Predicated region
            $region69: #{tpu_custom_call.1} parent=63 // pred_check
              _
            $region70: #{tpu_custom_call.1} parent=63 // pred_check_branch
              %353 = sbr.rel (0) target = $region72
            $region71: #{tpu_custom_call.1} parent=63 // pred_region
              loop: start=0, step=1, limit=1
              $region73: #{tpu_custom_call.1} parent=71 // loop_pre_header
                _
              $region74: #{tpu_custom_call.1} parent=71 // loop_header
                %s356 = sphi 0, %s360
                %p357 = scmp.ge.s32.totalorder %s356, 1
                %s361 = sphi %s347, %s347
                %s362 = sphi %s344, %s344
              $region75: #{tpu_custom_call.1} parent=71 // loop_header_branch
                %359 = sbr.rel (%p357) target = $region79
              $region76: #{tpu_custom_call.1} parent=71 // loop_body
                %v363 = vld [vmem:[%s361] sm:$0xf]
                %364 = vst [vmem:[%s362] sm:$0xf] %v363
                %v365 = vld [vmem:[%s361 + $0x4] sm:$0xf]
                %366 = vst [vmem:[%s362 + $0x4] sm:$0xf] %v365
                %v367 = vld [vmem:[%s361 + $0x8] sm:$0xf]
                %368 = vst [vmem:[%s362 + $0x8] sm:$0xf] %v367
                %v369 = vld [vmem:[%s361 + $0xc] sm:$0xf]
                %370 = vst [vmem:[%s362 + $0xc] sm:$0xf] %v369
                %v371 = vld [vmem:[%s361 + $0x10] sm:$0xf]
                %372 = vst [vmem:[%s362 + $0x10] sm:$0xf] %v371
                %v373 = vld [vmem:[%s361 + $0x14] sm:$0xf]
                %374 = vst [vmem:[%s362 + $0x14] sm:$0xf] %v373
                %v375 = vld [vmem:[%s361 + $0x18] sm:$0xf]
                %376 = vst [vmem:[%s362 + $0x18] sm:$0xf] %v375
                %v377 = vld [vmem:[%s361 + $0x1c] sm:$0xf]
                %378 = vst [vmem:[%s362 + $0x1c] sm:$0xf] %v377
                %v379 = vld [vmem:[%s361 + $0x20] sm:$0xf]
                %380 = vst [vmem:[%s362 + $0x20] sm:$0xf] %v379
                %v381 = vld [vmem:[%s361 + $0x24] sm:$0xf]
                %382 = vst [vmem:[%s362 + $0x24] sm:$0xf] %v381
                %v383 = vld [vmem:[%s361 + $0x28] sm:$0xf]
                %384 = vst [vmem:[%s362 + $0x28] sm:$0xf] %v383
                %v385 = vld [vmem:[%s361 + $0x2c] sm:$0xf]
                %386 = vst [vmem:[%s362 + $0x2c] sm:$0xf] %v385
                %v387 = vld [vmem:[%s361 + $0x30] sm:$0xf]
                %388 = vst [vmem:[%s362 + $0x30] sm:$0xf] %v387
                %v389 = vld [vmem:[%s361 + $0x34] sm:$0xf]
                %390 = vst [vmem:[%s362 + $0x34] sm:$0xf] %v389
                %v391 = vld [vmem:[%s361 + $0x38] sm:$0xf]
                %392 = vst [vmem:[%s362 + $0x38] sm:$0xf] %v391
                %v393 = vld [vmem:[%s361 + $0x3c] sm:$0xf]
                %394 = vst [vmem:[%s362 + $0x3c] sm:$0xf] %v393
                %v395 = vld [vmem:[%s361 + $0x40] sm:$0xf]
                %396 = vst [vmem:[%s362 + $0x40] sm:$0xf] %v395
                %v397 = vld [vmem:[%s361 + $0x44] sm:$0xf]
                %398 = vst [vmem:[%s362 + $0x44] sm:$0xf] %v397
                %v399 = vld [vmem:[%s361 + $0x48] sm:$0xf]
                %400 = vst [vmem:[%s362 + $0x48] sm:$0xf] %v399
                %v401 = vld [vmem:[%s361 + $0x4c] sm:$0xf]
                %402 = vst [vmem:[%s362 + $0x4c] sm:$0xf] %v401
                %v403 = vld [vmem:[%s361 + $0x50] sm:$0xf]
                %404 = vst [vmem:[%s362 + $0x50] sm:$0xf] %v403
                %v405 = vld [vmem:[%s361 + $0x54] sm:$0xf]
                %406 = vst [vmem:[%s362 + $0x54] sm:$0xf] %v405
                %v407 = vld [vmem:[%s361 + $0x58] sm:$0xf]
                %408 = vst [vmem:[%s362 + $0x58] sm:$0xf] %v407
                %v409 = vld [vmem:[%s361 + $0x5c] sm:$0xf]
                %410 = vst [vmem:[%s362 + $0x5c] sm:$0xf] %v409
                %v411 = vld [vmem:[%s361 + $0x60] sm:$0xf]
                %412 = vst [vmem:[%s362 + $0x60] sm:$0xf] %v411
                %v413 = vld [vmem:[%s361 + $0x64] sm:$0xf]
                %414 = vst [vmem:[%s362 + $0x64] sm:$0xf] %v413
                %v415 = vld [vmem:[%s361 + $0x68] sm:$0xf]
                %416 = vst [vmem:[%s362 + $0x68] sm:$0xf] %v415
                %v417 = vld [vmem:[%s361 + $0x6c] sm:$0xf]
                %418 = vst [vmem:[%s362 + $0x6c] sm:$0xf] %v417
                %v419 = vld [vmem:[%s361 + $0x70] sm:$0xf]
                %420 = vst [vmem:[%s362 + $0x70] sm:$0xf] %v419
                %v421 = vld [vmem:[%s361 + $0x74] sm:$0xf]
                %422 = vst [vmem:[%s362 + $0x74] sm:$0xf] %v421
                %v423 = vld [vmem:[%s361 + $0x78] sm:$0xf]
                %424 = vst [vmem:[%s362 + $0x78] sm:$0xf] %v423
                %v425 = vld [vmem:[%s361 + $0x7c] sm:$0xf]
                %426 = vst [vmem:[%s362 + $0x7c] sm:$0xf] %v425
                %v427 = vld [vmem:[%s361 + $0x100] sm:$0xf]
                %428 = vst [vmem:[%s362 + $0x80] sm:$0xf] %v427
                %v429 = vld [vmem:[%s361 + $0x104] sm:$0xf]
                %430 = vst [vmem:[%s362 + $0x84] sm:$0xf] %v429
                %v431 = vld [vmem:[%s361 + $0x108] sm:$0xf]
                %432 = vst [vmem:[%s362 + $0x88] sm:$0xf] %v431
                %v433 = vld [vmem:[%s361 + $0x10c] sm:$0xf]
                %434 = vst [vmem:[%s362 + $0x8c] sm:$0xf] %v433
                %v435 = vld [vmem:[%s361 + $0x110] sm:$0xf]
                %436 = vst [vmem:[%s362 + $0x90] sm:$0xf] %v435
                %v437 = vld [vmem:[%s361 + $0x114] sm:$0xf]
                %438 = vst [vmem:[%s362 + $0x94] sm:$0xf] %v437
                %v439 = vld [vmem:[%s361 + $0x118] sm:$0xf]
                %440 = vst [vmem:[%s362 + $0x98] sm:$0xf] %v439
                %v441 = vld [vmem:[%s361 + $0x11c] sm:$0xf]
                %442 = vst [vmem:[%s362 + $0x9c] sm:$0xf] %v441
                %v443 = vld [vmem:[%s361 + $0x120] sm:$0xf]
                %444 = vst [vmem:[%s362 + $0xa0] sm:$0xf] %v443
                %v445 = vld [vmem:[%s361 + $0x124] sm:$0xf]
                %446 = vst [vmem:[%s362 + $0xa4] sm:$0xf] %v445
                %v447 = vld [vmem:[%s361 + $0x128] sm:$0xf]
                %448 = vst [vmem:[%s362 + $0xa8] sm:$0xf] %v447
                %v449 = vld [vmem:[%s361 + $0x12c] sm:$0xf]
                %450 = vst [vmem:[%s362 + $0xac] sm:$0xf] %v449
                %v451 = vld [vmem:[%s361 + $0x130] sm:$0xf]
                %452 = vst [vmem:[%s362 + $0xb0] sm:$0xf] %v451
                %v453 = vld [vmem:[%s361 + $0x134] sm:$0xf]
                %454 = vst [vmem:[%s362 + $0xb4] sm:$0xf] %v453
                %v455 = vld [vmem:[%s361 + $0x138] sm:$0xf]
                %456 = vst [vmem:[%s362 + $0xb8] sm:$0xf] %v455
                %v457 = vld [vmem:[%s361 + $0x13c] sm:$0xf]
                %458 = vst [vmem:[%s362 + $0xbc] sm:$0xf] %v457
                %v459 = vld [vmem:[%s361 + $0x140] sm:$0xf]
                %460 = vst [vmem:[%s362 + $0xc0] sm:$0xf] %v459
                %v461 = vld [vmem:[%s361 + $0x144] sm:$0xf]
                %462 = vst [vmem:[%s362 + $0xc4] sm:$0xf] %v461
                %v463 = vld [vmem:[%s361 + $0x148] sm:$0xf]
                %464 = vst [vmem:[%s362 + $0xc8] sm:$0xf] %v463
                %v465 = vld [vmem:[%s361 + $0x14c] sm:$0xf]
                %466 = vst [vmem:[%s362 + $0xcc] sm:$0xf] %v465
                %v467 = vld [vmem:[%s361 + $0x150] sm:$0xf]
                %468 = vst [vmem:[%s362 + $0xd0] sm:$0xf] %v467
                %v469 = vld [vmem:[%s361 + $0x154] sm:$0xf]
                %470 = vst [vmem:[%s362 + $0xd4] sm:$0xf] %v469
                %v471 = vld [vmem:[%s361 + $0x158] sm:$0xf]
                %472 = vst [vmem:[%s362 + $0xd8] sm:$0xf] %v471
                %v473 = vld [vmem:[%s361 + $0x15c] sm:$0xf]
                %474 = vst [vmem:[%s362 + $0xdc] sm:$0xf] %v473
                %v475 = vld [vmem:[%s361 + $0x160] sm:$0xf]
                %476 = vst [vmem:[%s362 + $0xe0] sm:$0xf] %v475
                %v477 = vld [vmem:[%s361 + $0x164] sm:$0xf]
                %478 = vst [vmem:[%s362 + $0xe4] sm:$0xf] %v477
                %v479 = vld [vmem:[%s361 + $0x168] sm:$0xf]
                %480 = vst [vmem:[%s362 + $0xe8] sm:$0xf] %v479
                %v481 = vld [vmem:[%s361 + $0x16c] sm:$0xf]
                %482 = vst [vmem:[%s362 + $0xec] sm:$0xf] %v481
                %v483 = vld [vmem:[%s361 + $0x170] sm:$0xf]
                %484 = vst [vmem:[%s362 + $0xf0] sm:$0xf] %v483
                %v485 = vld [vmem:[%s361 + $0x174] sm:$0xf]
                %486 = vst [vmem:[%s362 + $0xf4] sm:$0xf] %v485
                %v487 = vld [vmem:[%s361 + $0x178] sm:$0xf]
                %488 = vst [vmem:[%s362 + $0xf8] sm:$0xf] %v487
                %v489 = vld [vmem:[%s361 + $0x17c] sm:$0xf]
                %490 = vst [vmem:[%s362 + $0xfc] sm:$0xf] %v489
              $region77: #{tpu_custom_call.1} parent=71 // loop_footer
                %s360 = sadd.s32 1, %s356
              $region78: #{tpu_custom_call.1} parent=71 // loop_footer_branch
                %355 = sbr.rel target = $region74
              $region79: #{tpu_custom_call.1} parent=71 // loop_exit
                _
            $region72: #{tpu_custom_call.1} parent=63 // pred_fallthru
              _
          $region64: #{tpu_custom_call.1} parent=59 // pred_fallthru
            _
          %638 = vnop
        $region60: #{tpu_custom_call.1} parent=55 // pred_fallthru
          _
      $region56: #{tpu_custom_call.1} parent=5 // pred_fallthru
        _
      %p639 = scmp.le.s32.totalorder 1, %s27
      %p640 = scmp.lt.s32.totalorder %s27, 3
      %p641 = pnand %p639, %p640
      %p642 = pneg %p641
      // Predicated region
      $region98: #{tpu_custom_call.1} parent=5 // pred_check
        _
      $region99: #{tpu_custom_call.1} parent=5 // pred_check_branch
        %644 = sbr.rel (%p641) target = $region101
      $region100: #{tpu_custom_call.1} parent=5 // pred_region
        %s645 = ssub.s32 %s27, 1
        %s646 = sand.u32 %s40, 1
        %s647 = sand.u32 %s40, 1
        %s648 = smul.addr %s647, 256
        %s649 = scalar_lea.vmem [#allocation4], %s648
        // Predicated region
        $region102: #{tpu_custom_call.1} parent=100 // pred_check
          %p650 = pneg %p53
        $region103: #{tpu_custom_call.1} parent=100 // pred_check_branch
          %652 = sbr.rel (%p650) target = $region105
        $region104: #{tpu_custom_call.1} parent=100 // pred_region
          _
        $region105: #{tpu_custom_call.1} parent=100 // pred_fallthru
          _
        %s653 = sand.u32 %s40, 1
        %s654 = sand.u32 %s40, 1
        %s655 = smul.addr %s654, 256
        %s656 = scalar_lea.vmem [#allocation4], %s655
        %p657 = pneg %p53
        %p658 = pneg %p50
        %p659 = pneg %p74
        %p660 = pneg %p71
        %p661 = pneg %p95
        %p662 = pneg %p92
        %p663 = pneg %p116
        %p664 = pneg %p113
        %p665 = pneg %p137
        %p666 = pneg %p134
        %p667 = pneg %p158
        %p668 = pneg %p155
        %p669 = pneg %p179
        %p670 = pneg %p176
        %p671 = pneg %p200
        %p672 = pneg %p197
        %p673 = pneg %p221
        %p674 = pneg %p218
        %p675 = pneg %p242
        %p676 = pneg %p239
        %p677 = pneg %p263
        %p678 = pneg %p260
        %p679 = pneg %p289
        %p680 = pneg %p286
        %s681 = sand.u32 %s276, 1
        %s682 = scalar_lea.sflag [#allocation6], %s681
        %s683 = sand.u32 %s276, 1
        %s684 = smul.addr %s683, 256
        %s685 = scalar_lea.vmem [#allocation5], %s684
        %s686 = smul.u32 32, %s32
        %s687 = smul.u32 32, %s32
        %v689 = vld [vmem:[%s649] sm:$0xf]
        %v690 = vld [vmem:[%s649 + $0x4] sm:$0xf]
        %v691 = vld [vmem:[%s649 + $0x8] sm:$0xf]
        %v692 = vld [vmem:[%s649 + $0xc] sm:$0xf]
        %v693 = vld [vmem:[%s649 + $0x10] sm:$0xf]
        %v694 = vld [vmem:[%s649 + $0x14] sm:$0xf]
        %v695 = vld [vmem:[%s649 + $0x18] sm:$0xf]
        %v696 = vld [vmem:[%s649 + $0x1c] sm:$0xf]
        %v697 = vld [vmem:[%s649 + $0x20] sm:$0xf]
        %v698 = vld [vmem:[%s649 + $0x24] sm:$0xf]
        %v699 = vld [vmem:[%s649 + $0x28] sm:$0xf]
        %v700 = vld [vmem:[%s649 + $0x2c] sm:$0xf]
        %v701 = vld [vmem:[%s649 + $0x30] sm:$0xf]
        %v702 = vld [vmem:[%s649 + $0x34] sm:$0xf]
        %v703 = vld [vmem:[%s649 + $0x38] sm:$0xf]
        %v704 = vld [vmem:[%s649 + $0x3c] sm:$0xf]
        %v705 = vld [vmem:[%s649 + $0x40] sm:$0xf]
        %v706 = vld [vmem:[%s649 + $0x44] sm:$0xf]
        %v707 = vld [vmem:[%s649 + $0x48] sm:$0xf]
        %v708 = vld [vmem:[%s649 + $0x4c] sm:$0xf]
        %v709 = vld [vmem:[%s649 + $0x50] sm:$0xf]
        %v710 = vld [vmem:[%s649 + $0x54] sm:$0xf]
        %v711 = vld [vmem:[%s649 + $0x58] sm:$0xf]
        %v712 = vld [vmem:[%s649 + $0x5c] sm:$0xf]
        %v713 = vld [vmem:[%s649 + $0x60] sm:$0xf]
        %v714 = vld [vmem:[%s649 + $0x64] sm:$0xf]
        %v715 = vld [vmem:[%s649 + $0x68] sm:$0xf]
        %v716 = vld [vmem:[%s649 + $0x6c] sm:$0xf]
        %v717 = vld [vmem:[%s649 + $0x70] sm:$0xf]
        %v718 = vld [vmem:[%s649 + $0x74] sm:$0xf]
        %v719 = vld [vmem:[%s649 + $0x78] sm:$0xf]
        %v720 = vld [vmem:[%s649 + $0x7c] sm:$0xf]
        %v721 = vld [vmem:[%s2] sm:$0xf]
        %v722 = vld [vmem:[%s2 + $0x4] sm:$0xf]
        %v723 = vld [vmem:[%s2 + $0x8] sm:$0xf]
        %v724 = vld [vmem:[%s2 + $0xc] sm:$0xf]
        %v725 = vld [vmem:[%s2 + $0x10] sm:$0xf]
        %v726 = vld [vmem:[%s2 + $0x14] sm:$0xf]
        %v727 = vld [vmem:[%s3] sm:$0x1]
        %v729 = vlaneseq
        %v730 = vshrl.u32 %v729, 7
        %v731 = vsub.s32 0, %v730
        %v732 = vrot.slane %v727, %v731
        %v766 = vunpack.c.l.b16 %v689
        %v767 = vunpack.c.l.b16 %v690
        %v768 = vunpack.c.l.b16 %v691
        %v769 = vunpack.c.l.b16 %v692
        %v770 = vunpack.c.l.b16 %v693
        %v771 = vunpack.c.l.b16 %v694
        %v772 = vunpack.c.l.b16 %v695
        %v773 = vunpack.c.l.b16 %v696
        %v774 = vunpack.c.l.b16 %v697
        %v775 = vunpack.c.l.b16 %v698
        %v776 = vunpack.c.l.b16 %v699
        %v777 = vunpack.c.l.b16 %v700
        %v778 = vunpack.c.l.b16 %v701
        %v779 = vunpack.c.l.b16 %v702
        %v780 = vunpack.c.l.b16 %v703
        %v781 = vunpack.c.l.b16 %v704
        %v782 = vunpack.c.l.b16 %v705
        %v783 = vunpack.c.l.b16 %v706
        %v784 = vunpack.c.l.b16 %v707
        %v785 = vunpack.c.l.b16 %v708
        %v786 = vunpack.c.l.b16 %v709
        %v787 = vunpack.c.l.b16 %v710
        %v788 = vunpack.c.l.b16 %v711
        %v789 = vunpack.c.l.b16 %v712
        %v790 = vunpack.c.l.b16 %v713
        %v791 = vunpack.c.l.b16 %v714
        %v792 = vunpack.c.l.b16 %v715
        %v793 = vunpack.c.l.b16 %v716
        %v794 = vunpack.c.l.b16 %v717
        %v795 = vunpack.c.l.b16 %v718
        %v796 = vunpack.c.l.b16 %v719
        %v797 = vunpack.c.l.b16 %v720
        %v798 = vpack.c.b16 %v767, %v766
        %v799 = vpack.c.b16 %v769, %v768
        %v800 = vpack.c.b16 %v771, %v770
        %v801 = vpack.c.b16 %v773, %v772
        %v802 = vpack.c.b16 %v775, %v774
        %v803 = vpack.c.b16 %v777, %v776
        %v804 = vpack.c.b16 %v779, %v778
        %v805 = vpack.c.b16 %v781, %v780
        %v806 = vpack.c.b16 %v783, %v782
        %v807 = vpack.c.b16 %v785, %v784
        %v808 = vpack.c.b16 %v787, %v786
        %v809 = vpack.c.b16 %v789, %v788
        %v810 = vpack.c.b16 %v791, %v790
        %v811 = vpack.c.b16 %v793, %v792
        %v812 = vpack.c.b16 %v795, %v794
        %v813 = vpack.c.b16 %v797, %v796
        %v820 = vunpack.c.l.b16 %v721
        %v821 = vunpack.c.l.b16 %v722
        %v822 = vunpack.c.l.b16 %v723
        %v823 = vunpack.c.l.b16 %v724
        %v824 = vunpack.c.l.b16 %v725
        %v825 = vunpack.c.l.b16 %v726
        %v826 = vpack.c.b16 %v821, %v820
        %v827 = vpack.c.b16 %v823, %v822
        %v828 = vpack.c.b16 %v825, %v824
        %vm832 = vcmask 392192
        %v834 = vsel %vm832, %v798, 0
        %v837 = vsel %vm832, %v799, 0
        %v840 = vsel %vm832, %v800, 0
        %v843 = vsel %vm832, %v801, 0
        %v846 = vsel %vm832, %v802, 0
        %v849 = vsel %vm832, %v803, 0
        %v852 = vsel %vm832, %v804, 0
        %v855 = vsel %vm832, %v805, 0
        %v858 = vsel %vm832, %v806, 0
        %v861 = vsel %vm832, %v807, 0
        %v864 = vsel %vm832, %v808, 0
        %v867 = vsel %vm832, %v809, 0
        %v870 = vsel %vm832, %v810, 0
        %v873 = vsel %vm832, %v811, 0
        %v876 = vsel %vm832, %v812, 0
        %v879 = vsel %vm832, %v813, 0
        %881 = vmatprep.subr.bf16.mxu0 0
        %882 = vmatpush1.bf16.msra.mxu0 %v826
        %883 = vmatprep.subr.bf16.mxu0 0
        %884 = vmatpush1.bf16.msra.mxu0 %v827
        %885 = vmatprep.subr.bf16.mxu0 0
        %886 = vmatpush1.bf16.msra.mxu0 %v828
        %887 = vmatprep.subr.bf16.mxu0 0
        %888 = vmatpush1.bf16.msra.mxu0 0
        %889 = vmatprep.subr.bf16.mxu0 0
        %890 = vmatpush1.bf16.msra.mxu0 0
        %891 = vmatprep.subr.bf16.mxu0 0
        %892 = vmatpush1.bf16.msra.mxu0 0
        %893 = vmatprep.subr.bf16.mxu0 0
        %894 = vmatpush1.bf16.msra.mxu0 0
        %895 = vmatprep.subr.bf16.mxu0 0
        %896 = vmatpush1.bf16.msra.mxu0 0
        %897 = vmatprep.subr.bf16.mxu0 0
        %898 = vmatpush1.bf16.msra.mxu0 0
        %899 = vmatprep.subr.bf16.mxu0 0
        %900 = vmatpush1.bf16.msra.mxu0 0
        %901 = vmatprep.subr.bf16.mxu0 0
        %902 = vmatpush1.bf16.msra.mxu0 0
        %903 = vmatprep.subr.bf16.mxu0 0
        %904 = vmatpush1.bf16.msra.mxu0 0
        %905 = vmatprep.subr.bf16.mxu0 0
        %906 = vmatpush1.bf16.msra.mxu0 0
        %907 = vmatprep.subr.bf16.mxu0 0
        %908 = vmatpush1.bf16.msra.mxu0 0
        %909 = vmatprep.subr.bf16.mxu0 0
        %910 = vmatpush1.bf16.msra.mxu0 0
        %911 = vmatprep.subr.bf16.mxu0 0
        %912 = vmatpush1.bf16.msra.mxu0 0
        %913 = vmatprep.mubr.bf16.mxu0 0
        %914 = vmatmul.mubr.bf16.gmra.mrb[0].mxu0 %v834
        %v915 = vpop.f32.mrb[0].mxu0
        %v916 = vadd.f32 %v732, %v915
        %v917 = vpop.f32.mrb[0].mxu0
        %v918 = vpop.f32.mrb[0].mxu0
        %v919 = vadd.f32 %v732, %v918
        %v920 = vpop.f32.mrb[0].mxu0
        %921 = vmatprep.mubr.bf16.mxu0 0
        %922 = vmatmul.mubr.bf16.gmra.mrb[0].mxu0 %v837
        %v923 = vpop.f32.mrb[0].mxu0
        %v924 = vadd.f32 %v732, %v923
        %v925 = vpop.f32.mrb[0].mxu0
        %v926 = vpop.f32.mrb[0].mxu0
        %v927 = vadd.f32 %v732, %v926
        %v928 = vpop.f32.mrb[0].mxu0
        %929 = vmatprep.mubr.bf16.mxu0 0
        %930 = vmatmul.mubr.bf16.gmra.mrb[0].mxu0 %v840
        %v931 = vpop.f32.mrb[0].mxu0
        %v932 = vadd.f32 %v732, %v931
        %v933 = vpop.f32.mrb[0].mxu0
        %v934 = vpop.f32.mrb[0].mxu0
        %v935 = vadd.f32 %v732, %v934
        %v936 = vpop.f32.mrb[0].mxu0
        %937 = vmatprep.mubr.bf16.mxu0 0
        %938 = vmatmul.mubr.bf16.gmra.mrb[0].mxu0 %v843
        %v939 = vpop.f32.mrb[0].mxu0
        %v940 = vadd.f32 %v732, %v939
        %v941 = vpop.f32.mrb[0].mxu0
        %v942 = vpop.f32.mrb[0].mxu0
        %v943 = vadd.f32 %v732, %v942
        %v944 = vpop.f32.mrb[0].mxu0
        %945 = vmatprep.mubr.bf16.mxu0 0
        %946 = vmatmul.mubr.bf16.gmra.mrb[0].mxu0 %v846
        %v947 = vpop.f32.mrb[0].mxu0
        %v948 = vadd.f32 %v732, %v947
        %v949 = vpop.f32.mrb[0].mxu0
        %v950 = vpop.f32.mrb[0].mxu0
        %v951 = vadd.f32 %v732, %v950
        %v952 = vpop.f32.mrb[0].mxu0
        %953 = vmatprep.mubr.bf16.mxu0 0
        %954 = vmatmul.mubr.bf16.gmra.mrb[0].mxu0 %v849
        %v955 = vpop.f32.mrb[0].mxu0
        %v956 = vadd.f32 %v732, %v955
        %v957 = vpop.f32.mrb[0].mxu0
        %v958 = vpop.f32.mrb[0].mxu0
        %v959 = vadd.f32 %v732, %v958
        %v960 = vpop.f32.mrb[0].mxu0
        %961 = vmatprep.mubr.bf16.mxu0 0
        %962 = vmatmul.mubr.bf16.gmra.mrb[0].mxu0 %v852
        %v963 = vpop.f32.mrb[0].mxu0
        %v964 = vadd.f32 %v732, %v963
        %v965 = vpop.f32.mrb[0].mxu0
        %v966 = vpop.f32.mrb[0].mxu0
        %v967 = vadd.f32 %v732, %v966
        %v968 = vpop.f32.mrb[0].mxu0
        %969 = vmatprep.mubr.bf16.mxu0 0
        %970 = vmatmul.mubr.bf16.gmra.mrb[0].mxu0 %v855
        %v971 = vpop.f32.mrb[0].mxu0
        %v972 = vadd.f32 %v732, %v971
        %v973 = vpop.f32.mrb[0].mxu0
        %v974 = vpop.f32.mrb[0].mxu0
        %v975 = vadd.f32 %v732, %v974
        %v976 = vpop.f32.mrb[0].mxu0
        %977 = vmatprep.mubr.bf16.mxu0 0
        %978 = vmatmul.mubr.bf16.gmra.mrb[0].mxu0 %v858
        %v979 = vpop.f32.mrb[0].mxu0
        %v980 = vadd.f32 %v732, %v979
        %v981 = vpop.f32.mrb[0].mxu0
        %v982 = vpop.f32.mrb[0].mxu0
        %v983 = vadd.f32 %v732, %v982
        %v984 = vpop.f32.mrb[0].mxu0
        %985 = vmatprep.mubr.bf16.mxu0 0
        %986 = vmatmul.mubr.bf16.gmra.mrb[0].mxu0 %v861
        %v987 = vpop.f32.mrb[0].mxu0
        %v988 = vadd.f32 %v732, %v987
        %v989 = vpop.f32.mrb[0].mxu0
        %v990 = vpop.f32.mrb[0].mxu0
        %v991 = vadd.f32 %v732, %v990
        %v992 = vpop.f32.mrb[0].mxu0
        %993 = vmatprep.mubr.bf16.mxu0 0
        %994 = vmatmul.mubr.bf16.gmra.mrb[0].mxu0 %v864
        %v995 = vpop.f32.mrb[0].mxu0
        %v996 = vadd.f32 %v732, %v995
        %v997 = vpop.f32.mrb[0].mxu0
        %v998 = vpop.f32.mrb[0].mxu0
        %v999 = vadd.f32 %v732, %v998
        %v1000 = vpop.f32.mrb[0].mxu0
        %1001 = vmatprep.mubr.bf16.mxu0 0
        %1002 = vmatmul.mubr.bf16.gmra.mrb[0].mxu0 %v867
        %v1003 = vpop.f32.mrb[0].mxu0
        %v1004 = vadd.f32 %v732, %v1003
        %v1005 = vpop.f32.mrb[0].mxu0
        %v1006 = vpop.f32.mrb[0].mxu0
        %v1007 = vadd.f32 %v732, %v1006
        %v1008 = vpop.f32.mrb[0].mxu0
        %1009 = vmatprep.mubr.bf16.mxu0 0
        %1010 = vmatmul.mubr.bf16.gmra.mrb[0].mxu0 %v870
        %v1011 = vpop.f32.mrb[0].mxu0
        %v1012 = vadd.f32 %v732, %v1011
        %v1013 = vpop.f32.mrb[0].mxu0
        %v1014 = vpop.f32.mrb[0].mxu0
        %v1015 = vadd.f32 %v732, %v1014
        %v1016 = vpop.f32.mrb[0].mxu0
        %1017 = vmatprep.mubr.bf16.mxu0 0
        %1018 = vmatmul.mubr.bf16.gmra.mrb[0].mxu0 %v873
        %v1019 = vpop.f32.mrb[0].mxu0
        %v1020 = vadd.f32 %v732, %v1019
        %v1021 = vpop.f32.mrb[0].mxu0
        %v1022 = vpop.f32.mrb[0].mxu0
        %v1023 = vadd.f32 %v732, %v1022
        %v1024 = vpop.f32.mrb[0].mxu0
        %1025 = vmatprep.mubr.bf16.mxu0 0
        %1026 = vmatmul.mubr.bf16.gmra.mrb[0].mxu0 %v876
        %v1027 = vpop.f32.mrb[0].mxu0
        %v1028 = vadd.f32 %v732, %v1027
        %v1029 = vpop.f32.mrb[0].mxu0
        %v1030 = vpop.f32.mrb[0].mxu0
        %v1031 = vadd.f32 %v732, %v1030
        %v1032 = vpop.f32.mrb[0].mxu0
        %1033 = vmatprep.mubr.bf16.mxu0 0
        %1034 = vmatmul.mubr.bf16.gmra.mrb[0].mxu0 %v879
        %v1035 = vpop.f32.mrb[0].mxu0
        %v1036 = vadd.f32 %v732, %v1035
        %v1037 = vpop.f32.mrb[0].mxu0
        %v1038 = vpop.f32.mrb[0].mxu0
        %v1039 = vadd.f32 %v732, %v1038
        %v1040 = vpop.f32.mrb[0].mxu0
        %1041 = vdwg.mxu0
        %s1042 = sld [smem:[#allocation3]]
        %vm1043 = vcmp.ge.f32.partialorder %v916, 0.0
        %vm1044 = vcmp.ge.f32.partialorder %v919, 0.0
        %vm1045 = vcmp.ge.f32.partialorder %v924, 0.0
        %vm1046 = vcmp.ge.f32.partialorder %v927, 0.0
        %vm1047 = vcmp.ge.f32.partialorder %v932, 0.0
        %vm1048 = vcmp.ge.f32.partialorder %v935, 0.0
        %vm1049 = vcmp.ge.f32.partialorder %v940, 0.0
        %vm1050 = vcmp.ge.f32.partialorder %v943, 0.0
        %vm1051 = vcmp.ge.f32.partialorder %v948, 0.0
        %vm1052 = vcmp.ge.f32.partialorder %v951, 0.0
        %vm1053 = vcmp.ge.f32.partialorder %v956, 0.0
        %vm1054 = vcmp.ge.f32.partialorder %v959, 0.0
        %vm1055 = vcmp.ge.f32.partialorder %v964, 0.0
        %vm1056 = vcmp.ge.f32.partialorder %v967, 0.0
        %vm1057 = vcmp.ge.f32.partialorder %v972, 0.0
        %vm1058 = vcmp.ge.f32.partialorder %v975, 0.0
        %vm1059 = vcmp.ge.f32.partialorder %v980, 0.0
        %vm1060 = vcmp.ge.f32.partialorder %v983, 0.0
        %vm1061 = vcmp.ge.f32.partialorder %v988, 0.0
        %vm1062 = vcmp.ge.f32.partialorder %v991, 0.0
        %vm1063 = vcmp.ge.f32.partialorder %v996, 0.0
        %vm1064 = vcmp.ge.f32.partialorder %v999, 0.0
        %vm1065 = vcmp.ge.f32.partialorder %v1004, 0.0
        %vm1066 = vcmp.ge.f32.partialorder %v1007, 0.0
        %vm1067 = vcmp.ge.f32.partialorder %v1012, 0.0
        %vm1068 = vcmp.ge.f32.partialorder %v1015, 0.0
        %vm1069 = vcmp.ge.f32.partialorder %v1020, 0.0
        %vm1070 = vcmp.ge.f32.partialorder %v1023, 0.0
        %vm1071 = vcmp.ge.f32.partialorder %v1028, 0.0
        %vm1072 = vcmp.ge.f32.partialorder %v1031, 0.0
        %vm1073 = vcmp.ge.f32.partialorder %v1036, 0.0
        %vm1074 = vcmp.ge.f32.partialorder %v1039, 0.0
        %v1075 = vstv %s1042
        %v1076 = vmul.f32 %v1075, %v916
        %v1077 = vmul.f32 %v1075, %v919
        %v1078 = vmul.f32 %v1075, %v924
        %v1079 = vmul.f32 %v1075, %v927
        %v1080 = vmul.f32 %v1075, %v932
        %v1081 = vmul.f32 %v1075, %v935
        %v1082 = vmul.f32 %v1075, %v940
        %v1083 = vmul.f32 %v1075, %v943
        %v1084 = vmul.f32 %v1075, %v948
        %v1085 = vmul.f32 %v1075, %v951
        %v1086 = vmul.f32 %v1075, %v956
        %v1087 = vmul.f32 %v1075, %v959
        %v1088 = vmul.f32 %v1075, %v964
        %v1089 = vmul.f32 %v1075, %v967
        %v1090 = vmul.f32 %v1075, %v972
        %v1091 = vmul.f32 %v1075, %v975
        %v1092 = vmul.f32 %v1075, %v980
        %v1093 = vmul.f32 %v1075, %v983
        %v1094 = vmul.f32 %v1075, %v988
        %v1095 = vmul.f32 %v1075, %v991
        %v1096 = vmul.f32 %v1075, %v996
        %v1097 = vmul.f32 %v1075, %v999
        %v1098 = vmul.f32 %v1075, %v1004
        %v1099 = vmul.f32 %v1075, %v1007
        %v1100 = vmul.f32 %v1075, %v1012
        %v1101 = vmul.f32 %v1075, %v1015
        %v1102 = vmul.f32 %v1075, %v1020
        %v1103 = vmul.f32 %v1075, %v1023
        %v1104 = vmul.f32 %v1075, %v1028
        %v1105 = vmul.f32 %v1075, %v1031
        %v1106 = vmul.f32 %v1075, %v1036
        %v1107 = vmul.f32 %v1075, %v1039
        %v1108 = vsel %vm1043, %v916, %v1076
        %v1109 = vsel %vm1044, %v919, %v1077
        %v1110 = vsel %vm1045, %v924, %v1078
        %v1111 = vsel %vm1046, %v927, %v1079
        %v1112 = vsel %vm1047, %v932, %v1080
        %v1113 = vsel %vm1048, %v935, %v1081
        %v1114 = vsel %vm1049, %v940, %v1082
        %v1115 = vsel %vm1050, %v943, %v1083
        %v1116 = vsel %vm1051, %v948, %v1084
        %v1117 = vsel %vm1052, %v951, %v1085
        %v1118 = vsel %vm1053, %v956, %v1086
        %v1119 = vsel %vm1054, %v959, %v1087
        %v1120 = vsel %vm1055, %v964, %v1088
        %v1121 = vsel %vm1056, %v967, %v1089
        %v1122 = vsel %vm1057, %v972, %v1090
        %v1123 = vsel %vm1058, %v975, %v1091
        %v1124 = vsel %vm1059, %v980, %v1092
        %v1125 = vsel %vm1060, %v983, %v1093
        %v1126 = vsel %vm1061, %v988, %v1094
        %v1127 = vsel %vm1062, %v991, %v1095
        %v1128 = vsel %vm1063, %v996, %v1096
        %v1129 = vsel %vm1064, %v999, %v1097
        %v1130 = vsel %vm1065, %v1004, %v1098
        %v1131 = vsel %vm1066, %v1007, %v1099
        %v1132 = vsel %vm1067, %v1012, %v1100
        %v1133 = vsel %vm1068, %v1015, %v1101
        %v1134 = vsel %vm1069, %v1020, %v1102
        %v1135 = vsel %vm1070, %v1023, %v1103
        %v1136 = vsel %vm1071, %v1028, %v1104
        %v1137 = vsel %vm1072, %v1031, %v1105
        %v1138 = vsel %vm1073, %v1036, %v1106
        %v1139 = vsel %vm1074, %v1039, %v1107
        %v1140 = vpack.c.bf16 %v1109, %v1108
        %v1141 = vpack.c.bf16 %v1111, %v1110
        %v1142 = vpack.c.bf16 %v1113, %v1112
        %v1143 = vpack.c.bf16 %v1115, %v1114
        %v1144 = vpack.c.bf16 %v1117, %v1116
        %v1145 = vpack.c.bf16 %v1119, %v1118
        %v1146 = vpack.c.bf16 %v1121, %v1120
        %v1147 = vpack.c.bf16 %v1123, %v1122
        %v1148 = vpack.c.bf16 %v1125, %v1124
        %v1149 = vpack.c.bf16 %v1127, %v1126
        %v1150 = vpack.c.bf16 %v1129, %v1128
        %v1151 = vpack.c.bf16 %v1131, %v1130
        %v1152 = vpack.c.bf16 %v1133, %v1132
        %v1153 = vpack.c.bf16 %v1135, %v1134
        %v1154 = vpack.c.bf16 %v1137, %v1136
        %v1155 = vpack.c.bf16 %v1139, %v1138
        %v1156 = vld [vmem:[%s4] sm:$0xf]
        %v1157 = vld [vmem:[%s4 + $0x4] sm:$0xf]
        %v1158 = vld [vmem:[%s4 + $0x8] sm:$0xf]
        %v1159 = vld [vmem:[%s4 + $0xc] sm:$0xf]
        %v1160 = vld [vmem:[%s4 + $0x10] sm:$0xf]
        %v1161 = vld [vmem:[%s4 + $0x14] sm:$0xf]
        %v1162 = vld [vmem:[%s4 + $0x18] sm:$0xf]
        %v1163 = vld [vmem:[%s4 + $0x1c] sm:$0xf]
        %v1164 = vld [vmem:[%s4 + $0x20] sm:$0xf]
        %v1165 = vld [vmem:[%s4 + $0x24] sm:$0xf]
        %v1166 = vld [vmem:[%s4 + $0x28] sm:$0xf]
        %v1167 = vld [vmem:[%s4 + $0x2c] sm:$0xf]
        %v1168 = vld [vmem:[%s4 + $0x30] sm:$0xf]
        %v1169 = vld [vmem:[%s4 + $0x34] sm:$0xf]
        %v1170 = vld [vmem:[%s4 + $0x38] sm:$0xf]
        %v1171 = vld [vmem:[%s4 + $0x3c] sm:$0xf]
        %v1172 = vld [vmem:[%s5] sm:$0x1]
        %v1174 = vlaneseq
        %v1175 = vshrl.u32 %v1174, 7
        %v1176 = vsub.s32 0, %v1175
        %v1177 = vrot.slane %v1172, %v1176
        %v1195 = vunpack.c.l.b16 %v1156
        %v1196 = vunpack.c.l.b16 %v1157
        %v1197 = vunpack.c.l.b16 %v1158
        %v1198 = vunpack.c.l.b16 %v1159
        %v1199 = vunpack.c.l.b16 %v1160
        %v1200 = vunpack.c.l.b16 %v1161
        %v1201 = vunpack.c.l.b16 %v1162
        %v1202 = vunpack.c.l.b16 %v1163
        %v1203 = vunpack.c.l.b16 %v1164
        %v1204 = vunpack.c.l.b16 %v1165
        %v1205 = vunpack.c.l.b16 %v1166
        %v1206 = vunpack.c.l.b16 %v1167
        %v1207 = vunpack.c.l.b16 %v1168
        %v1208 = vunpack.c.l.b16 %v1169
        %v1209 = vunpack.c.l.b16 %v1170
        %v1210 = vunpack.c.l.b16 %v1171
        %v1211 = vpack.c.b16 %v1196, %v1195
        %v1212 = vpack.c.b16 %v1198, %v1197
        %v1213 = vpack.c.b16 %v1200, %v1199
        %v1214 = vpack.c.b16 %v1202, %v1201
        %v1215 = vpack.c.b16 %v1204, %v1203
        %v1216 = vpack.c.b16 %v1206, %v1205
        %v1217 = vpack.c.b16 %v1208, %v1207
        %v1218 = vpack.c.b16 %v1210, %v1209
        %1227 = vmatprep.subr.bf16.mxu0 0
        %1228 = vmatpush1.bf16.msra.mxu0 %v1211
        %1229 = vmatprep.subr.bf16.mxu0 0
        %1230 = vmatpush1.bf16.msra.mxu0 %v1212
        %1231 = vmatprep.subr.bf16.mxu0 0
        %1232 = vmatpush1.bf16.msra.mxu0 %v1213
        %1233 = vmatprep.subr.bf16.mxu0 0
        %1234 = vmatpush1.bf16.msra.mxu0 %v1214
        %1235 = vmatprep.subr.bf16.mxu0 0
        %1236 = vmatpush1.bf16.msra.mxu0 %v1215
        %1237 = vmatprep.subr.bf16.mxu0 0
        %1238 = vmatpush1.bf16.msra.mxu0 %v1216
        %1239 = vmatprep.subr.bf16.mxu0 0
        %1240 = vmatpush1.bf16.msra.mxu0 %v1217
        %1241 = vmatprep.subr.bf16.mxu0 0
        %1242 = vmatpush1.bf16.msra.mxu0 %v1218
        %1243 = vmatprep.subr.bf16.mxu0 0
        %1244 = vmatpush1.bf16.msra.mxu0 0
        %1245 = vmatprep.subr.bf16.mxu0 0
        %1246 = vmatpush1.bf16.msra.mxu0 0
        %1247 = vmatprep.subr.bf16.mxu0 0
        %1248 = vmatpush1.bf16.msra.mxu0 0
        %1249 = vmatprep.subr.bf16.mxu0 0
        %1250 = vmatpush1.bf16.msra.mxu0 0
        %1251 = vmatprep.subr.bf16.mxu0 0
        %1252 = vmatpush1.bf16.msra.mxu0 0
        %1253 = vmatprep.subr.bf16.mxu0 0
        %1254 = vmatpush1.bf16.msra.mxu0 0
        %1255 = vmatprep.subr.bf16.mxu0 0
        %1256 = vmatpush1.bf16.msra.mxu0 0
        %1257 = vmatprep.subr.bf16.mxu0 0
        %1258 = vmatpush1.bf16.msra.mxu0 0
        %1259 = vmatprep.mubr.bf16.mxu0 0
        %1260 = vmatmul.mubr.bf16.gmra.mrb[0].mxu0 %v1140
        %v1261 = vpop.f32.mrb[0].mxu0
        %v1262 = vadd.f32 %v1177, %v1261
        %v1263 = vpop.f32.mrb[0].mxu0
        %v1264 = vpop.f32.mrb[0].mxu0
        %v1265 = vadd.f32 %v1177, %v1264
        %v1266 = vpop.f32.mrb[0].mxu0
        %1267 = vmatprep.mubr.bf16.mxu0 0
        %1268 = vmatmul.mubr.bf16.gmra.mrb[0].mxu0 %v1141
        %v1269 = vpop.f32.mrb[0].mxu0
        %v1270 = vadd.f32 %v1177, %v1269
        %v1271 = vpop.f32.mrb[0].mxu0
        %v1272 = vpop.f32.mrb[0].mxu0
        %v1273 = vadd.f32 %v1177, %v1272
        %v1274 = vpop.f32.mrb[0].mxu0
        %1275 = vmatprep.mubr.bf16.mxu0 0
        %1276 = vmatmul.mubr.bf16.gmra.mrb[0].mxu0 %v1142
        %v1277 = vpop.f32.mrb[0].mxu0
        %v1278 = vadd.f32 %v1177, %v1277
        %v1279 = vpop.f32.mrb[0].mxu0
        %v1280 = vpop.f32.mrb[0].mxu0
        %v1281 = vadd.f32 %v1177, %v1280
        %v1282 = vpop.f32.mrb[0].mxu0
        %1283 = vmatprep.mubr.bf16.mxu0 0
        %1284 = vmatmul.mubr.bf16.gmra.mrb[0].mxu0 %v1143
        %v1285 = vpop.f32.mrb[0].mxu0
        %v1286 = vadd.f32 %v1177, %v1285
        %v1287 = vpop.f32.mrb[0].mxu0
        %v1288 = vpop.f32.mrb[0].mxu0
        %v1289 = vadd.f32 %v1177, %v1288
        %v1290 = vpop.f32.mrb[0].mxu0
        %1291 = vmatprep.mubr.bf16.mxu0 0
        %1292 = vmatmul.mubr.bf16.gmra.mrb[0].mxu0 %v1144
        %v1293 = vpop.f32.mrb[0].mxu0
        %v1294 = vadd.f32 %v1177, %v1293
        %v1295 = vpop.f32.mrb[0].mxu0
        %v1296 = vpop.f32.mrb[0].mxu0
        %v1297 = vadd.f32 %v1177, %v1296
        %v1298 = vpop.f32.mrb[0].mxu0
        %1299 = vmatprep.mubr.bf16.mxu0 0
        %1300 = vmatmul.mubr.bf16.gmra.mrb[0].mxu0 %v1145
        %v1301 = vpop.f32.mrb[0].mxu0
        %v1302 = vadd.f32 %v1177, %v1301
        %v1303 = vpop.f32.mrb[0].mxu0
        %v1304 = vpop.f32.mrb[0].mxu0
        %v1305 = vadd.f32 %v1177, %v1304
        %v1306 = vpop.f32.mrb[0].mxu0
        %1307 = vmatprep.mubr.bf16.mxu0 0
        %1308 = vmatmul.mubr.bf16.gmra.mrb[0].mxu0 %v1146
        %v1309 = vpop.f32.mrb[0].mxu0
        %v1310 = vadd.f32 %v1177, %v1309
        %v1311 = vpop.f32.mrb[0].mxu0
        %v1312 = vpop.f32.mrb[0].mxu0
        %v1313 = vadd.f32 %v1177, %v1312
        %v1314 = vpop.f32.mrb[0].mxu0
        %1315 = vmatprep.mubr.bf16.mxu0 0
        %1316 = vmatmul.mubr.bf16.gmra.mrb[0].mxu0 %v1147
        %v1317 = vpop.f32.mrb[0].mxu0
        %v1318 = vadd.f32 %v1177, %v1317
        %v1319 = vpop.f32.mrb[0].mxu0
        %v1320 = vpop.f32.mrb[0].mxu0
        %v1321 = vadd.f32 %v1177, %v1320
        %v1322 = vpop.f32.mrb[0].mxu0
        %1323 = vmatprep.mubr.bf16.mxu0 0
        %1324 = vmatmul.mubr.bf16.gmra.mrb[0].mxu0 %v1148
        %v1325 = vpop.f32.mrb[0].mxu0
        %v1326 = vadd.f32 %v1177, %v1325
        %v1327 = vpop.f32.mrb[0].mxu0
        %v1328 = vpop.f32.mrb[0].mxu0
        %v1329 = vadd.f32 %v1177, %v1328
        %v1330 = vpop.f32.mrb[0].mxu0
        %1331 = vmatprep.mubr.bf16.mxu0 0
        %1332 = vmatmul.mubr.bf16.gmra.mrb[0].mxu0 %v1149
        %v1333 = vpop.f32.mrb[0].mxu0
        %v1334 = vadd.f32 %v1177, %v1333
        %v1335 = vpop.f32.mrb[0].mxu0
        %v1336 = vpop.f32.mrb[0].mxu0
        %v1337 = vadd.f32 %v1177, %v1336
        %v1338 = vpop.f32.mrb[0].mxu0
        %1339 = vmatprep.mubr.bf16.mxu0 0
        %1340 = vmatmul.mubr.bf16.gmra.mrb[0].mxu0 %v1150
        %v1341 = vpop.f32.mrb[0].mxu0
        %v1342 = vadd.f32 %v1177, %v1341
        %v1343 = vpop.f32.mrb[0].mxu0
        %v1344 = vpop.f32.mrb[0].mxu0
        %v1345 = vadd.f32 %v1177, %v1344
        %v1346 = vpop.f32.mrb[0].mxu0
        %1347 = vmatprep.mubr.bf16.mxu0 0
        %1348 = vmatmul.mubr.bf16.gmra.mrb[0].mxu0 %v1151
        %v1349 = vpop.f32.mrb[0].mxu0
        %v1350 = vadd.f32 %v1177, %v1349
        %v1351 = vpop.f32.mrb[0].mxu0
        %v1352 = vpop.f32.mrb[0].mxu0
        %v1353 = vadd.f32 %v1177, %v1352
        %v1354 = vpop.f32.mrb[0].mxu0
        %1355 = vmatprep.mubr.bf16.mxu0 0
        %1356 = vmatmul.mubr.bf16.gmra.mrb[0].mxu0 %v1152
        %v1357 = vpop.f32.mrb[0].mxu0
        %v1358 = vadd.f32 %v1177, %v1357
        %v1359 = vpop.f32.mrb[0].mxu0
        %v1360 = vpop.f32.mrb[0].mxu0
        %v1361 = vadd.f32 %v1177, %v1360
        %v1362 = vpop.f32.mrb[0].mxu0
        %1363 = vmatprep.mubr.bf16.mxu0 0
        %1364 = vmatmul.mubr.bf16.gmra.mrb[0].mxu0 %v1153
        %v1365 = vpop.f32.mrb[0].mxu0
        %v1366 = vadd.f32 %v1177, %v1365
        %v1367 = vpop.f32.mrb[0].mxu0
        %v1368 = vpop.f32.mrb[0].mxu0
        %v1369 = vadd.f32 %v1177, %v1368
        %v1370 = vpop.f32.mrb[0].mxu0
        %1371 = vmatprep.mubr.bf16.mxu0 0
        %1372 = vmatmul.mubr.bf16.gmra.mrb[0].mxu0 %v1154
        %v1373 = vpop.f32.mrb[0].mxu0
        %v1374 = vadd.f32 %v1177, %v1373
        %v1375 = vpop.f32.mrb[0].mxu0
        %v1376 = vpop.f32.mrb[0].mxu0
        %v1377 = vadd.f32 %v1177, %v1376
        %v1378 = vpop.f32.mrb[0].mxu0
        %1379 = vmatprep.mubr.bf16.mxu0 0
        %1380 = vmatmul.mubr.bf16.gmra.mrb[0].mxu0 %v1155
        %v1381 = vpop.f32.mrb[0].mxu0
        %v1382 = vadd.f32 %v1177, %v1381
        %v1383 = vpop.f32.mrb[0].mxu0
        %v1384 = vpop.f32.mrb[0].mxu0
        %v1385 = vadd.f32 %v1177, %v1384
        %v1386 = vpop.f32.mrb[0].mxu0
        %1387 = vdwg.mxu0
        %s1388 = sld [smem:[#allocation3 + $0x2]]
        %vm1389 = vcmp.ge.f32.partialorder %v1262, 0.0
        %vm1390 = vcmp.ge.f32.partialorder %v1265, 0.0
        %vm1391 = vcmp.ge.f32.partialorder %v1270, 0.0
        %vm1392 = vcmp.ge.f32.partialorder %v1273, 0.0
        %vm1393 = vcmp.ge.f32.partialorder %v1278, 0.0
        %vm1394 = vcmp.ge.f32.partialorder %v1281, 0.0
        %vm1395 = vcmp.ge.f32.partialorder %v1286, 0.0
        %vm1396 = vcmp.ge.f32.partialorder %v1289, 0.0
        %vm1397 = vcmp.ge.f32.partialorder %v1294, 0.0
        %vm1398 = vcmp.ge.f32.partialorder %v1297, 0.0
        %vm1399 = vcmp.ge.f32.partialorder %v1302, 0.0
        %vm1400 = vcmp.ge.f32.partialorder %v1305, 0.0
        %vm1401 = vcmp.ge.f32.partialorder %v1310, 0.0
        %vm1402 = vcmp.ge.f32.partialorder %v1313, 0.0
        %vm1403 = vcmp.ge.f32.partialorder %v1318, 0.0
        %vm1404 = vcmp.ge.f32.partialorder %v1321, 0.0
        %vm1405 = vcmp.ge.f32.partialorder %v1326, 0.0
        %vm1406 = vcmp.ge.f32.partialorder %v1329, 0.0
        %vm1407 = vcmp.ge.f32.partialorder %v1334, 0.0
        %vm1408 = vcmp.ge.f32.partialorder %v1337, 0.0
        %vm1409 = vcmp.ge.f32.partialorder %v1342, 0.0
        %vm1410 = vcmp.ge.f32.partialorder %v1345, 0.0
        %vm1411 = vcmp.ge.f32.partialorder %v1350, 0.0
        %vm1412 = vcmp.ge.f32.partialorder %v1353, 0.0
        %vm1413 = vcmp.ge.f32.partialorder %v1358, 0.0
        %vm1414 = vcmp.ge.f32.partialorder %v1361, 0.0
        %vm1415 = vcmp.ge.f32.partialorder %v1366, 0.0
        %vm1416 = vcmp.ge.f32.partialorder %v1369, 0.0
        %vm1417 = vcmp.ge.f32.partialorder %v1374, 0.0
        %vm1418 = vcmp.ge.f32.partialorder %v1377, 0.0
        %vm1419 = vcmp.ge.f32.partialorder %v1382, 0.0
        %vm1420 = vcmp.ge.f32.partialorder %v1385, 0.0
        %v1421 = vstv %s1388
        %v1422 = vmul.f32 %v1421, %v1262
        %v1423 = vmul.f32 %v1421, %v1265
        %v1424 = vmul.f32 %v1421, %v1270
        %v1425 = vmul.f32 %v1421, %v1273
        %v1426 = vmul.f32 %v1421, %v1278
        %v1427 = vmul.f32 %v1421, %v1281
        %v1428 = vmul.f32 %v1421, %v1286
        %v1429 = vmul.f32 %v1421, %v1289
        %v1430 = vmul.f32 %v1421, %v1294
        %v1431 = vmul.f32 %v1421, %v1297
        %v1432 = vmul.f32 %v1421, %v1302
        %v1433 = vmul.f32 %v1421, %v1305
        %v1434 = vmul.f32 %v1421, %v1310
        %v1435 = vmul.f32 %v1421, %v1313
        %v1436 = vmul.f32 %v1421, %v1318
        %v1437 = vmul.f32 %v1421, %v1321
        %v1438 = vmul.f32 %v1421, %v1326
        %v1439 = vmul.f32 %v1421, %v1329
        %v1440 = vmul.f32 %v1421, %v1334
        %v1441 = vmul.f32 %v1421, %v1337
        %v1442 = vmul.f32 %v1421, %v1342
        %v1443 = vmul.f32 %v1421, %v1345
        %v1444 = vmul.f32 %v1421, %v1350
        %v1445 = vmul.f32 %v1421, %v1353
        %v1446 = vmul.f32 %v1421, %v1358
        %v1447 = vmul.f32 %v1421, %v1361
        %v1448 = vmul.f32 %v1421, %v1366
        %v1449 = vmul.f32 %v1421, %v1369
        %v1450 = vmul.f32 %v1421, %v1374
        %v1451 = vmul.f32 %v1421, %v1377
        %v1452 = vmul.f32 %v1421, %v1382
        %v1453 = vmul.f32 %v1421, %v1385
        %v1454 = vsel %vm1389, %v1262, %v1422
        %v1455 = vsel %vm1390, %v1265, %v1423
        %v1456 = vsel %vm1391, %v1270, %v1424
        %v1457 = vsel %vm1392, %v1273, %v1425
        %v1458 = vsel %vm1393, %v1278, %v1426
        %v1459 = vsel %vm1394, %v1281, %v1427
        %v1460 = vsel %vm1395, %v1286, %v1428
        %v1461 = vsel %vm1396, %v1289, %v1429
        %v1462 = vsel %vm1397, %v1294, %v1430
        %v1463 = vsel %vm1398, %v1297, %v1431
        %v1464 = vsel %vm1399, %v1302, %v1432
        %v1465 = vsel %vm1400, %v1305, %v1433
        %v1466 = vsel %vm1401, %v1310, %v1434
        %v1467 = vsel %vm1402, %v1313, %v1435
        %v1468 = vsel %vm1403, %v1318, %v1436
        %v1469 = vsel %vm1404, %v1321, %v1437
        %v1470 = vsel %vm1405, %v1326, %v1438
        %v1471 = vsel %vm1406, %v1329, %v1439
        %v1472 = vsel %vm1407, %v1334, %v1440
        %v1473 = vsel %vm1408, %v1337, %v1441
        %v1474 = vsel %vm1409, %v1342, %v1442
        %v1475 = vsel %vm1410, %v1345, %v1443
        %v1476 = vsel %vm1411, %v1350, %v1444
        %v1477 = vsel %vm1412, %v1353, %v1445
        %v1478 = vsel %vm1413, %v1358, %v1446
        %v1479 = vsel %vm1414, %v1361, %v1447
        %v1480 = vsel %vm1415, %v1366, %v1448
        %v1481 = vsel %vm1416, %v1369, %v1449
        %v1482 = vsel %vm1417, %v1374, %v1450
        %v1483 = vsel %vm1418, %v1377, %v1451
        %v1484 = vsel %vm1419, %v1382, %v1452
        %v1485 = vsel %vm1420, %v1385, %v1453
        %v1486 = vpack.c.bf16 %v1455, %v1454
        %v1487 = vpack.c.bf16 %v1457, %v1456
        %v1488 = vpack.c.bf16 %v1459, %v1458
        %v1489 = vpack.c.bf16 %v1461, %v1460
        %v1490 = vpack.c.bf16 %v1463, %v1462
        %v1491 = vpack.c.bf16 %v1465, %v1464
        %v1492 = vpack.c.bf16 %v1467, %v1466
        %v1493 = vpack.c.bf16 %v1469, %v1468
        %v1494 = vpack.c.bf16 %v1471, %v1470
        %v1495 = vpack.c.bf16 %v1473, %v1472
        %v1496 = vpack.c.bf16 %v1475, %v1474
        %v1497 = vpack.c.bf16 %v1477, %v1476
        %v1498 = vpack.c.bf16 %v1479, %v1478
        %v1499 = vpack.c.bf16 %v1481, %v1480
        %v1500 = vpack.c.bf16 %v1483, %v1482
        %v1501 = vpack.c.bf16 %v1485, %v1484
        %v1502 = vld [vmem:[%s6] sm:$0xf]
        %v1503 = vld [vmem:[%s6 + $0x4] sm:$0xf]
        %v1504 = vld [vmem:[%s6 + $0x8] sm:$0xf]
        %v1505 = vld [vmem:[%s6 + $0xc] sm:$0xf]
        %v1506 = vld [vmem:[%s6 + $0x10] sm:$0xf]
        %v1507 = vld [vmem:[%s6 + $0x14] sm:$0xf]
        %v1508 = vld [vmem:[%s6 + $0x18] sm:$0xf]
        %v1509 = vld [vmem:[%s6 + $0x1c] sm:$0xf]
        %v1510 = vld [vmem:[%s6 + $0x20] sm:$0xf]
        %v1511 = vld [vmem:[%s6 + $0x24] sm:$0xf]
        %v1512 = vld [vmem:[%s6 + $0x28] sm:$0xf]
        %v1513 = vld [vmem:[%s6 + $0x2c] sm:$0xf]
        %v1514 = vld [vmem:[%s6 + $0x30] sm:$0xf]
        %v1515 = vld [vmem:[%s6 + $0x34] sm:$0xf]
        %v1516 = vld [vmem:[%s6 + $0x38] sm:$0xf]
        %v1517 = vld [vmem:[%s6 + $0x3c] sm:$0xf]
        %s1518 = scalar_lea.vmem %s649, 128 [#allocation4]
        %v1519 = vld [vmem:[%s1518] sm:$0xf]
        %v1520 = vld [vmem:[%s1518 + $0x4] sm:$0xf]
        %v1521 = vld [vmem:[%s1518 + $0x8] sm:$0xf]
        %v1522 = vld [vmem:[%s1518 + $0xc] sm:$0xf]
        %v1523 = vld [vmem:[%s1518 + $0x10] sm:$0xf]
        %v1524 = vld [vmem:[%s1518 + $0x14] sm:$0xf]
        %v1525 = vld [vmem:[%s1518 + $0x18] sm:$0xf]
        %v1526 = vld [vmem:[%s1518 + $0x1c] sm:$0xf]
        %v1527 = vld [vmem:[%s1518 + $0x20] sm:$0xf]
        %v1528 = vld [vmem:[%s1518 + $0x24] sm:$0xf]
        %v1529 = vld [vmem:[%s1518 + $0x28] sm:$0xf]
        %v1530 = vld [vmem:[%s1518 + $0x2c] sm:$0xf]
        %v1531 = vld [vmem:[%s1518 + $0x30] sm:$0xf]
        %v1532 = vld [vmem:[%s1518 + $0x34] sm:$0xf]
        %v1533 = vld [vmem:[%s1518 + $0x38] sm:$0xf]
        %v1534 = vld [vmem:[%s1518 + $0x3c] sm:$0xf]
        %v1535 = vld [vmem:[%s1518 + $0x40] sm:$0xf]
        %v1536 = vld [vmem:[%s1518 + $0x44] sm:$0xf]
        %v1537 = vld [vmem:[%s1518 + $0x48] sm:$0xf]
        %v1538 = vld [vmem:[%s1518 + $0x4c] sm:$0xf]
        %v1539 = vld [vmem:[%s1518 + $0x50] sm:$0xf]
        %v1540 = vld [vmem:[%s1518 + $0x54] sm:$0xf]
        %v1541 = vld [vmem:[%s1518 + $0x58] sm:$0xf]
        %v1542 = vld [vmem:[%s1518 + $0x5c] sm:$0xf]
        %v1543 = vld [vmem:[%s1518 + $0x60] sm:$0xf]
        %v1544 = vld [vmem:[%s1518 + $0x64] sm:$0xf]
        %v1545 = vld [vmem:[%s1518 + $0x68] sm:$0xf]
        %v1546 = vld [vmem:[%s1518 + $0x6c] sm:$0xf]
        %v1547 = vld [vmem:[%s1518 + $0x70] sm:$0xf]
        %v1548 = vld [vmem:[%s1518 + $0x74] sm:$0xf]
        %v1549 = vld [vmem:[%s1518 + $0x78] sm:$0xf]
        %v1550 = vld [vmem:[%s1518 + $0x7c] sm:$0xf]
        %s1551 = scalar_lea.vmem %s2, 24
        %v1552 = vld [vmem:[%s1551] sm:$0xf]
        %v1553 = vld [vmem:[%s1551 + $0x4] sm:$0xf]
        %v1554 = vld [vmem:[%s1551 + $0x8] sm:$0xf]
        %v1555 = vld [vmem:[%s1551 + $0xc] sm:$0xf]
        %v1556 = vld [vmem:[%s1551 + $0x10] sm:$0xf]
        %v1557 = vld [vmem:[%s1551 + $0x14] sm:$0xf]
        %s1558 = scalar_lea.vmem %s3, 1
        %v1559 = vld [vmem:[%s1558] sm:$0x1]
        %v1561 = vlaneseq
        %v1562 = vshrl.u32 %v1561, 7
        %v1563 = vsub.s32 0, %v1562
        %v1564 = vrot.slane %v1559, %v1563
        %v1598 = vunpack.c.l.b16 %v1519
        %v1599 = vunpack.c.l.b16 %v1520
        %v1600 = vunpack.c.l.b16 %v1521
        %v1601 = vunpack.c.l.b16 %v1522
        %v1602 = vunpack.c.l.b16 %v1523
        %v1603 = vunpack.c.l.b16 %v1524
        %v1604 = vunpack.c.l.b16 %v1525
        %v1605 = vunpack.c.l.b16 %v1526
        %v1606 = vunpack.c.l.b16 %v1527
        %v1607 = vunpack.c.l.b16 %v1528
        %v1608 = vunpack.c.l.b16 %v1529
        %v1609 = vunpack.c.l.b16 %v1530
        %v1610 = vunpack.c.l.b16 %v1531
        %v1611 = vunpack.c.l.b16 %v1532
        %v1612 = vunpack.c.l.b16 %v1533
        %v1613 = vunpack.c.l.b16 %v1534
        %v1614 = vunpack.c.l.b16 %v1535
        %v1615 = vunpack.c.l.b16 %v1536
        %v1616 = vunpack.c.l.b16 %v1537
        %v1617 = vunpack.c.l.b16 %v1538
        %v1618 = vunpack.c.l.b16 %v1539
        %v1619 = vunpack.c.l.b16 %v1540
        %v1620 = vunpack.c.l.b16 %v1541
        %v1621 = vunpack.c.l.b16 %v1542
        %v1622 = vunpack.c.l.b16 %v1543
        %v1623 = vunpack.c.l.b16 %v1544
        %v1624 = vunpack.c.l.b16 %v1545
        %v1625 = vunpack.c.l.b16 %v1546
        %v1626 = vunpack.c.l.b16 %v1547
        %v1627 = vunpack.c.l.b16 %v1548
        %v1628 = vunpack.c.l.b16 %v1549
        %v1629 = vunpack.c.l.b16 %v1550
        %v1630 = vpack.c.b16 %v1599, %v1598
        %v1631 = vpack.c.b16 %v1601, %v1600
        %v1632 = vpack.c.b16 %v1603, %v1602
        %v1633 = vpack.c.b16 %v1605, %v1604
        %v1634 = vpack.c.b16 %v1607, %v1606
        %v1635 = vpack.c.b16 %v1609, %v1608
        %v1636 = vpack.c.b16 %v1611, %v1610
        %v1637 = vpack.c.b16 %v1613, %v1612
        %v1638 = vpack.c.b16 %v1615, %v1614
        %v1639 = vpack.c.b16 %v1617, %v1616
        %v1640 = vpack.c.b16 %v1619, %v1618
        %v1641 = vpack.c.b16 %v1621, %v1620
        %v1642 = vpack.c.b16 %v1623, %v1622
        %v1643 = vpack.c.b16 %v1625, %v1624
        %v1644 = vpack.c.b16 %v1627, %v1626
        %v1645 = vpack.c.b16 %v1629, %v1628
        %v1652 = vunpack.c.l.b16 %v1552
        %v1653 = vunpack.c.l.b16 %v1553
        %v1654 = vunpack.c.l.b16 %v1554
        %v1655 = vunpack.c.l.b16 %v1555
        %v1656 = vunpack.c.l.b16 %v1556
        %v1657 = vunpack.c.l.b16 %v1557
        %v1658 = vpack.c.b16 %v1653, %v1652
        %v1659 = vpack.c.b16 %v1655, %v1654
        %v1660 = vpack.c.b16 %v1657, %v1656
        %v1665 = vsel %vm832, %v1630, 0
        %v1668 = vsel %vm832, %v1631, 0
        %v1671 = vsel %vm832, %v1632, 0
        %v1674 = vsel %vm832, %v1633, 0
        %v1677 = vsel %vm832, %v1634, 0
        %v1680 = vsel %vm832, %v1635, 0
        %v1683 = vsel %vm832, %v1636, 0
        %v1686 = vsel %vm832, %v1637, 0
        %v1689 = vsel %vm832, %v1638, 0
        %v1692 = vsel %vm832, %v1639, 0
        %v1695 = vsel %vm832, %v1640, 0
        %v1698 = vsel %vm832, %v1641, 0
        %v1701 = vsel %vm832, %v1642, 0
        %v1704 = vsel %vm832, %v1643, 0
        %v1707 = vsel %vm832, %v1644, 0
        %v1710 = vsel %vm832, %v1645, 0
        %1712 = vmatprep.subr.bf16.mxu0 0
        %1713 = vmatpush1.bf16.msra.mxu0 %v1658
        %1714 = vmatprep.subr.bf16.mxu0 0
        %1715 = vmatpush1.bf16.msra.mxu0 %v1659
        %1716 = vmatprep.subr.bf16.mxu0 0
        %1717 = vmatpush1.bf16.msra.mxu0 %v1660
        %1718 = vmatprep.subr.bf16.mxu0 0
        %1719 = vmatpush1.bf16.msra.mxu0 0
        %1720 = vmatprep.subr.bf16.mxu0 0
        %1721 = vmatpush1.bf16.msra.mxu0 0
        %1722 = vmatprep.subr.bf16.mxu0 0
        %1723 = vmatpush1.bf16.msra.mxu0 0
        %1724 = vmatprep.subr.bf16.mxu0 0
        %1725 = vmatpush1.bf16.msra.mxu0 0
        %1726 = vmatprep.subr.bf16.mxu0 0
        %1727 = vmatpush1.bf16.msra.mxu0 0
        %1728 = vmatprep.subr.bf16.mxu0 0
        %1729 = vmatpush1.bf16.msra.mxu0 0
        %1730 = vmatprep.subr.bf16.mxu0 0
        %1731 = vmatpush1.bf16.msra.mxu0 0
        %1732 = vmatprep.subr.bf16.mxu0 0
        %1733 = vmatpush1.bf16.msra.mxu0 0
        %1734 = vmatprep.subr.bf16.mxu0 0
        %1735 = vmatpush1.bf16.msra.mxu0 0
        %1736 = vmatprep.subr.bf16.mxu0 0
        %1737 = vmatpush1.bf16.msra.mxu0 0
        %1738 = vmatprep.subr.bf16.mxu0 0
        %1739 = vmatpush1.bf16.msra.mxu0 0
        %1740 = vmatprep.subr.bf16.mxu0 0
        %1741 = vmatpush1.bf16.msra.mxu0 0
        %1742 = vmatprep.subr.bf16.mxu0 0
        %1743 = vmatpush1.bf16.msra.mxu0 0
        %1744 = vmatprep.mubr.bf16.mxu0 0
        %1745 = vmatmul.mubr.bf16.gmra.mrb[0].mxu0 %v1665
        %v1746 = vpop.f32.mrb[0].mxu0
        %v1747 = vadd.f32 %v1564, %v1746
        %v1748 = vpop.f32.mrb[0].mxu0
        %v1749 = vpop.f32.mrb[0].mxu0
        %v1750 = vadd.f32 %v1564, %v1749
        %v1751 = vpop.f32.mrb[0].mxu0
        %1752 = vmatprep.mubr.bf16.mxu0 0
        %1753 = vmatmul.mubr.bf16.gmra.mrb[0].mxu0 %v1668
        %v1754 = vpop.f32.mrb[0].mxu0
        %v1755 = vadd.f32 %v1564, %v1754
        %v1756 = vpop.f32.mrb[0].mxu0
        %v1757 = vpop.f32.mrb[0].mxu0
        %v1758 = vadd.f32 %v1564, %v1757
        %v1759 = vpop.f32.mrb[0].mxu0
        %1760 = vmatprep.mubr.bf16.mxu0 0
        %1761 = vmatmul.mubr.bf16.gmra.mrb[0].mxu0 %v1671
        %v1762 = vpop.f32.mrb[0].mxu0
        %v1763 = vadd.f32 %v1564, %v1762
        %v1764 = vpop.f32.mrb[0].mxu0
        %v1765 = vpop.f32.mrb[0].mxu0
        %v1766 = vadd.f32 %v1564, %v1765
        %v1767 = vpop.f32.mrb[0].mxu0
        %1768 = vmatprep.mubr.bf16.mxu0 0
        %1769 = vmatmul.mubr.bf16.gmra.mrb[0].mxu0 %v1674
        %v1770 = vpop.f32.mrb[0].mxu0
        %v1771 = vadd.f32 %v1564, %v1770
        %v1772 = vpop.f32.mrb[0].mxu0
        %v1773 = vpop.f32.mrb[0].mxu0
        %v1774 = vadd.f32 %v1564, %v1773
        %v1775 = vpop.f32.mrb[0].mxu0
        %1776 = vmatprep.mubr.bf16.mxu0 0
        %1777 = vmatmul.mubr.bf16.gmra.mrb[0].mxu0 %v1677
        %v1778 = vpop.f32.mrb[0].mxu0
        %v1779 = vadd.f32 %v1564, %v1778
        %v1780 = vpop.f32.mrb[0].mxu0
        %v1781 = vpop.f32.mrb[0].mxu0
        %v1782 = vadd.f32 %v1564, %v1781
        %v1783 = vpop.f32.mrb[0].mxu0
        %1784 = vmatprep.mubr.bf16.mxu0 0
        %1785 = vmatmul.mubr.bf16.gmra.mrb[0].mxu0 %v1680
        %v1786 = vpop.f32.mrb[0].mxu0
        %v1787 = vadd.f32 %v1564, %v1786
        %v1788 = vpop.f32.mrb[0].mxu0
        %v1789 = vpop.f32.mrb[0].mxu0
        %v1790 = vadd.f32 %v1564, %v1789
        %v1791 = vpop.f32.mrb[0].mxu0
        %1792 = vmatprep.mubr.bf16.mxu0 0
        %1793 = vmatmul.mubr.bf16.gmra.mrb[0].mxu0 %v1683
        %v1794 = vpop.f32.mrb[0].mxu0
        %v1795 = vadd.f32 %v1564, %v1794
        %v1796 = vpop.f32.mrb[0].mxu0
        %v1797 = vpop.f32.mrb[0].mxu0
        %v1798 = vadd.f32 %v1564, %v1797
        %v1799 = vpop.f32.mrb[0].mxu0
        %1800 = vmatprep.mubr.bf16.mxu0 0
        %1801 = vmatmul.mubr.bf16.gmra.mrb[0].mxu0 %v1686
        %v1802 = vpop.f32.mrb[0].mxu0
        %v1803 = vadd.f32 %v1564, %v1802
        %v1804 = vpop.f32.mrb[0].mxu0
        %v1805 = vpop.f32.mrb[0].mxu0
        %v1806 = vadd.f32 %v1564, %v1805
        %v1807 = vpop.f32.mrb[0].mxu0
        %1808 = vmatprep.mubr.bf16.mxu0 0
        %1809 = vmatmul.mubr.bf16.gmra.mrb[0].mxu0 %v1689
        %v1810 = vpop.f32.mrb[0].mxu0
        %v1811 = vadd.f32 %v1564, %v1810
        %v1812 = vpop.f32.mrb[0].mxu0
        %v1813 = vpop.f32.mrb[0].mxu0
        %v1814 = vadd.f32 %v1564, %v1813
        %v1815 = vpop.f32.mrb[0].mxu0
        %1816 = vmatprep.mubr.bf16.mxu0 0
        %1817 = vmatmul.mubr.bf16.gmra.mrb[0].mxu0 %v1692
        %v1818 = vpop.f32.mrb[0].mxu0
        %v1819 = vadd.f32 %v1564, %v1818
        %v1820 = vpop.f32.mrb[0].mxu0
        %v1821 = vpop.f32.mrb[0].mxu0
        %v1822 = vadd.f32 %v1564, %v1821
        %v1823 = vpop.f32.mrb[0].mxu0
        %1824 = vmatprep.mubr.bf16.mxu0 0
        %1825 = vmatmul.mubr.bf16.gmra.mrb[0].mxu0 %v1695
        %v1826 = vpop.f32.mrb[0].mxu0
        %v1827 = vadd.f32 %v1564, %v1826
        %v1828 = vpop.f32.mrb[0].mxu0
        %v1829 = vpop.f32.mrb[0].mxu0
        %v1830 = vadd.f32 %v1564, %v1829
        %v1831 = vpop.f32.mrb[0].mxu0
        %1832 = vmatprep.mubr.bf16.mxu0 0
        %1833 = vmatmul.mubr.bf16.gmra.mrb[0].mxu0 %v1698
        %v1834 = vpop.f32.mrb[0].mxu0
        %v1835 = vadd.f32 %v1564, %v1834
        %v1836 = vpop.f32.mrb[0].mxu0
        %v1837 = vpop.f32.mrb[0].mxu0
        %v1838 = vadd.f32 %v1564, %v1837
        %v1839 = vpop.f32.mrb[0].mxu0
        %1840 = vmatprep.mubr.bf16.mxu0 0
        %1841 = vmatmul.mubr.bf16.gmra.mrb[0].mxu0 %v1701
        %v1842 = vpop.f32.mrb[0].mxu0
        %v1843 = vadd.f32 %v1564, %v1842
        %v1844 = vpop.f32.mrb[0].mxu0
        %v1845 = vpop.f32.mrb[0].mxu0
        %v1846 = vadd.f32 %v1564, %v1845
        %v1847 = vpop.f32.mrb[0].mxu0
        %1848 = vmatprep.mubr.bf16.mxu0 0
        %1849 = vmatmul.mubr.bf16.gmra.mrb[0].mxu0 %v1704
        %v1850 = vpop.f32.mrb[0].mxu0
        %v1851 = vadd.f32 %v1564, %v1850
        %v1852 = vpop.f32.mrb[0].mxu0
        %v1853 = vpop.f32.mrb[0].mxu0
        %v1854 = vadd.f32 %v1564, %v1853
        %v1855 = vpop.f32.mrb[0].mxu0
        %1856 = vmatprep.mubr.bf16.mxu0 0
        %1857 = vmatmul.mubr.bf16.gmra.mrb[0].mxu0 %v1707
        %v1858 = vpop.f32.mrb[0].mxu0
        %v1859 = vadd.f32 %v1564, %v1858
        %v1860 = vpop.f32.mrb[0].mxu0
        %v1861 = vpop.f32.mrb[0].mxu0
        %v1862 = vadd.f32 %v1564, %v1861
        %v1863 = vpop.f32.mrb[0].mxu0
        %1864 = vmatprep.mubr.bf16.mxu0 0
        %1865 = vmatmul.mubr.bf16.gmra.mrb[0].mxu0 %v1710
        %v1866 = vpop.f32.mrb[0].mxu0
        %v1867 = vadd.f32 %v1564, %v1866
        %v1868 = vpop.f32.mrb[0].mxu0
        %v1869 = vpop.f32.mrb[0].mxu0
        %v1870 = vadd.f32 %v1564, %v1869
        %v1871 = vpop.f32.mrb[0].mxu0
        %1872 = vdwg.mxu0
        %s1873 = sld [smem:[#allocation3 + $0x1]]
        %vm1874 = vcmp.ge.f32.partialorder %v1747, 0.0
        %vm1875 = vcmp.ge.f32.partialorder %v1750, 0.0
        %vm1876 = vcmp.ge.f32.partialorder %v1755, 0.0
        %vm1877 = vcmp.ge.f32.partialorder %v1758, 0.0
        %vm1878 = vcmp.ge.f32.partialorder %v1763, 0.0
        %vm1879 = vcmp.ge.f32.partialorder %v1766, 0.0
        %vm1880 = vcmp.ge.f32.partialorder %v1771, 0.0
        %vm1881 = vcmp.ge.f32.partialorder %v1774, 0.0
        %vm1882 = vcmp.ge.f32.partialorder %v1779, 0.0
        %vm1883 = vcmp.ge.f32.partialorder %v1782, 0.0
        %vm1884 = vcmp.ge.f32.partialorder %v1787, 0.0
        %vm1885 = vcmp.ge.f32.partialorder %v1790, 0.0
        %vm1886 = vcmp.ge.f32.partialorder %v1795, 0.0
        %vm1887 = vcmp.ge.f32.partialorder %v1798, 0.0
        %vm1888 = vcmp.ge.f32.partialorder %v1803, 0.0
        %vm1889 = vcmp.ge.f32.partialorder %v1806, 0.0
        %vm1890 = vcmp.ge.f32.partialorder %v1811, 0.0
        %vm1891 = vcmp.ge.f32.partialorder %v1814, 0.0
        %vm1892 = vcmp.ge.f32.partialorder %v1819, 0.0
        %vm1893 = vcmp.ge.f32.partialorder %v1822, 0.0
        %vm1894 = vcmp.ge.f32.partialorder %v1827, 0.0
        %vm1895 = vcmp.ge.f32.partialorder %v1830, 0.0
        %vm1896 = vcmp.ge.f32.partialorder %v1835, 0.0
        %vm1897 = vcmp.ge.f32.partialorder %v1838, 0.0
        %vm1898 = vcmp.ge.f32.partialorder %v1843, 0.0
        %vm1899 = vcmp.ge.f32.partialorder %v1846, 0.0
        %vm1900 = vcmp.ge.f32.partialorder %v1851, 0.0
        %vm1901 = vcmp.ge.f32.partialorder %v1854, 0.0
        %vm1902 = vcmp.ge.f32.partialorder %v1859, 0.0
        %vm1903 = vcmp.ge.f32.partialorder %v1862, 0.0
        %vm1904 = vcmp.ge.f32.partialorder %v1867, 0.0
        %vm1905 = vcmp.ge.f32.partialorder %v1870, 0.0
        %v1906 = vstv %s1873
        %v1907 = vmul.f32 %v1906, %v1747
        %v1908 = vmul.f32 %v1906, %v1750
        %v1909 = vmul.f32 %v1906, %v1755
        %v1910 = vmul.f32 %v1906, %v1758
        %v1911 = vmul.f32 %v1906, %v1763
        %v1912 = vmul.f32 %v1906, %v1766
        %v1913 = vmul.f32 %v1906, %v1771
        %v1914 = vmul.f32 %v1906, %v1774
        %v1915 = vmul.f32 %v1906, %v1779
        %v1916 = vmul.f32 %v1906, %v1782
        %v1917 = vmul.f32 %v1906, %v1787
        %v1918 = vmul.f32 %v1906, %v1790
        %v1919 = vmul.f32 %v1906, %v1795
        %v1920 = vmul.f32 %v1906, %v1798
        %v1921 = vmul.f32 %v1906, %v1803
        %v1922 = vmul.f32 %v1906, %v1806
        %v1923 = vmul.f32 %v1906, %v1811
        %v1924 = vmul.f32 %v1906, %v1814
        %v1925 = vmul.f32 %v1906, %v1819
        %v1926 = vmul.f32 %v1906, %v1822
        %v1927 = vmul.f32 %v1906, %v1827
        %v1928 = vmul.f32 %v1906, %v1830
        %v1929 = vmul.f32 %v1906, %v1835
        %v1930 = vmul.f32 %v1906, %v1838
        %v1931 = vmul.f32 %v1906, %v1843
        %v1932 = vmul.f32 %v1906, %v1846
        %v1933 = vmul.f32 %v1906, %v1851
        %v1934 = vmul.f32 %v1906, %v1854
        %v1935 = vmul.f32 %v1906, %v1859
        %v1936 = vmul.f32 %v1906, %v1862
        %v1937 = vmul.f32 %v1906, %v1867
        %v1938 = vmul.f32 %v1906, %v1870
        %v1939 = vsel %vm1874, %v1747, %v1907
        %v1940 = vsel %vm1875, %v1750, %v1908
        %v1941 = vsel %vm1876, %v1755, %v1909
        %v1942 = vsel %vm1877, %v1758, %v1910
        %v1943 = vsel %vm1878, %v1763, %v1911
        %v1944 = vsel %vm1879, %v1766, %v1912
        %v1945 = vsel %vm1880, %v1771, %v1913
        %v1946 = vsel %vm1881, %v1774, %v1914
        %v1947 = vsel %vm1882, %v1779, %v1915
        %v1948 = vsel %vm1883, %v1782, %v1916
        %v1949 = vsel %vm1884, %v1787, %v1917
        %v1950 = vsel %vm1885, %v1790, %v1918
        %v1951 = vsel %vm1886, %v1795, %v1919
        %v1952 = vsel %vm1887, %v1798, %v1920
        %v1953 = vsel %vm1888, %v1803, %v1921
        %v1954 = vsel %vm1889, %v1806, %v1922
        %v1955 = vsel %vm1890, %v1811, %v1923
        %v1956 = vsel %vm1891, %v1814, %v1924
        %v1957 = vsel %vm1892, %v1819, %v1925
        %v1958 = vsel %vm1893, %v1822, %v1926
        %v1959 = vsel %vm1894, %v1827, %v1927
        %v1960 = vsel %vm1895, %v1830, %v1928
        %v1961 = vsel %vm1896, %v1835, %v1929
        %v1962 = vsel %vm1897, %v1838, %v1930
        %v1963 = vsel %vm1898, %v1843, %v1931
        %v1964 = vsel %vm1899, %v1846, %v1932
        %v1965 = vsel %vm1900, %v1851, %v1933
        %v1966 = vsel %vm1901, %v1854, %v1934
        %v1967 = vsel %vm1902, %v1859, %v1935
        %v1968 = vsel %vm1903, %v1862, %v1936
        %v1969 = vsel %vm1904, %v1867, %v1937
        %v1970 = vsel %vm1905, %v1870, %v1938
        %v1971 = vpack.c.bf16 %v1940, %v1939
        %v1972 = vpack.c.bf16 %v1942, %v1941
        %v1973 = vpack.c.bf16 %v1944, %v1943
        %v1974 = vpack.c.bf16 %v1946, %v1945
        %v1975 = vpack.c.bf16 %v1948, %v1947
        %v1976 = vpack.c.bf16 %v1950, %v1949
        %v1977 = vpack.c.bf16 %v1952, %v1951
        %v1978 = vpack.c.bf16 %v1954, %v1953
        %v1979 = vpack.c.bf16 %v1956, %v1955
        %v1980 = vpack.c.bf16 %v1958, %v1957
        %v1981 = vpack.c.bf16 %v1960, %v1959
        %v1982 = vpack.c.bf16 %v1962, %v1961
        %v1983 = vpack.c.bf16 %v1964, %v1963
        %v1984 = vpack.c.bf16 %v1966, %v1965
        %v1985 = vpack.c.bf16 %v1968, %v1967
        %v1986 = vpack.c.bf16 %v1970, %v1969
        %s1987 = scalar_lea.vmem %s4, 64
        %v1988 = vld [vmem:[%s1987] sm:$0xf]
        %v1989 = vld [vmem:[%s1987 + $0x4] sm:$0xf]
        %v1990 = vld [vmem:[%s1987 + $0x8] sm:$0xf]
        %v1991 = vld [vmem:[%s1987 + $0xc] sm:$0xf]
        %v1992 = vld [vmem:[%s1987 + $0x10] sm:$0xf]
        %v1993 = vld [vmem:[%s1987 + $0x14] sm:$0xf]
        %v1994 = vld [vmem:[%s1987 + $0x18] sm:$0xf]
        %v1995 = vld [vmem:[%s1987 + $0x1c] sm:$0xf]
        %v1996 = vld [vmem:[%s1987 + $0x20] sm:$0xf]
        %v1997 = vld [vmem:[%s1987 + $0x24] sm:$0xf]
        %v1998 = vld [vmem:[%s1987 + $0x28] sm:$0xf]
        %v1999 = vld [vmem:[%s1987 + $0x2c] sm:$0xf]
        %v2000 = vld [vmem:[%s1987 + $0x30] sm:$0xf]
        %v2001 = vld [vmem:[%s1987 + $0x34] sm:$0xf]
        %v2002 = vld [vmem:[%s1987 + $0x38] sm:$0xf]
        %v2003 = vld [vmem:[%s1987 + $0x3c] sm:$0xf]
        %s2004 = scalar_lea.vmem %s5, 1
        %v2005 = vld [vmem:[%s2004] sm:$0x1]
        %v2007 = vlaneseq
        %v2008 = vshrl.u32 %v2007, 7
        %v2009 = vsub.s32 0, %v2008
        %v2010 = vrot.slane %v2005, %v2009
        %v2028 = vunpack.c.l.b16 %v1988
        %v2029 = vunpack.c.l.b16 %v1989
        %v2030 = vunpack.c.l.b16 %v1990
        %v2031 = vunpack.c.l.b16 %v1991
        %v2032 = vunpack.c.l.b16 %v1992
        %v2033 = vunpack.c.l.b16 %v1993
        %v2034 = vunpack.c.l.b16 %v1994
        %v2035 = vunpack.c.l.b16 %v1995
        %v2036 = vunpack.c.l.b16 %v1996
        %v2037 = vunpack.c.l.b16 %v1997
        %v2038 = vunpack.c.l.b16 %v1998
        %v2039 = vunpack.c.l.b16 %v1999
        %v2040 = vunpack.c.l.b16 %v2000
        %v2041 = vunpack.c.l.b16 %v2001
        %v2042 = vunpack.c.l.b16 %v2002
        %v2043 = vunpack.c.l.b16 %v2003
        %v2044 = vpack.c.b16 %v2029, %v2028
        %v2045 = vpack.c.b16 %v2031, %v2030
        %v2046 = vpack.c.b16 %v2033, %v2032
        %v2047 = vpack.c.b16 %v2035, %v2034
        %v2048 = vpack.c.b16 %v2037, %v2036
        %v2049 = vpack.c.b16 %v2039, %v2038
        %v2050 = vpack.c.b16 %v2041, %v2040
        %v2051 = vpack.c.b16 %v2043, %v2042
        %2060 = vmatprep.subr.bf16.mxu0 0
        %2061 = vmatpush1.bf16.msra.mxu0 %v2044
        %2062 = vmatprep.subr.bf16.mxu0 0
        %2063 = vmatpush1.bf16.msra.mxu0 %v2045
        %2064 = vmatprep.subr.bf16.mxu0 0
        %2065 = vmatpush1.bf16.msra.mxu0 %v2046
        %2066 = vmatprep.subr.bf16.mxu0 0
        %2067 = vmatpush1.bf16.msra.mxu0 %v2047
        %2068 = vmatprep.subr.bf16.mxu0 0
        %2069 = vmatpush1.bf16.msra.mxu0 %v2048
        %2070 = vmatprep.subr.bf16.mxu0 0
        %2071 = vmatpush1.bf16.msra.mxu0 %v2049
        %2072 = vmatprep.subr.bf16.mxu0 0
        %2073 = vmatpush1.bf16.msra.mxu0 %v2050
        %2074 = vmatprep.subr.bf16.mxu0 0
        %2075 = vmatpush1.bf16.msra.mxu0 %v2051
        %2076 = vmatprep.subr.bf16.mxu0 0
        %2077 = vmatpush1.bf16.msra.mxu0 0
        %2078 = vmatprep.subr.bf16.mxu0 0
        %2079 = vmatpush1.bf16.msra.mxu0 0
        %2080 = vmatprep.subr.bf16.mxu0 0
        %2081 = vmatpush1.bf16.msra.mxu0 0
        %2082 = vmatprep.subr.bf16.mxu0 0
        %2083 = vmatpush1.bf16.msra.mxu0 0
        %2084 = vmatprep.subr.bf16.mxu0 0
        %2085 = vmatpush1.bf16.msra.mxu0 0
        %2086 = vmatprep.subr.bf16.mxu0 0
        %2087 = vmatpush1.bf16.msra.mxu0 0
        %2088 = vmatprep.subr.bf16.mxu0 0
        %2089 = vmatpush1.bf16.msra.mxu0 0
        %2090 = vmatprep.subr.bf16.mxu0 0
        %2091 = vmatpush1.bf16.msra.mxu0 0
        %2092 = vmatprep.mubr.bf16.mxu0 0
        %2093 = vmatmul.mubr.bf16.gmra.mrb[0].mxu0 %v1971
        %v2094 = vpop.f32.mrb[0].mxu0
        %v2095 = vadd.f32 %v2010, %v2094
        %v2096 = vpop.f32.mrb[0].mxu0
        %v2097 = vpop.f32.mrb[0].mxu0
        %v2098 = vadd.f32 %v2010, %v2097
        %v2099 = vpop.f32.mrb[0].mxu0
        %2100 = vmatprep.mubr.bf16.mxu0 0
        %2101 = vmatmul.mubr.bf16.gmra.mrb[0].mxu0 %v1972
        %v2102 = vpop.f32.mrb[0].mxu0
        %v2103 = vadd.f32 %v2010, %v2102
        %v2104 = vpop.f32.mrb[0].mxu0
        %v2105 = vpop.f32.mrb[0].mxu0
        %v2106 = vadd.f32 %v2010, %v2105
        %v2107 = vpop.f32.mrb[0].mxu0
        %2108 = vmatprep.mubr.bf16.mxu0 0
        %2109 = vmatmul.mubr.bf16.gmra.mrb[0].mxu0 %v1973
        %v2110 = vpop.f32.mrb[0].mxu0
        %v2111 = vadd.f32 %v2010, %v2110
        %v2112 = vpop.f32.mrb[0].mxu0
        %v2113 = vpop.f32.mrb[0].mxu0
        %v2114 = vadd.f32 %v2010, %v2113
        %v2115 = vpop.f32.mrb[0].mxu0
        %2116 = vmatprep.mubr.bf16.mxu0 0
        %2117 = vmatmul.mubr.bf16.gmra.mrb[0].mxu0 %v1974
        %v2118 = vpop.f32.mrb[0].mxu0
        %v2119 = vadd.f32 %v2010, %v2118
        %v2120 = vpop.f32.mrb[0].mxu0
        %v2121 = vpop.f32.mrb[0].mxu0
        %v2122 = vadd.f32 %v2010, %v2121
        %v2123 = vpop.f32.mrb[0].mxu0
        %2124 = vmatprep.mubr.bf16.mxu0 0
        %2125 = vmatmul.mubr.bf16.gmra.mrb[0].mxu0 %v1975
        %v2126 = vpop.f32.mrb[0].mxu0
        %v2127 = vadd.f32 %v2010, %v2126
        %v2128 = vpop.f32.mrb[0].mxu0
        %v2129 = vpop.f32.mrb[0].mxu0
        %v2130 = vadd.f32 %v2010, %v2129
        %v2131 = vpop.f32.mrb[0].mxu0
        %2132 = vmatprep.mubr.bf16.mxu0 0
        %2133 = vmatmul.mubr.bf16.gmra.mrb[0].mxu0 %v1976
        %v2134 = vpop.f32.mrb[0].mxu0
        %v2135 = vadd.f32 %v2010, %v2134
        %v2136 = vpop.f32.mrb[0].mxu0
        %v2137 = vpop.f32.mrb[0].mxu0
        %v2138 = vadd.f32 %v2010, %v2137
        %v2139 = vpop.f32.mrb[0].mxu0
        %2140 = vmatprep.mubr.bf16.mxu0 0
        %2141 = vmatmul.mubr.bf16.gmra.mrb[0].mxu0 %v1977
        %v2142 = vpop.f32.mrb[0].mxu0
        %v2143 = vadd.f32 %v2010, %v2142
        %v2144 = vpop.f32.mrb[0].mxu0
        %v2145 = vpop.f32.mrb[0].mxu0
        %v2146 = vadd.f32 %v2010, %v2145
        %v2147 = vpop.f32.mrb[0].mxu0
        %2148 = vmatprep.mubr.bf16.mxu0 0
        %2149 = vmatmul.mubr.bf16.gmra.mrb[0].mxu0 %v1978
        %v2150 = vpop.f32.mrb[0].mxu0
        %v2151 = vadd.f32 %v2010, %v2150
        %v2152 = vpop.f32.mrb[0].mxu0
        %v2153 = vpop.f32.mrb[0].mxu0
        %v2154 = vadd.f32 %v2010, %v2153
        %v2155 = vpop.f32.mrb[0].mxu0
        %2156 = vmatprep.mubr.bf16.mxu0 0
        %2157 = vmatmul.mubr.bf16.gmra.mrb[0].mxu0 %v1979
        %v2158 = vpop.f32.mrb[0].mxu0
        %v2159 = vadd.f32 %v2010, %v2158
        %v2160 = vpop.f32.mrb[0].mxu0
        %v2161 = vpop.f32.mrb[0].mxu0
        %v2162 = vadd.f32 %v2010, %v2161
        %v2163 = vpop.f32.mrb[0].mxu0
        %2164 = vmatprep.mubr.bf16.mxu0 0
        %2165 = vmatmul.mubr.bf16.gmra.mrb[0].mxu0 %v1980
        %v2166 = vpop.f32.mrb[0].mxu0
        %v2167 = vadd.f32 %v2010, %v2166
        %v2168 = vpop.f32.mrb[0].mxu0
        %v2169 = vpop.f32.mrb[0].mxu0
        %v2170 = vadd.f32 %v2010, %v2169
        %v2171 = vpop.f32.mrb[0].mxu0
        %2172 = vmatprep.mubr.bf16.mxu0 0
        %2173 = vmatmul.mubr.bf16.gmra.mrb[0].mxu0 %v1981
        %v2174 = vpop.f32.mrb[0].mxu0
        %v2175 = vadd.f32 %v2010, %v2174
        %v2176 = vpop.f32.mrb[0].mxu0
        %v2177 = vpop.f32.mrb[0].mxu0
        %v2178 = vadd.f32 %v2010, %v2177
        %v2179 = vpop.f32.mrb[0].mxu0
        %2180 = vmatprep.mubr.bf16.mxu0 0
        %2181 = vmatmul.mubr.bf16.gmra.mrb[0].mxu0 %v1982
        %v2182 = vpop.f32.mrb[0].mxu0
        %v2183 = vadd.f32 %v2010, %v2182
        %v2184 = vpop.f32.mrb[0].mxu0
        %v2185 = vpop.f32.mrb[0].mxu0
        %v2186 = vadd.f32 %v2010, %v2185
        %v2187 = vpop.f32.mrb[0].mxu0
        %2188 = vmatprep.mubr.bf16.mxu0 0
        %2189 = vmatmul.mubr.bf16.gmra.mrb[0].mxu0 %v1983
        %v2190 = vpop.f32.mrb[0].mxu0
        %v2191 = vadd.f32 %v2010, %v2190
        %v2192 = vpop.f32.mrb[0].mxu0
        %v2193 = vpop.f32.mrb[0].mxu0
        %v2194 = vadd.f32 %v2010, %v2193
        %v2195 = vpop.f32.mrb[0].mxu0
        %2196 = vmatprep.mubr.bf16.mxu0 0
        %2197 = vmatmul.mubr.bf16.gmra.mrb[0].mxu0 %v1984
        %v2198 = vpop.f32.mrb[0].mxu0
        %v2199 = vadd.f32 %v2010, %v2198
        %v2200 = vpop.f32.mrb[0].mxu0
        %v2201 = vpop.f32.mrb[0].mxu0
        %v2202 = vadd.f32 %v2010, %v2201
        %v2203 = vpop.f32.mrb[0].mxu0
        %2204 = vmatprep.mubr.bf16.mxu0 0
        %2205 = vmatmul.mubr.bf16.gmra.mrb[0].mxu0 %v1985
        %v2206 = vpop.f32.mrb[0].mxu0
        %v2207 = vadd.f32 %v2010, %v2206
        %v2208 = vpop.f32.mrb[0].mxu0
        %v2209 = vpop.f32.mrb[0].mxu0
        %v2210 = vadd.f32 %v2010, %v2209
        %v2211 = vpop.f32.mrb[0].mxu0
        %2212 = vmatprep.mubr.bf16.mxu0 0
        %2213 = vmatmul.mubr.bf16.gmra.mrb[0].mxu0 %v1986
        %v2214 = vpop.f32.mrb[0].mxu0
        %v2215 = vadd.f32 %v2010, %v2214
        %v2216 = vpop.f32.mrb[0].mxu0
        %v2217 = vpop.f32.mrb[0].mxu0
        %v2218 = vadd.f32 %v2010, %v2217
        %v2219 = vpop.f32.mrb[0].mxu0
        %2220 = vdwg.mxu0
        %vm2221 = vcmp.ge.f32.partialorder %v2095, 0.0
        %vm2222 = vcmp.ge.f32.partialorder %v2098, 0.0
        %vm2223 = vcmp.ge.f32.partialorder %v2103, 0.0
        %vm2224 = vcmp.ge.f32.partialorder %v2106, 0.0
        %vm2225 = vcmp.ge.f32.partialorder %v2111, 0.0
        %vm2226 = vcmp.ge.f32.partialorder %v2114, 0.0
        %vm2227 = vcmp.ge.f32.partialorder %v2119, 0.0
        %vm2228 = vcmp.ge.f32.partialorder %v2122, 0.0
        %vm2229 = vcmp.ge.f32.partialorder %v2127, 0.0
        %vm2230 = vcmp.ge.f32.partialorder %v2130, 0.0
        %vm2231 = vcmp.ge.f32.partialorder %v2135, 0.0
        %vm2232 = vcmp.ge.f32.partialorder %v2138, 0.0
        %vm2233 = vcmp.ge.f32.partialorder %v2143, 0.0
        %vm2234 = vcmp.ge.f32.partialorder %v2146, 0.0
        %vm2235 = vcmp.ge.f32.partialorder %v2151, 0.0
        %vm2236 = vcmp.ge.f32.partialorder %v2154, 0.0
        %vm2237 = vcmp.ge.f32.partialorder %v2159, 0.0
        %vm2238 = vcmp.ge.f32.partialorder %v2162, 0.0
        %vm2239 = vcmp.ge.f32.partialorder %v2167, 0.0
        %vm2240 = vcmp.ge.f32.partialorder %v2170, 0.0
        %vm2241 = vcmp.ge.f32.partialorder %v2175, 0.0
        %vm2242 = vcmp.ge.f32.partialorder %v2178, 0.0
        %vm2243 = vcmp.ge.f32.partialorder %v2183, 0.0
        %vm2244 = vcmp.ge.f32.partialorder %v2186, 0.0
        %vm2245 = vcmp.ge.f32.partialorder %v2191, 0.0
        %vm2246 = vcmp.ge.f32.partialorder %v2194, 0.0
        %vm2247 = vcmp.ge.f32.partialorder %v2199, 0.0
        %vm2248 = vcmp.ge.f32.partialorder %v2202, 0.0
        %vm2249 = vcmp.ge.f32.partialorder %v2207, 0.0
        %vm2250 = vcmp.ge.f32.partialorder %v2210, 0.0
        %vm2251 = vcmp.ge.f32.partialorder %v2215, 0.0
        %vm2252 = vcmp.ge.f32.partialorder %v2218, 0.0
        %v2253 = vmul.f32 %v1421, %v2095
        %v2254 = vmul.f32 %v1421, %v2098
        %v2255 = vmul.f32 %v1421, %v2103
        %v2256 = vmul.f32 %v1421, %v2106
        %v2257 = vmul.f32 %v1421, %v2111
        %v2258 = vmul.f32 %v1421, %v2114
        %v2259 = vmul.f32 %v1421, %v2119
        %v2260 = vmul.f32 %v1421, %v2122
        %v2261 = vmul.f32 %v1421, %v2127
        %v2262 = vmul.f32 %v1421, %v2130
        %v2263 = vmul.f32 %v1421, %v2135
        %v2264 = vmul.f32 %v1421, %v2138
        %v2265 = vmul.f32 %v1421, %v2143
        %v2266 = vmul.f32 %v1421, %v2146
        %v2267 = vmul.f32 %v1421, %v2151
        %v2268 = vmul.f32 %v1421, %v2154
        %v2269 = vmul.f32 %v1421, %v2159
        %v2270 = vmul.f32 %v1421, %v2162
        %v2271 = vmul.f32 %v1421, %v2167
        %v2272 = vmul.f32 %v1421, %v2170
        %v2273 = vmul.f32 %v1421, %v2175
        %v2274 = vmul.f32 %v1421, %v2178
        %v2275 = vmul.f32 %v1421, %v2183
        %v2276 = vmul.f32 %v1421, %v2186
        %v2277 = vmul.f32 %v1421, %v2191
        %v2278 = vmul.f32 %v1421, %v2194
        %v2279 = vmul.f32 %v1421, %v2199
        %v2280 = vmul.f32 %v1421, %v2202
        %v2281 = vmul.f32 %v1421, %v2207
        %v2282 = vmul.f32 %v1421, %v2210
        %v2283 = vmul.f32 %v1421, %v2215
        %v2284 = vmul.f32 %v1421, %v2218
        %v2285 = vsel %vm2221, %v2095, %v2253
        %v2286 = vsel %vm2222, %v2098, %v2254
        %v2287 = vsel %vm2223, %v2103, %v2255
        %v2288 = vsel %vm2224, %v2106, %v2256
        %v2289 = vsel %vm2225, %v2111, %v2257
        %v2290 = vsel %vm2226, %v2114, %v2258
        %v2291 = vsel %vm2227, %v2119, %v2259
        %v2292 = vsel %vm2228, %v2122, %v2260
        %v2293 = vsel %vm2229, %v2127, %v2261
        %v2294 = vsel %vm2230, %v2130, %v2262
        %v2295 = vsel %vm2231, %v2135, %v2263
        %v2296 = vsel %vm2232, %v2138, %v2264
        %v2297 = vsel %vm2233, %v2143, %v2265
        %v2298 = vsel %vm2234, %v2146, %v2266
        %v2299 = vsel %vm2235, %v2151, %v2267
        %v2300 = vsel %vm2236, %v2154, %v2268
        %v2301 = vsel %vm2237, %v2159, %v2269
        %v2302 = vsel %vm2238, %v2162, %v2270
        %v2303 = vsel %vm2239, %v2167, %v2271
        %v2304 = vsel %vm2240, %v2170, %v2272
        %v2305 = vsel %vm2241, %v2175, %v2273
        %v2306 = vsel %vm2242, %v2178, %v2274
        %v2307 = vsel %vm2243, %v2183, %v2275
        %v2308 = vsel %vm2244, %v2186, %v2276
        %v2309 = vsel %vm2245, %v2191, %v2277
        %v2310 = vsel %vm2246, %v2194, %v2278
        %v2311 = vsel %vm2247, %v2199, %v2279
        %v2312 = vsel %vm2248, %v2202, %v2280
        %v2313 = vsel %vm2249, %v2207, %v2281
        %v2314 = vsel %vm2250, %v2210, %v2282
        %v2315 = vsel %vm2251, %v2215, %v2283
        %v2316 = vsel %vm2252, %v2218, %v2284
        %v2317 = vpack.c.bf16 %v2286, %v2285
        %v2318 = vpack.c.bf16 %v2288, %v2287
        %v2319 = vpack.c.bf16 %v2290, %v2289
        %v2320 = vpack.c.bf16 %v2292, %v2291
        %v2321 = vpack.c.bf16 %v2294, %v2293
        %v2322 = vpack.c.bf16 %v2296, %v2295
        %v2323 = vpack.c.bf16 %v2298, %v2297
        %v2324 = vpack.c.bf16 %v2300, %v2299
        %v2325 = vpack.c.bf16 %v2302, %v2301
        %v2326 = vpack.c.bf16 %v2304, %v2303
        %v2327 = vpack.c.bf16 %v2306, %v2305
        %v2328 = vpack.c.bf16 %v2308, %v2307
        %v2329 = vpack.c.bf16 %v2310, %v2309
        %v2330 = vpack.c.bf16 %v2312, %v2311
        %v2331 = vpack.c.bf16 %v2314, %v2313
        %v2332 = vpack.c.bf16 %v2316, %v2315
        %v2333 = vld [vmem:[%s6 + $0x40] sm:$0xf]
        %v2334 = vld [vmem:[%s6 + $0x44] sm:$0xf]
        %v2335 = vld [vmem:[%s6 + $0x48] sm:$0xf]
        %v2336 = vld [vmem:[%s6 + $0x4c] sm:$0xf]
        %v2337 = vld [vmem:[%s6 + $0x50] sm:$0xf]
        %v2338 = vld [vmem:[%s6 + $0x54] sm:$0xf]
        %v2339 = vld [vmem:[%s6 + $0x58] sm:$0xf]
        %v2340 = vld [vmem:[%s6 + $0x5c] sm:$0xf]
        %v2341 = vld [vmem:[%s6 + $0x60] sm:$0xf]
        %v2342 = vld [vmem:[%s6 + $0x64] sm:$0xf]
        %v2343 = vld [vmem:[%s6 + $0x68] sm:$0xf]
        %v2344 = vld [vmem:[%s6 + $0x6c] sm:$0xf]
        %v2345 = vld [vmem:[%s6 + $0x70] sm:$0xf]
        %v2346 = vld [vmem:[%s6 + $0x74] sm:$0xf]
        %v2347 = vld [vmem:[%s6 + $0x78] sm:$0xf]
        %v2348 = vld [vmem:[%s6 + $0x7c] sm:$0xf]
        %v2365 = vunpack.c.l.b16 %v2333
        %v2366 = vunpack.c.l.b16 %v2334
        %v2367 = vunpack.c.l.b16 %v2335
        %v2368 = vunpack.c.l.b16 %v2336
        %v2369 = vunpack.c.l.b16 %v2337
        %v2370 = vunpack.c.l.b16 %v2338
        %v2371 = vunpack.c.l.b16 %v2339
        %v2372 = vunpack.c.l.b16 %v2340
        %v2373 = vunpack.c.l.b16 %v2341
        %v2374 = vunpack.c.l.b16 %v2342
        %v2375 = vunpack.c.l.b16 %v2343
        %v2376 = vunpack.c.l.b16 %v2344
        %v2377 = vunpack.c.l.b16 %v2345
        %v2378 = vunpack.c.l.b16 %v2346
        %v2379 = vunpack.c.l.b16 %v2347
        %v2380 = vunpack.c.l.b16 %v2348
        %v2381 = vpack.c.b16 %v2366, %v2365
        %v2382 = vpack.c.b16 %v2368, %v2367
        %v2383 = vpack.c.b16 %v2370, %v2369
        %v2384 = vpack.c.b16 %v2372, %v2371
        %v2385 = vpack.c.b16 %v2374, %v2373
        %v2386 = vpack.c.b16 %v2376, %v2375
        %v2387 = vpack.c.b16 %v2378, %v2377
        %v2388 = vpack.c.b16 %v2380, %v2379
        %2397 = vmatprep.subr.bf16.mxu0 0
        %2398 = vmatpush1.bf16.msra.mxu0 %v2381
        %2399 = vmatprep.subr.bf16.mxu0 0
        %2400 = vmatpush1.bf16.msra.mxu0 %v2382
        %2401 = vmatprep.subr.bf16.mxu0 0
        %2402 = vmatpush1.bf16.msra.mxu0 %v2383
        %2403 = vmatprep.subr.bf16.mxu0 0
        %2404 = vmatpush1.bf16.msra.mxu0 %v2384
        %2405 = vmatprep.subr.bf16.mxu0 0
        %2406 = vmatpush1.bf16.msra.mxu0 %v2385
        %2407 = vmatprep.subr.bf16.mxu0 0
        %2408 = vmatpush1.bf16.msra.mxu0 %v2386
        %2409 = vmatprep.subr.bf16.mxu0 0
        %2410 = vmatpush1.bf16.msra.mxu0 %v2387
        %2411 = vmatprep.subr.bf16.mxu0 0
        %2412 = vmatpush1.bf16.msra.mxu0 %v2388
        %2413 = vmatprep.subr.bf16.mxu0 0
        %2414 = vmatpush1.bf16.msra.mxu0 0
        %2415 = vmatprep.subr.bf16.mxu0 0
        %2416 = vmatpush1.bf16.msra.mxu0 0
        %2417 = vmatprep.subr.bf16.mxu0 0
        %2418 = vmatpush1.bf16.msra.mxu0 0
        %2419 = vmatprep.subr.bf16.mxu0 0
        %2420 = vmatpush1.bf16.msra.mxu0 0
        %2421 = vmatprep.subr.bf16.mxu0 0
        %2422 = vmatpush1.bf16.msra.mxu0 0
        %2423 = vmatprep.subr.bf16.mxu0 0
        %2424 = vmatpush1.bf16.msra.mxu0 0
        %2425 = vmatprep.subr.bf16.mxu0 0
        %2426 = vmatpush1.bf16.msra.mxu0 0
        %2427 = vmatprep.subr.bf16.mxu0 0
        %2428 = vmatpush1.bf16.msra.mxu0 0
        %2429 = vmatprep.mubr.bf16.mxu0 0
        %2430 = vmatmul.mubr.bf16.gmra.mrb[0].mxu0 %v2317
        %v2431 = vpop.f32.mrb[0].mxu0
        %v2432 = vadd.f32 0.0, %v2431
        %v2433 = vpop.f32.mrb[0].mxu0
        %v2434 = vpop.f32.mrb[0].mxu0
        %v2435 = vadd.f32 0.0, %v2434
        %v2436 = vpop.f32.mrb[0].mxu0
        %2437 = vmatprep.mubr.bf16.mxu0 0
        %2438 = vmatmul.mubr.bf16.gmra.mrb[0].mxu0 %v2318
        %v2439 = vpop.f32.mrb[0].mxu0
        %v2440 = vadd.f32 0.0, %v2439
        %v2441 = vpop.f32.mrb[0].mxu0
        %v2442 = vpop.f32.mrb[0].mxu0
        %v2443 = vadd.f32 0.0, %v2442
        %v2444 = vpop.f32.mrb[0].mxu0
        %2445 = vmatprep.mubr.bf16.mxu0 0
        %2446 = vmatmul.mubr.bf16.gmra.mrb[0].mxu0 %v2319
        %v2447 = vpop.f32.mrb[0].mxu0
        %v2448 = vadd.f32 0.0, %v2447
        %v2449 = vpop.f32.mrb[0].mxu0
        %v2450 = vpop.f32.mrb[0].mxu0
        %v2451 = vadd.f32 0.0, %v2450
        %v2452 = vpop.f32.mrb[0].mxu0
        %2453 = vmatprep.mubr.bf16.mxu0 0
        %2454 = vmatmul.mubr.bf16.gmra.mrb[0].mxu0 %v2320
        %v2455 = vpop.f32.mrb[0].mxu0
        %v2456 = vadd.f32 0.0, %v2455
        %v2457 = vpop.f32.mrb[0].mxu0
        %v2458 = vpop.f32.mrb[0].mxu0
        %v2459 = vadd.f32 0.0, %v2458
        %v2460 = vpop.f32.mrb[0].mxu0
        %2461 = vmatprep.mubr.bf16.mxu0 0
        %2462 = vmatmul.mubr.bf16.gmra.mrb[0].mxu0 %v2321
        %v2463 = vpop.f32.mrb[0].mxu0
        %v2464 = vadd.f32 0.0, %v2463
        %v2465 = vpop.f32.mrb[0].mxu0
        %v2466 = vpop.f32.mrb[0].mxu0
        %v2467 = vadd.f32 0.0, %v2466
        %v2468 = vpop.f32.mrb[0].mxu0
        %2469 = vmatprep.mubr.bf16.mxu0 0
        %2470 = vmatmul.mubr.bf16.gmra.mrb[0].mxu0 %v2322
        %v2471 = vpop.f32.mrb[0].mxu0
        %v2472 = vadd.f32 0.0, %v2471
        %v2473 = vpop.f32.mrb[0].mxu0
        %v2474 = vpop.f32.mrb[0].mxu0
        %v2475 = vadd.f32 0.0, %v2474
        %v2476 = vpop.f32.mrb[0].mxu0
        %2477 = vmatprep.mubr.bf16.mxu0 0
        %2478 = vmatmul.mubr.bf16.gmra.mrb[0].mxu0 %v2323
        %v2479 = vpop.f32.mrb[0].mxu0
        %v2480 = vadd.f32 0.0, %v2479
        %v2481 = vpop.f32.mrb[0].mxu0
        %v2482 = vpop.f32.mrb[0].mxu0
        %v2483 = vadd.f32 0.0, %v2482
        %v2484 = vpop.f32.mrb[0].mxu0
        %2485 = vmatprep.mubr.bf16.mxu0 0
        %2486 = vmatmul.mubr.bf16.gmra.mrb[0].mxu0 %v2324
        %v2487 = vpop.f32.mrb[0].mxu0
        %v2488 = vadd.f32 0.0, %v2487
        %v2489 = vpop.f32.mrb[0].mxu0
        %v2490 = vpop.f32.mrb[0].mxu0
        %v2491 = vadd.f32 0.0, %v2490
        %v2492 = vpop.f32.mrb[0].mxu0
        %2493 = vmatprep.mubr.bf16.mxu0 0
        %2494 = vmatmul.mubr.bf16.gmra.mrb[0].mxu0 %v2325
        %v2495 = vpop.f32.mrb[0].mxu0
        %v2496 = vadd.f32 0.0, %v2495
        %v2497 = vpop.f32.mrb[0].mxu0
        %v2498 = vpop.f32.mrb[0].mxu0
        %v2499 = vadd.f32 0.0, %v2498
        %v2500 = vpop.f32.mrb[0].mxu0
        %2501 = vmatprep.mubr.bf16.mxu0 0
        %2502 = vmatmul.mubr.bf16.gmra.mrb[0].mxu0 %v2326
        %v2503 = vpop.f32.mrb[0].mxu0
        %v2504 = vadd.f32 0.0, %v2503
        %v2505 = vpop.f32.mrb[0].mxu0
        %v2506 = vpop.f32.mrb[0].mxu0
        %v2507 = vadd.f32 0.0, %v2506
        %v2508 = vpop.f32.mrb[0].mxu0
        %2509 = vmatprep.mubr.bf16.mxu0 0
        %2510 = vmatmul.mubr.bf16.gmra.mrb[0].mxu0 %v2327
        %v2511 = vpop.f32.mrb[0].mxu0
        %v2512 = vadd.f32 0.0, %v2511
        %v2513 = vpop.f32.mrb[0].mxu0
        %v2514 = vpop.f32.mrb[0].mxu0
        %v2515 = vadd.f32 0.0, %v2514
        %v2516 = vpop.f32.mrb[0].mxu0
        %2517 = vmatprep.mubr.bf16.mxu0 0
        %2518 = vmatmul.mubr.bf16.gmra.mrb[0].mxu0 %v2328
        %v2519 = vpop.f32.mrb[0].mxu0
        %v2520 = vadd.f32 0.0, %v2519
        %v2521 = vpop.f32.mrb[0].mxu0
        %v2522 = vpop.f32.mrb[0].mxu0
        %v2523 = vadd.f32 0.0, %v2522
        %v2524 = vpop.f32.mrb[0].mxu0
        %2525 = vmatprep.mubr.bf16.mxu0 0
        %2526 = vmatmul.mubr.bf16.gmra.mrb[0].mxu0 %v2329
        %v2527 = vpop.f32.mrb[0].mxu0
        %v2528 = vadd.f32 0.0, %v2527
        %v2529 = vpop.f32.mrb[0].mxu0
        %v2530 = vpop.f32.mrb[0].mxu0
        %v2531 = vadd.f32 0.0, %v2530
        %v2532 = vpop.f32.mrb[0].mxu0
        %2533 = vmatprep.mubr.bf16.mxu0 0
        %2534 = vmatmul.mubr.bf16.gmra.mrb[0].mxu0 %v2330
        %v2535 = vpop.f32.mrb[0].mxu0
        %v2536 = vadd.f32 0.0, %v2535
        %v2537 = vpop.f32.mrb[0].mxu0
        %v2538 = vpop.f32.mrb[0].mxu0
        %v2539 = vadd.f32 0.0, %v2538
        %v2540 = vpop.f32.mrb[0].mxu0
        %2541 = vmatprep.mubr.bf16.mxu0 0
        %2542 = vmatmul.mubr.bf16.gmra.mrb[0].mxu0 %v2331
        %v2543 = vpop.f32.mrb[0].mxu0
        %v2544 = vadd.f32 0.0, %v2543
        %v2545 = vpop.f32.mrb[0].mxu0
        %v2546 = vpop.f32.mrb[0].mxu0
        %v2547 = vadd.f32 0.0, %v2546
        %v2548 = vpop.f32.mrb[0].mxu0
        %2549 = vmatprep.mubr.bf16.mxu0 0
        %2550 = vmatmul.mubr.bf16.gmra.mrb[0].mxu0 %v2332
        %v2551 = vpop.f32.mrb[0].mxu0
        %v2552 = vadd.f32 0.0, %v2551
        %v2553 = vpop.f32.mrb[0].mxu0
        %v2554 = vpop.f32.mrb[0].mxu0
        %v2555 = vadd.f32 0.0, %v2554
        %v2556 = vpop.f32.mrb[0].mxu0
        %2557 = vdwg.mxu0
        %v2574 = vunpack.c.l.b16 %v1502
        %v2575 = vunpack.c.l.b16 %v1503
        %v2576 = vunpack.c.l.b16 %v1504
        %v2577 = vunpack.c.l.b16 %v1505
        %v2578 = vunpack.c.l.b16 %v1506
        %v2579 = vunpack.c.l.b16 %v1507
        %v2580 = vunpack.c.l.b16 %v1508
        %v2581 = vunpack.c.l.b16 %v1509
        %v2582 = vunpack.c.l.b16 %v1510
        %v2583 = vunpack.c.l.b16 %v1511
        %v2584 = vunpack.c.l.b16 %v1512
        %v2585 = vunpack.c.l.b16 %v1513
        %v2586 = vunpack.c.l.b16 %v1514
        %v2587 = vunpack.c.l.b16 %v1515
        %v2588 = vunpack.c.l.b16 %v1516
        %v2589 = vunpack.c.l.b16 %v1517
        %v2590 = vpack.c.b16 %v2575, %v2574
        %v2591 = vpack.c.b16 %v2577, %v2576
        %v2592 = vpack.c.b16 %v2579, %v2578
        %v2593 = vpack.c.b16 %v2581, %v2580
        %v2594 = vpack.c.b16 %v2583, %v2582
        %v2595 = vpack.c.b16 %v2585, %v2584
        %v2596 = vpack.c.b16 %v2587, %v2586
        %v2597 = vpack.c.b16 %v2589, %v2588
        %2606 = vmatprep.subr.bf16.mxu0 0
        %2607 = vmatpush1.bf16.msra.mxu0 %v2590
        %2608 = vmatprep.subr.bf16.mxu0 0
        %2609 = vmatpush1.bf16.msra.mxu0 %v2591
        %2610 = vmatprep.subr.bf16.mxu0 0
        %2611 = vmatpush1.bf16.msra.mxu0 %v2592
        %2612 = vmatprep.subr.bf16.mxu0 0
        %2613 = vmatpush1.bf16.msra.mxu0 %v2593
        %2614 = vmatprep.subr.bf16.mxu0 0
        %2615 = vmatpush1.bf16.msra.mxu0 %v2594
        %2616 = vmatprep.subr.bf16.mxu0 0
        %2617 = vmatpush1.bf16.msra.mxu0 %v2595
        %2618 = vmatprep.subr.bf16.mxu0 0
        %2619 = vmatpush1.bf16.msra.mxu0 %v2596
        %2620 = vmatprep.subr.bf16.mxu0 0
        %2621 = vmatpush1.bf16.msra.mxu0 %v2597
        %2622 = vmatprep.subr.bf16.mxu0 0
        %2623 = vmatpush1.bf16.msra.mxu0 0
        %2624 = vmatprep.subr.bf16.mxu0 0
        %2625 = vmatpush1.bf16.msra.mxu0 0
        %2626 = vmatprep.subr.bf16.mxu0 0
        %2627 = vmatpush1.bf16.msra.mxu0 0
        %2628 = vmatprep.subr.bf16.mxu0 0
        %2629 = vmatpush1.bf16.msra.mxu0 0
        %2630 = vmatprep.subr.bf16.mxu0 0
        %2631 = vmatpush1.bf16.msra.mxu0 0
        %2632 = vmatprep.subr.bf16.mxu0 0
        %2633 = vmatpush1.bf16.msra.mxu0 0
        %2634 = vmatprep.subr.bf16.mxu0 0
        %2635 = vmatpush1.bf16.msra.mxu0 0
        %2636 = vmatprep.subr.bf16.mxu0 0
        %2637 = vmatpush1.bf16.msra.mxu0 0
        %2638 = vmatprep.mubr.bf16.mxu0 0
        %2639 = vmatmul.mubr.bf16.gmra.mrb[0].mxu0 %v1486
        %v2640 = vpop.f32.mrb[0].mxu0
        %v2641 = vadd.f32 %v2432, %v2640
        %v2642 = vpop.f32.mrb[0].mxu0
        %v2643 = vpop.f32.mrb[0].mxu0
        %v2644 = vadd.f32 %v2435, %v2643
        %v2645 = vpop.f32.mrb[0].mxu0
        %2646 = vmatprep.mubr.bf16.mxu0 0
        %2647 = vmatmul.mubr.bf16.gmra.mrb[0].mxu0 %v1487
        %v2648 = vpop.f32.mrb[0].mxu0
        %v2649 = vadd.f32 %v2440, %v2648
        %v2650 = vpop.f32.mrb[0].mxu0
        %v2651 = vpop.f32.mrb[0].mxu0
        %v2652 = vadd.f32 %v2443, %v2651
        %v2653 = vpop.f32.mrb[0].mxu0
        %2654 = vmatprep.mubr.bf16.mxu0 0
        %2655 = vmatmul.mubr.bf16.gmra.mrb[0].mxu0 %v1488
        %v2656 = vpop.f32.mrb[0].mxu0
        %v2657 = vadd.f32 %v2448, %v2656
        %v2658 = vpop.f32.mrb[0].mxu0
        %v2659 = vpop.f32.mrb[0].mxu0
        %v2660 = vadd.f32 %v2451, %v2659
        %v2661 = vpop.f32.mrb[0].mxu0
        %2662 = vmatprep.mubr.bf16.mxu0 0
        %2663 = vmatmul.mubr.bf16.gmra.mrb[0].mxu0 %v1489
        %v2664 = vpop.f32.mrb[0].mxu0
        %v2665 = vadd.f32 %v2456, %v2664
        %v2666 = vpop.f32.mrb[0].mxu0
        %v2667 = vpop.f32.mrb[0].mxu0
        %v2668 = vadd.f32 %v2459, %v2667
        %v2669 = vpop.f32.mrb[0].mxu0
        %2670 = vmatprep.mubr.bf16.mxu0 0
        %2671 = vmatmul.mubr.bf16.gmra.mrb[0].mxu0 %v1490
        %v2672 = vpop.f32.mrb[0].mxu0
        %v2673 = vadd.f32 %v2464, %v2672
        %v2674 = vpop.f32.mrb[0].mxu0
        %v2675 = vpop.f32.mrb[0].mxu0
        %v2676 = vadd.f32 %v2467, %v2675
        %v2677 = vpop.f32.mrb[0].mxu0
        %2678 = vmatprep.mubr.bf16.mxu0 0
        %2679 = vmatmul.mubr.bf16.gmra.mrb[0].mxu0 %v1491
        %v2680 = vpop.f32.mrb[0].mxu0
        %v2681 = vadd.f32 %v2472, %v2680
        %v2682 = vpop.f32.mrb[0].mxu0
        %v2683 = vpop.f32.mrb[0].mxu0
        %v2684 = vadd.f32 %v2475, %v2683
        %v2685 = vpop.f32.mrb[0].mxu0
        %2686 = vmatprep.mubr.bf16.mxu0 0
        %2687 = vmatmul.mubr.bf16.gmra.mrb[0].mxu0 %v1492
        %v2688 = vpop.f32.mrb[0].mxu0
        %v2689 = vadd.f32 %v2480, %v2688
        %v2690 = vpop.f32.mrb[0].mxu0
        %v2691 = vpop.f32.mrb[0].mxu0
        %v2692 = vadd.f32 %v2483, %v2691
        %v2693 = vpop.f32.mrb[0].mxu0
        %2694 = vmatprep.mubr.bf16.mxu0 0
        %2695 = vmatmul.mubr.bf16.gmra.mrb[0].mxu0 %v1493
        %v2696 = vpop.f32.mrb[0].mxu0
        %v2697 = vadd.f32 %v2488, %v2696
        %v2698 = vpop.f32.mrb[0].mxu0
        %v2699 = vpop.f32.mrb[0].mxu0
        %v2700 = vadd.f32 %v2491, %v2699
        %v2701 = vpop.f32.mrb[0].mxu0
        %2702 = vmatprep.mubr.bf16.mxu0 0
        %2703 = vmatmul.mubr.bf16.gmra.mrb[0].mxu0 %v1494
        %v2704 = vpop.f32.mrb[0].mxu0
        %v2705 = vadd.f32 %v2496, %v2704
        %v2706 = vpop.f32.mrb[0].mxu0
        %v2707 = vpop.f32.mrb[0].mxu0
        %v2708 = vadd.f32 %v2499, %v2707
        %v2709 = vpop.f32.mrb[0].mxu0
        %2710 = vmatprep.mubr.bf16.mxu0 0
        %2711 = vmatmul.mubr.bf16.gmra.mrb[0].mxu0 %v1495
        %v2712 = vpop.f32.mrb[0].mxu0
        %v2713 = vadd.f32 %v2504, %v2712
        %v2714 = vpop.f32.mrb[0].mxu0
        %v2715 = vpop.f32.mrb[0].mxu0
        %v2716 = vadd.f32 %v2507, %v2715
        %v2717 = vpop.f32.mrb[0].mxu0
        %2718 = vmatprep.mubr.bf16.mxu0 0
        %2719 = vmatmul.mubr.bf16.gmra.mrb[0].mxu0 %v1496
        %v2720 = vpop.f32.mrb[0].mxu0
        %v2721 = vadd.f32 %v2512, %v2720
        %v2722 = vpop.f32.mrb[0].mxu0
        %v2723 = vpop.f32.mrb[0].mxu0
        %v2724 = vadd.f32 %v2515, %v2723
        %v2725 = vpop.f32.mrb[0].mxu0
        %2726 = vmatprep.mubr.bf16.mxu0 0
        %2727 = vmatmul.mubr.bf16.gmra.mrb[0].mxu0 %v1497
        %v2728 = vpop.f32.mrb[0].mxu0
        %v2729 = vadd.f32 %v2520, %v2728
        %v2730 = vpop.f32.mrb[0].mxu0
        %v2731 = vpop.f32.mrb[0].mxu0
        %v2732 = vadd.f32 %v2523, %v2731
        %v2733 = vpop.f32.mrb[0].mxu0
        %2734 = vmatprep.mubr.bf16.mxu0 0
        %2735 = vmatmul.mubr.bf16.gmra.mrb[0].mxu0 %v1498
        %v2736 = vpop.f32.mrb[0].mxu0
        %v2737 = vadd.f32 %v2528, %v2736
        %v2738 = vpop.f32.mrb[0].mxu0
        %v2739 = vpop.f32.mrb[0].mxu0
        %v2740 = vadd.f32 %v2531, %v2739
        %v2741 = vpop.f32.mrb[0].mxu0
        %2742 = vmatprep.mubr.bf16.mxu0 0
        %2743 = vmatmul.mubr.bf16.gmra.mrb[0].mxu0 %v1499
        %v2744 = vpop.f32.mrb[0].mxu0
        %v2745 = vadd.f32 %v2536, %v2744
        %v2746 = vpop.f32.mrb[0].mxu0
        %v2747 = vpop.f32.mrb[0].mxu0
        %v2748 = vadd.f32 %v2539, %v2747
        %v2749 = vpop.f32.mrb[0].mxu0
        %2750 = vmatprep.mubr.bf16.mxu0 0
        %2751 = vmatmul.mubr.bf16.gmra.mrb[0].mxu0 %v1500
        %v2752 = vpop.f32.mrb[0].mxu0
        %v2753 = vadd.f32 %v2544, %v2752
        %v2754 = vpop.f32.mrb[0].mxu0
        %v2755 = vpop.f32.mrb[0].mxu0
        %v2756 = vadd.f32 %v2547, %v2755
        %v2757 = vpop.f32.mrb[0].mxu0
        %2758 = vmatprep.mubr.bf16.mxu0 0
        %2759 = vmatmul.mubr.bf16.gmra.mrb[0].mxu0 %v1501
        %v2760 = vpop.f32.mrb[0].mxu0
        %v2761 = vadd.f32 %v2552, %v2760
        %v2762 = vpop.f32.mrb[0].mxu0
        %v2763 = vpop.f32.mrb[0].mxu0
        %v2764 = vadd.f32 %v2555, %v2763
        %v2765 = vpop.f32.mrb[0].mxu0
        %2766 = vdwg.mxu0
        %v2767 = vld [vmem:[%s7] sm:$0x1]
        %v2769 = vlaneseq
        %v2770 = vshrl.u32 %v2769, 7
        %v2771 = vsub.s32 0, %v2770
        %v2772 = vrot.slane %v2767, %v2771
        %v2774 = vadd.f32 %v2641, %v2772
        %v2775 = vadd.f32 %v2644, %v2772
        %v2776 = vadd.f32 %v2649, %v2772
        %v2777 = vadd.f32 %v2652, %v2772
        %v2778 = vadd.f32 %v2657, %v2772
        %v2779 = vadd.f32 %v2660, %v2772
        %v2780 = vadd.f32 %v2665, %v2772
        %v2781 = vadd.f32 %v2668, %v2772
        %v2782 = vadd.f32 %v2673, %v2772
        %v2783 = vadd.f32 %v2676, %v2772
        %v2784 = vadd.f32 %v2681, %v2772
        %v2785 = vadd.f32 %v2684, %v2772
        %v2786 = vadd.f32 %v2689, %v2772
        %v2787 = vadd.f32 %v2692, %v2772
        %v2788 = vadd.f32 %v2697, %v2772
        %v2789 = vadd.f32 %v2700, %v2772
        %v2790 = vadd.f32 %v2705, %v2772
        %v2791 = vadd.f32 %v2708, %v2772
        %v2792 = vadd.f32 %v2713, %v2772
        %v2793 = vadd.f32 %v2716, %v2772
        %v2794 = vadd.f32 %v2721, %v2772
        %v2795 = vadd.f32 %v2724, %v2772
        %v2796 = vadd.f32 %v2729, %v2772
        %v2797 = vadd.f32 %v2732, %v2772
        %v2798 = vadd.f32 %v2737, %v2772
        %v2799 = vadd.f32 %v2740, %v2772
        %v2800 = vadd.f32 %v2745, %v2772
        %v2801 = vadd.f32 %v2748, %v2772
        %v2802 = vadd.f32 %v2753, %v2772
        %v2803 = vadd.f32 %v2756, %v2772
        %v2804 = vadd.f32 %v2761, %v2772
        %v2805 = vadd.f32 %v2764, %v2772
        %s2806 = sld [smem:[#allocation3 + $0x3]]
        %vm2807 = vcmp.ge.f32.partialorder %v2774, 0.0
        %vm2808 = vcmp.ge.f32.partialorder %v2775, 0.0
        %vm2809 = vcmp.ge.f32.partialorder %v2776, 0.0
        %vm2810 = vcmp.ge.f32.partialorder %v2777, 0.0
        %vm2811 = vcmp.ge.f32.partialorder %v2778, 0.0
        %vm2812 = vcmp.ge.f32.partialorder %v2779, 0.0
        %vm2813 = vcmp.ge.f32.partialorder %v2780, 0.0
        %vm2814 = vcmp.ge.f32.partialorder %v2781, 0.0
        %vm2815 = vcmp.ge.f32.partialorder %v2782, 0.0
        %vm2816 = vcmp.ge.f32.partialorder %v2783, 0.0
        %vm2817 = vcmp.ge.f32.partialorder %v2784, 0.0
        %vm2818 = vcmp.ge.f32.partialorder %v2785, 0.0
        %vm2819 = vcmp.ge.f32.partialorder %v2786, 0.0
        %vm2820 = vcmp.ge.f32.partialorder %v2787, 0.0
        %vm2821 = vcmp.ge.f32.partialorder %v2788, 0.0
        %vm2822 = vcmp.ge.f32.partialorder %v2789, 0.0
        %vm2823 = vcmp.ge.f32.partialorder %v2790, 0.0
        %vm2824 = vcmp.ge.f32.partialorder %v2791, 0.0
        %vm2825 = vcmp.ge.f32.partialorder %v2792, 0.0
        %vm2826 = vcmp.ge.f32.partialorder %v2793, 0.0
        %vm2827 = vcmp.ge.f32.partialorder %v2794, 0.0
        %vm2828 = vcmp.ge.f32.partialorder %v2795, 0.0
        %vm2829 = vcmp.ge.f32.partialorder %v2796, 0.0
        %vm2830 = vcmp.ge.f32.partialorder %v2797, 0.0
        %vm2831 = vcmp.ge.f32.partialorder %v2798, 0.0
        %vm2832 = vcmp.ge.f32.partialorder %v2799, 0.0
        %vm2833 = vcmp.ge.f32.partialorder %v2800, 0.0
        %vm2834 = vcmp.ge.f32.partialorder %v2801, 0.0
        %vm2835 = vcmp.ge.f32.partialorder %v2802, 0.0
        %vm2836 = vcmp.ge.f32.partialorder %v2803, 0.0
        %vm2837 = vcmp.ge.f32.partialorder %v2804, 0.0
        %vm2838 = vcmp.ge.f32.partialorder %v2805, 0.0
        %v2839 = vstv %s2806
        %v2840 = vmul.f32 %v2839, %v2774
        %v2841 = vmul.f32 %v2839, %v2775
        %v2842 = vmul.f32 %v2839, %v2776
        %v2843 = vmul.f32 %v2839, %v2777
        %v2844 = vmul.f32 %v2839, %v2778
        %v2845 = vmul.f32 %v2839, %v2779
        %v2846 = vmul.f32 %v2839, %v2780
        %v2847 = vmul.f32 %v2839, %v2781
        %v2848 = vmul.f32 %v2839, %v2782
        %v2849 = vmul.f32 %v2839, %v2783
        %v2850 = vmul.f32 %v2839, %v2784
        %v2851 = vmul.f32 %v2839, %v2785
        %v2852 = vmul.f32 %v2839, %v2786
        %v2853 = vmul.f32 %v2839, %v2787
        %v2854 = vmul.f32 %v2839, %v2788
        %v2855 = vmul.f32 %v2839, %v2789
        %v2856 = vmul.f32 %v2839, %v2790
        %v2857 = vmul.f32 %v2839, %v2791
        %v2858 = vmul.f32 %v2839, %v2792
        %v2859 = vmul.f32 %v2839, %v2793
        %v2860 = vmul.f32 %v2839, %v2794
        %v2861 = vmul.f32 %v2839, %v2795
        %v2862 = vmul.f32 %v2839, %v2796
        %v2863 = vmul.f32 %v2839, %v2797
        %v2864 = vmul.f32 %v2839, %v2798
        %v2865 = vmul.f32 %v2839, %v2799
        %v2866 = vmul.f32 %v2839, %v2800
        %v2867 = vmul.f32 %v2839, %v2801
        %v2868 = vmul.f32 %v2839, %v2802
        %v2869 = vmul.f32 %v2839, %v2803
        %v2870 = vmul.f32 %v2839, %v2804
        %v2871 = vmul.f32 %v2839, %v2805
        %v2872 = vsel %vm2807, %v2774, %v2840
        %v2873 = vsel %vm2808, %v2775, %v2841
        %v2874 = vsel %vm2809, %v2776, %v2842
        %v2875 = vsel %vm2810, %v2777, %v2843
        %v2876 = vsel %vm2811, %v2778, %v2844
        %v2877 = vsel %vm2812, %v2779, %v2845
        %v2878 = vsel %vm2813, %v2780, %v2846
        %v2879 = vsel %vm2814, %v2781, %v2847
        %v2880 = vsel %vm2815, %v2782, %v2848
        %v2881 = vsel %vm2816, %v2783, %v2849
        %v2882 = vsel %vm2817, %v2784, %v2850
        %v2883 = vsel %vm2818, %v2785, %v2851
        %v2884 = vsel %vm2819, %v2786, %v2852
        %v2885 = vsel %vm2820, %v2787, %v2853
        %v2886 = vsel %vm2821, %v2788, %v2854
        %v2887 = vsel %vm2822, %v2789, %v2855
        %v2888 = vsel %vm2823, %v2790, %v2856
        %v2889 = vsel %vm2824, %v2791, %v2857
        %v2890 = vsel %vm2825, %v2792, %v2858
        %v2891 = vsel %vm2826, %v2793, %v2859
        %v2892 = vsel %vm2827, %v2794, %v2860
        %v2893 = vsel %vm2828, %v2795, %v2861
        %v2894 = vsel %vm2829, %v2796, %v2862
        %v2895 = vsel %vm2830, %v2797, %v2863
        %v2896 = vsel %vm2831, %v2798, %v2864
        %v2897 = vsel %vm2832, %v2799, %v2865
        %v2898 = vsel %vm2833, %v2800, %v2866
        %v2899 = vsel %vm2834, %v2801, %v2867
        %v2900 = vsel %vm2835, %v2802, %v2868
        %v2901 = vsel %vm2836, %v2803, %v2869
        %v2902 = vsel %vm2837, %v2804, %v2870
        %v2903 = vsel %vm2838, %v2805, %v2871
        %v2904 = vadd.f32 %v2872, %v2774
        %v2905 = vadd.f32 %v2873, %v2775
        %v2906 = vadd.f32 %v2874, %v2776
        %v2907 = vadd.f32 %v2875, %v2777
        %v2908 = vadd.f32 %v2876, %v2778
        %v2909 = vadd.f32 %v2877, %v2779
        %v2910 = vadd.f32 %v2878, %v2780
        %v2911 = vadd.f32 %v2879, %v2781
        %v2912 = vadd.f32 %v2880, %v2782
        %v2913 = vadd.f32 %v2881, %v2783
        %v2914 = vadd.f32 %v2882, %v2784
        %v2915 = vadd.f32 %v2883, %v2785
        %v2916 = vadd.f32 %v2884, %v2786
        %v2917 = vadd.f32 %v2885, %v2787
        %v2918 = vadd.f32 %v2886, %v2788
        %v2919 = vadd.f32 %v2887, %v2789
        %v2920 = vadd.f32 %v2888, %v2790
        %v2921 = vadd.f32 %v2889, %v2791
        %v2922 = vadd.f32 %v2890, %v2792
        %v2923 = vadd.f32 %v2891, %v2793
        %v2924 = vadd.f32 %v2892, %v2794
        %v2925 = vadd.f32 %v2893, %v2795
        %v2926 = vadd.f32 %v2894, %v2796
        %v2927 = vadd.f32 %v2895, %v2797
        %v2928 = vadd.f32 %v2896, %v2798
        %v2929 = vadd.f32 %v2897, %v2799
        %v2930 = vadd.f32 %v2898, %v2800
        %v2931 = vadd.f32 %v2899, %v2801
        %v2932 = vadd.f32 %v2900, %v2802
        %v2933 = vadd.f32 %v2901, %v2803
        %v2934 = vadd.f32 %v2902, %v2804
        %v2935 = vadd.f32 %v2903, %v2805
        %v2936 = vpack.c.bf16 %v2905, %v2904
        %v2937 = vpack.c.bf16 %v2907, %v2906
        %v2938 = vpack.c.bf16 %v2909, %v2908
        %v2939 = vpack.c.bf16 %v2911, %v2910
        %v2940 = vpack.c.bf16 %v2913, %v2912
        %v2941 = vpack.c.bf16 %v2915, %v2914
        %v2942 = vpack.c.bf16 %v2917, %v2916
        %v2943 = vpack.c.bf16 %v2919, %v2918
        %v2944 = vpack.c.bf16 %v2921, %v2920
        %v2945 = vpack.c.bf16 %v2923, %v2922
        %v2946 = vpack.c.bf16 %v2925, %v2924
        %v2947 = vpack.c.bf16 %v2927, %v2926
        %v2948 = vpack.c.bf16 %v2929, %v2928
        %v2949 = vpack.c.bf16 %v2931, %v2930
        %v2950 = vpack.c.bf16 %v2933, %v2932
        %v2951 = vpack.c.bf16 %v2935, %v2934
        %v2952 = vld [vmem:[%s8] sm:$0xf]
        %v2953 = vld [vmem:[%s8 + $0x4] sm:$0xf]
        %v2954 = vld [vmem:[%s8 + $0x8] sm:$0xf]
        %v2955 = vld [vmem:[%s8 + $0xc] sm:$0xf]
        %v2956 = vld [vmem:[%s8 + $0x10] sm:$0xf]
        %v2957 = vld [vmem:[%s8 + $0x14] sm:$0xf]
        %v2958 = vld [vmem:[%s8 + $0x18] sm:$0xf]
        %v2959 = vld [vmem:[%s8 + $0x1c] sm:$0xf]
        %v2960 = vld [vmem:[%s8 + $0x20] sm:$0xf]
        %v2961 = vld [vmem:[%s8 + $0x24] sm:$0xf]
        %v2962 = vld [vmem:[%s8 + $0x28] sm:$0xf]
        %v2963 = vld [vmem:[%s8 + $0x2c] sm:$0xf]
        %v2964 = vld [vmem:[%s8 + $0x30] sm:$0xf]
        %v2965 = vld [vmem:[%s8 + $0x34] sm:$0xf]
        %v2966 = vld [vmem:[%s8 + $0x38] sm:$0xf]
        %v2967 = vld [vmem:[%s8 + $0x3c] sm:$0xf]
        %v2968 = vld [vmem:[%s9] sm:$0x1]
        %v2970 = vlaneseq
        %v2971 = vshrl.u32 %v2970, 7
        %v2972 = vsub.s32 0, %v2971
        %v2973 = vrot.slane %v2968, %v2972
        %v2991 = vunpack.c.l.b16 %v2952
        %v2992 = vunpack.c.l.b16 %v2953
        %v2993 = vunpack.c.l.b16 %v2954
        %v2994 = vunpack.c.l.b16 %v2955
        %v2995 = vunpack.c.l.b16 %v2956
        %v2996 = vunpack.c.l.b16 %v2957
        %v2997 = vunpack.c.l.b16 %v2958
        %v2998 = vunpack.c.l.b16 %v2959
        %v2999 = vunpack.c.l.b16 %v2960
        %v3000 = vunpack.c.l.b16 %v2961
        %v3001 = vunpack.c.l.b16 %v2962
        %v3002 = vunpack.c.l.b16 %v2963
        %v3003 = vunpack.c.l.b16 %v2964
        %v3004 = vunpack.c.l.b16 %v2965
        %v3005 = vunpack.c.l.b16 %v2966
        %v3006 = vunpack.c.l.b16 %v2967
        %v3007 = vpack.c.b16 %v2992, %v2991
        %v3008 = vpack.c.b16 %v2994, %v2993
        %v3009 = vpack.c.b16 %v2996, %v2995
        %v3010 = vpack.c.b16 %v2998, %v2997
        %v3011 = vpack.c.b16 %v3000, %v2999
        %v3012 = vpack.c.b16 %v3002, %v3001
        %v3013 = vpack.c.b16 %v3004, %v3003
        %v3014 = vpack.c.b16 %v3006, %v3005
        %3023 = vmatprep.subr.bf16.mxu0 0
        %3024 = vmatpush1.bf16.msra.mxu0 %v3007
        %3025 = vmatprep.subr.bf16.mxu0 0
        %3026 = vmatpush1.bf16.msra.mxu0 %v3008
        %3027 = vmatprep.subr.bf16.mxu0 0
        %3028 = vmatpush1.bf16.msra.mxu0 %v3009
        %3029 = vmatprep.subr.bf16.mxu0 0
        %3030 = vmatpush1.bf16.msra.mxu0 %v3010
        %3031 = vmatprep.subr.bf16.mxu0 0
        %3032 = vmatpush1.bf16.msra.mxu0 %v3011
        %3033 = vmatprep.subr.bf16.mxu0 0
        %3034 = vmatpush1.bf16.msra.mxu0 %v3012
        %3035 = vmatprep.subr.bf16.mxu0 0
        %3036 = vmatpush1.bf16.msra.mxu0 %v3013
        %3037 = vmatprep.subr.bf16.mxu0 0
        %3038 = vmatpush1.bf16.msra.mxu0 %v3014
        %3039 = vmatprep.subr.bf16.mxu0 0
        %3040 = vmatpush1.bf16.msra.mxu0 0
        %3041 = vmatprep.subr.bf16.mxu0 0
        %3042 = vmatpush1.bf16.msra.mxu0 0
        %3043 = vmatprep.subr.bf16.mxu0 0
        %3044 = vmatpush1.bf16.msra.mxu0 0
        %3045 = vmatprep.subr.bf16.mxu0 0
        %3046 = vmatpush1.bf16.msra.mxu0 0
        %3047 = vmatprep.subr.bf16.mxu0 0
        %3048 = vmatpush1.bf16.msra.mxu0 0
        %3049 = vmatprep.subr.bf16.mxu0 0
        %3050 = vmatpush1.bf16.msra.mxu0 0
        %3051 = vmatprep.subr.bf16.mxu0 0
        %3052 = vmatpush1.bf16.msra.mxu0 0
        %3053 = vmatprep.subr.bf16.mxu0 0
        %3054 = vmatpush1.bf16.msra.mxu0 0
        %3055 = vmatprep.mubr.bf16.mxu0 0
        %3056 = vmatmul.mubr.bf16.gmra.mrb[0].mxu0 %v2936
        %v3057 = vpop.f32.mrb[0].mxu0
        %v3058 = vadd.f32 %v2973, %v3057
        %v3059 = vpop.f32.mrb[0].mxu0
        %v3060 = vpop.f32.mrb[0].mxu0
        %v3061 = vadd.f32 %v2973, %v3060
        %v3062 = vpop.f32.mrb[0].mxu0
        %3063 = vmatprep.mubr.bf16.mxu0 0
        %3064 = vmatmul.mubr.bf16.gmra.mrb[0].mxu0 %v2937
        %v3065 = vpop.f32.mrb[0].mxu0
        %v3066 = vadd.f32 %v2973, %v3065
        %v3067 = vpop.f32.mrb[0].mxu0
        %v3068 = vpop.f32.mrb[0].mxu0
        %v3069 = vadd.f32 %v2973, %v3068
        %v3070 = vpop.f32.mrb[0].mxu0
        %3071 = vmatprep.mubr.bf16.mxu0 0
        %3072 = vmatmul.mubr.bf16.gmra.mrb[0].mxu0 %v2938
        %v3073 = vpop.f32.mrb[0].mxu0
        %v3074 = vadd.f32 %v2973, %v3073
        %v3075 = vpop.f32.mrb[0].mxu0
        %v3076 = vpop.f32.mrb[0].mxu0
        %v3077 = vadd.f32 %v2973, %v3076
        %v3078 = vpop.f32.mrb[0].mxu0
        %3079 = vmatprep.mubr.bf16.mxu0 0
        %3080 = vmatmul.mubr.bf16.gmra.mrb[0].mxu0 %v2939
        %v3081 = vpop.f32.mrb[0].mxu0
        %v3082 = vadd.f32 %v2973, %v3081
        %v3083 = vpop.f32.mrb[0].mxu0
        %v3084 = vpop.f32.mrb[0].mxu0
        %v3085 = vadd.f32 %v2973, %v3084
        %v3086 = vpop.f32.mrb[0].mxu0
        %3087 = vmatprep.mubr.bf16.mxu0 0
        %3088 = vmatmul.mubr.bf16.gmra.mrb[0].mxu0 %v2940
        %v3089 = vpop.f32.mrb[0].mxu0
        %v3090 = vadd.f32 %v2973, %v3089
        %v3091 = vpop.f32.mrb[0].mxu0
        %v3092 = vpop.f32.mrb[0].mxu0
        %v3093 = vadd.f32 %v2973, %v3092
        %v3094 = vpop.f32.mrb[0].mxu0
        %3095 = vmatprep.mubr.bf16.mxu0 0
        %3096 = vmatmul.mubr.bf16.gmra.mrb[0].mxu0 %v2941
        %v3097 = vpop.f32.mrb[0].mxu0
        %v3098 = vadd.f32 %v2973, %v3097
        %v3099 = vpop.f32.mrb[0].mxu0
        %v3100 = vpop.f32.mrb[0].mxu0
        %v3101 = vadd.f32 %v2973, %v3100
        %v3102 = vpop.f32.mrb[0].mxu0
        %3103 = vmatprep.mubr.bf16.mxu0 0
        %3104 = vmatmul.mubr.bf16.gmra.mrb[0].mxu0 %v2942
        %v3105 = vpop.f32.mrb[0].mxu0
        %v3106 = vadd.f32 %v2973, %v3105
        %v3107 = vpop.f32.mrb[0].mxu0
        %v3108 = vpop.f32.mrb[0].mxu0
        %v3109 = vadd.f32 %v2973, %v3108
        %v3110 = vpop.f32.mrb[0].mxu0
        %3111 = vmatprep.mubr.bf16.mxu0 0
        %3112 = vmatmul.mubr.bf16.gmra.mrb[0].mxu0 %v2943
        %v3113 = vpop.f32.mrb[0].mxu0
        %v3114 = vadd.f32 %v2973, %v3113
        %v3115 = vpop.f32.mrb[0].mxu0
        %v3116 = vpop.f32.mrb[0].mxu0
        %v3117 = vadd.f32 %v2973, %v3116
        %v3118 = vpop.f32.mrb[0].mxu0
        %3119 = vmatprep.mubr.bf16.mxu0 0
        %3120 = vmatmul.mubr.bf16.gmra.mrb[0].mxu0 %v2944
        %v3121 = vpop.f32.mrb[0].mxu0
        %v3122 = vadd.f32 %v2973, %v3121
        %v3123 = vpop.f32.mrb[0].mxu0
        %v3124 = vpop.f32.mrb[0].mxu0
        %v3125 = vadd.f32 %v2973, %v3124
        %v3126 = vpop.f32.mrb[0].mxu0
        %3127 = vmatprep.mubr.bf16.mxu0 0
        %3128 = vmatmul.mubr.bf16.gmra.mrb[0].mxu0 %v2945
        %v3129 = vpop.f32.mrb[0].mxu0
        %v3130 = vadd.f32 %v2973, %v3129
        %v3131 = vpop.f32.mrb[0].mxu0
        %v3132 = vpop.f32.mrb[0].mxu0
        %v3133 = vadd.f32 %v2973, %v3132
        %v3134 = vpop.f32.mrb[0].mxu0
        %3135 = vmatprep.mubr.bf16.mxu0 0
        %3136 = vmatmul.mubr.bf16.gmra.mrb[0].mxu0 %v2946
        %v3137 = vpop.f32.mrb[0].mxu0
        %v3138 = vadd.f32 %v2973, %v3137
        %v3139 = vpop.f32.mrb[0].mxu0
        %v3140 = vpop.f32.mrb[0].mxu0
        %v3141 = vadd.f32 %v2973, %v3140
        %v3142 = vpop.f32.mrb[0].mxu0
        %3143 = vmatprep.mubr.bf16.mxu0 0
        %3144 = vmatmul.mubr.bf16.gmra.mrb[0].mxu0 %v2947
        %v3145 = vpop.f32.mrb[0].mxu0
        %v3146 = vadd.f32 %v2973, %v3145
        %v3147 = vpop.f32.mrb[0].mxu0
        %v3148 = vpop.f32.mrb[0].mxu0
        %v3149 = vadd.f32 %v2973, %v3148
        %v3150 = vpop.f32.mrb[0].mxu0
        %3151 = vmatprep.mubr.bf16.mxu0 0
        %3152 = vmatmul.mubr.bf16.gmra.mrb[0].mxu0 %v2948
        %v3153 = vpop.f32.mrb[0].mxu0
        %v3154 = vadd.f32 %v2973, %v3153
        %v3155 = vpop.f32.mrb[0].mxu0
        %v3156 = vpop.f32.mrb[0].mxu0
        %v3157 = vadd.f32 %v2973, %v3156
        %v3158 = vpop.f32.mrb[0].mxu0
        %3159 = vmatprep.mubr.bf16.mxu0 0
        %3160 = vmatmul.mubr.bf16.gmra.mrb[0].mxu0 %v2949
        %v3161 = vpop.f32.mrb[0].mxu0
        %v3162 = vadd.f32 %v2973, %v3161
        %v3163 = vpop.f32.mrb[0].mxu0
        %v3164 = vpop.f32.mrb[0].mxu0
        %v3165 = vadd.f32 %v2973, %v3164
        %v3166 = vpop.f32.mrb[0].mxu0
        %3167 = vmatprep.mubr.bf16.mxu0 0
        %3168 = vmatmul.mubr.bf16.gmra.mrb[0].mxu0 %v2950
        %v3169 = vpop.f32.mrb[0].mxu0
        %v3170 = vadd.f32 %v2973, %v3169
        %v3171 = vpop.f32.mrb[0].mxu0
        %v3172 = vpop.f32.mrb[0].mxu0
        %v3173 = vadd.f32 %v2973, %v3172
        %v3174 = vpop.f32.mrb[0].mxu0
        %3175 = vmatprep.mubr.bf16.mxu0 0
        %3176 = vmatmul.mubr.bf16.gmra.mrb[0].mxu0 %v2951
        %v3177 = vpop.f32.mrb[0].mxu0
        %v3178 = vadd.f32 %v2973, %v3177
        %v3179 = vpop.f32.mrb[0].mxu0
        %v3180 = vpop.f32.mrb[0].mxu0
        %v3181 = vadd.f32 %v2973, %v3180
        %v3182 = vpop.f32.mrb[0].mxu0
        %3183 = vdwg.mxu0
        %v3184 = vadd.f32 %v3058, %v2872
        %v3185 = vadd.f32 %v3061, %v2873
        %v3186 = vadd.f32 %v3066, %v2874
        %v3187 = vadd.f32 %v3069, %v2875
        %v3188 = vadd.f32 %v3074, %v2876
        %v3189 = vadd.f32 %v3077, %v2877
        %v3190 = vadd.f32 %v3082, %v2878
        %v3191 = vadd.f32 %v3085, %v2879
        %v3192 = vadd.f32 %v3090, %v2880
        %v3193 = vadd.f32 %v3093, %v2881
        %v3194 = vadd.f32 %v3098, %v2882
        %v3195 = vadd.f32 %v3101, %v2883
        %v3196 = vadd.f32 %v3106, %v2884
        %v3197 = vadd.f32 %v3109, %v2885
        %v3198 = vadd.f32 %v3114, %v2886
        %v3199 = vadd.f32 %v3117, %v2887
        %v3200 = vadd.f32 %v3122, %v2888
        %v3201 = vadd.f32 %v3125, %v2889
        %v3202 = vadd.f32 %v3130, %v2890
        %v3203 = vadd.f32 %v3133, %v2891
        %v3204 = vadd.f32 %v3138, %v2892
        %v3205 = vadd.f32 %v3141, %v2893
        %v3206 = vadd.f32 %v3146, %v2894
        %v3207 = vadd.f32 %v3149, %v2895
        %v3208 = vadd.f32 %v3154, %v2896
        %v3209 = vadd.f32 %v3157, %v2897
        %v3210 = vadd.f32 %v3162, %v2898
        %v3211 = vadd.f32 %v3165, %v2899
        %v3212 = vadd.f32 %v3170, %v2900
        %v3213 = vadd.f32 %v3173, %v2901
        %v3214 = vadd.f32 %v3178, %v2902
        %v3215 = vadd.f32 %v3181, %v2903
        %vm3216 = vcmp.ge.f32.partialorder %v3184, 0.0
        %vm3217 = vcmp.ge.f32.partialorder %v3185, 0.0
        %vm3218 = vcmp.ge.f32.partialorder %v3186, 0.0
        %vm3219 = vcmp.ge.f32.partialorder %v3187, 0.0
        %vm3220 = vcmp.ge.f32.partialorder %v3188, 0.0
        %vm3221 = vcmp.ge.f32.partialorder %v3189, 0.0
        %vm3222 = vcmp.ge.f32.partialorder %v3190, 0.0
        %vm3223 = vcmp.ge.f32.partialorder %v3191, 0.0
        %vm3224 = vcmp.ge.f32.partialorder %v3192, 0.0
        %vm3225 = vcmp.ge.f32.partialorder %v3193, 0.0
        %vm3226 = vcmp.ge.f32.partialorder %v3194, 0.0
        %vm3227 = vcmp.ge.f32.partialorder %v3195, 0.0
        %vm3228 = vcmp.ge.f32.partialorder %v3196, 0.0
        %vm3229 = vcmp.ge.f32.partialorder %v3197, 0.0
        %vm3230 = vcmp.ge.f32.partialorder %v3198, 0.0
        %vm3231 = vcmp.ge.f32.partialorder %v3199, 0.0
        %vm3232 = vcmp.ge.f32.partialorder %v3200, 0.0
        %vm3233 = vcmp.ge.f32.partialorder %v3201, 0.0
        %vm3234 = vcmp.ge.f32.partialorder %v3202, 0.0
        %vm3235 = vcmp.ge.f32.partialorder %v3203, 0.0
        %vm3236 = vcmp.ge.f32.partialorder %v3204, 0.0
        %vm3237 = vcmp.ge.f32.partialorder %v3205, 0.0
        %vm3238 = vcmp.ge.f32.partialorder %v3206, 0.0
        %vm3239 = vcmp.ge.f32.partialorder %v3207, 0.0
        %vm3240 = vcmp.ge.f32.partialorder %v3208, 0.0
        %vm3241 = vcmp.ge.f32.partialorder %v3209, 0.0
        %vm3242 = vcmp.ge.f32.partialorder %v3210, 0.0
        %vm3243 = vcmp.ge.f32.partialorder %v3211, 0.0
        %vm3244 = vcmp.ge.f32.partialorder %v3212, 0.0
        %vm3245 = vcmp.ge.f32.partialorder %v3213, 0.0
        %vm3246 = vcmp.ge.f32.partialorder %v3214, 0.0
        %vm3247 = vcmp.ge.f32.partialorder %v3215, 0.0
        %v3248 = vmul.f32 %v2839, %v3184
        %v3249 = vmul.f32 %v2839, %v3185
        %v3250 = vmul.f32 %v2839, %v3186
        %v3251 = vmul.f32 %v2839, %v3187
        %v3252 = vmul.f32 %v2839, %v3188
        %v3253 = vmul.f32 %v2839, %v3189
        %v3254 = vmul.f32 %v2839, %v3190
        %v3255 = vmul.f32 %v2839, %v3191
        %v3256 = vmul.f32 %v2839, %v3192
        %v3257 = vmul.f32 %v2839, %v3193
        %v3258 = vmul.f32 %v2839, %v3194
        %v3259 = vmul.f32 %v2839, %v3195
        %v3260 = vmul.f32 %v2839, %v3196
        %v3261 = vmul.f32 %v2839, %v3197
        %v3262 = vmul.f32 %v2839, %v3198
        %v3263 = vmul.f32 %v2839, %v3199
        %v3264 = vmul.f32 %v2839, %v3200
        %v3265 = vmul.f32 %v2839, %v3201
        %v3266 = vmul.f32 %v2839, %v3202
        %v3267 = vmul.f32 %v2839, %v3203
        %v3268 = vmul.f32 %v2839, %v3204
        %v3269 = vmul.f32 %v2839, %v3205
        %v3270 = vmul.f32 %v2839, %v3206
        %v3271 = vmul.f32 %v2839, %v3207
        %v3272 = vmul.f32 %v2839, %v3208
        %v3273 = vmul.f32 %v2839, %v3209
        %v3274 = vmul.f32 %v2839, %v3210
        %v3275 = vmul.f32 %v2839, %v3211
        %v3276 = vmul.f32 %v2839, %v3212
        %v3277 = vmul.f32 %v2839, %v3213
        %v3278 = vmul.f32 %v2839, %v3214
        %v3279 = vmul.f32 %v2839, %v3215
        %v3280 = vsel %vm3216, %v3184, %v3248
        %v3281 = vsel %vm3217, %v3185, %v3249
        %v3282 = vsel %vm3218, %v3186, %v3250
        %v3283 = vsel %vm3219, %v3187, %v3251
        %v3284 = vsel %vm3220, %v3188, %v3252
        %v3285 = vsel %vm3221, %v3189, %v3253
        %v3286 = vsel %vm3222, %v3190, %v3254
        %v3287 = vsel %vm3223, %v3191, %v3255
        %v3288 = vsel %vm3224, %v3192, %v3256
        %v3289 = vsel %vm3225, %v3193, %v3257
        %v3290 = vsel %vm3226, %v3194, %v3258
        %v3291 = vsel %vm3227, %v3195, %v3259
        %v3292 = vsel %vm3228, %v3196, %v3260
        %v3293 = vsel %vm3229, %v3197, %v3261
        %v3294 = vsel %vm3230, %v3198, %v3262
        %v3295 = vsel %vm3231, %v3199, %v3263
        %v3296 = vsel %vm3232, %v3200, %v3264
        %v3297 = vsel %vm3233, %v3201, %v3265
        %v3298 = vsel %vm3234, %v3202, %v3266
        %v3299 = vsel %vm3235, %v3203, %v3267
        %v3300 = vsel %vm3236, %v3204, %v3268
        %v3301 = vsel %vm3237, %v3205, %v3269
        %v3302 = vsel %vm3238, %v3206, %v3270
        %v3303 = vsel %vm3239, %v3207, %v3271
        %v3304 = vsel %vm3240, %v3208, %v3272
        %v3305 = vsel %vm3241, %v3209, %v3273
        %v3306 = vsel %vm3242, %v3210, %v3274
        %v3307 = vsel %vm3243, %v3211, %v3275
        %v3308 = vsel %vm3244, %v3212, %v3276
        %v3309 = vsel %vm3245, %v3213, %v3277
        %v3310 = vsel %vm3246, %v3214, %v3278
        %v3311 = vsel %vm3247, %v3215, %v3279
        %v3312 = vpack.c.bf16 %v3281, %v3280
        %v3313 = vpack.c.bf16 %v3283, %v3282
        %v3314 = vpack.c.bf16 %v3285, %v3284
        %v3315 = vpack.c.bf16 %v3287, %v3286
        %v3316 = vpack.c.bf16 %v3289, %v3288
        %v3317 = vpack.c.bf16 %v3291, %v3290
        %v3318 = vpack.c.bf16 %v3293, %v3292
        %v3319 = vpack.c.bf16 %v3295, %v3294
        %v3320 = vpack.c.bf16 %v3297, %v3296
        %v3321 = vpack.c.bf16 %v3299, %v3298
        %v3322 = vpack.c.bf16 %v3301, %v3300
        %v3323 = vpack.c.bf16 %v3303, %v3302
        %v3324 = vpack.c.bf16 %v3305, %v3304
        %v3325 = vpack.c.bf16 %v3307, %v3306
        %v3326 = vpack.c.bf16 %v3309, %v3308
        %v3327 = vpack.c.bf16 %v3311, %v3310
        %v3328 = vld [vmem:[%s10] sm:$0xf]
        %v3329 = vld [vmem:[%s10 + $0x4] sm:$0xf]
        %v3330 = vld [vmem:[%s10 + $0x8] sm:$0xf]
        %v3331 = vld [vmem:[%s10 + $0xc] sm:$0xf]
        %v3332 = vld [vmem:[%s10 + $0x10] sm:$0xf]
        %v3333 = vld [vmem:[%s10 + $0x14] sm:$0xf]
        %v3334 = vld [vmem:[%s10 + $0x18] sm:$0xf]
        %v3335 = vld [vmem:[%s10 + $0x1c] sm:$0xf]
        %v3336 = vld [vmem:[%s10 + $0x20] sm:$0xf]
        %v3337 = vld [vmem:[%s10 + $0x24] sm:$0xf]
        %v3338 = vld [vmem:[%s10 + $0x28] sm:$0xf]
        %v3339 = vld [vmem:[%s10 + $0x2c] sm:$0xf]
        %v3340 = vld [vmem:[%s10 + $0x30] sm:$0xf]
        %v3341 = vld [vmem:[%s10 + $0x34] sm:$0xf]
        %v3342 = vld [vmem:[%s10 + $0x38] sm:$0xf]
        %v3343 = vld [vmem:[%s10 + $0x3c] sm:$0xf]
        %v3344 = vld [vmem:[%s11] sm:$0x1]
        %v3346 = vlaneseq
        %v3347 = vshrl.u32 %v3346, 7
        %v3348 = vsub.s32 0, %v3347
        %v3349 = vrot.slane %v3344, %v3348
        %v3367 = vunpack.c.l.b16 %v3328
        %v3368 = vunpack.c.l.b16 %v3329
        %v3369 = vunpack.c.l.b16 %v3330
        %v3370 = vunpack.c.l.b16 %v3331
        %v3371 = vunpack.c.l.b16 %v3332
        %v3372 = vunpack.c.l.b16 %v3333
        %v3373 = vunpack.c.l.b16 %v3334
        %v3374 = vunpack.c.l.b16 %v3335
        %v3375 = vunpack.c.l.b16 %v3336
        %v3376 = vunpack.c.l.b16 %v3337
        %v3377 = vunpack.c.l.b16 %v3338
        %v3378 = vunpack.c.l.b16 %v3339
        %v3379 = vunpack.c.l.b16 %v3340
        %v3380 = vunpack.c.l.b16 %v3341
        %v3381 = vunpack.c.l.b16 %v3342
        %v3382 = vunpack.c.l.b16 %v3343
        %v3383 = vpack.c.b16 %v3368, %v3367
        %v3384 = vpack.c.b16 %v3370, %v3369
        %v3385 = vpack.c.b16 %v3372, %v3371
        %v3386 = vpack.c.b16 %v3374, %v3373
        %v3387 = vpack.c.b16 %v3376, %v3375
        %v3388 = vpack.c.b16 %v3378, %v3377
        %v3389 = vpack.c.b16 %v3380, %v3379
        %v3390 = vpack.c.b16 %v3382, %v3381
        %3399 = vmatprep.subr.bf16.mxu0 0
        %3400 = vmatpush1.bf16.msra.mxu0 %v3383
        %3401 = vmatprep.subr.bf16.mxu0 0
        %3402 = vmatpush1.bf16.msra.mxu0 %v3384
        %3403 = vmatprep.subr.bf16.mxu0 0
        %3404 = vmatpush1.bf16.msra.mxu0 %v3385
        %3405 = vmatprep.subr.bf16.mxu0 0
        %3406 = vmatpush1.bf16.msra.mxu0 %v3386
        %3407 = vmatprep.subr.bf16.mxu0 0
        %3408 = vmatpush1.bf16.msra.mxu0 %v3387
        %3409 = vmatprep.subr.bf16.mxu0 0
        %3410 = vmatpush1.bf16.msra.mxu0 %v3388
        %3411 = vmatprep.subr.bf16.mxu0 0
        %3412 = vmatpush1.bf16.msra.mxu0 %v3389
        %3413 = vmatprep.subr.bf16.mxu0 0
        %3414 = vmatpush1.bf16.msra.mxu0 %v3390
        %3415 = vmatprep.subr.bf16.mxu0 0
        %3416 = vmatpush1.bf16.msra.mxu0 0
        %3417 = vmatprep.subr.bf16.mxu0 0
        %3418 = vmatpush1.bf16.msra.mxu0 0
        %3419 = vmatprep.subr.bf16.mxu0 0
        %3420 = vmatpush1.bf16.msra.mxu0 0
        %3421 = vmatprep.subr.bf16.mxu0 0
        %3422 = vmatpush1.bf16.msra.mxu0 0
        %3423 = vmatprep.subr.bf16.mxu0 0
        %3424 = vmatpush1.bf16.msra.mxu0 0
        %3425 = vmatprep.subr.bf16.mxu0 0
        %3426 = vmatpush1.bf16.msra.mxu0 0
        %3427 = vmatprep.subr.bf16.mxu0 0
        %3428 = vmatpush1.bf16.msra.mxu0 0
        %3429 = vmatprep.subr.bf16.mxu0 0
        %3430 = vmatpush1.bf16.msra.mxu0 0
        %3431 = vmatprep.mubr.bf16.mxu0 0
        %3432 = vmatmul.mubr.bf16.gmra.mrb[0].mxu0 %v3312
        %v3433 = vpop.f32.mrb[0].mxu0
        %v3434 = vadd.f32 %v3349, %v3433
        %v3435 = vpop.f32.mrb[0].mxu0
        %v3436 = vpop.f32.mrb[0].mxu0
        %v3437 = vadd.f32 %v3349, %v3436
        %v3438 = vpop.f32.mrb[0].mxu0
        %3439 = vmatprep.mubr.bf16.mxu0 0
        %3440 = vmatmul.mubr.bf16.gmra.mrb[0].mxu0 %v3313
        %v3441 = vpop.f32.mrb[0].mxu0
        %v3442 = vadd.f32 %v3349, %v3441
        %v3443 = vpop.f32.mrb[0].mxu0
        %v3444 = vpop.f32.mrb[0].mxu0
        %v3445 = vadd.f32 %v3349, %v3444
        %v3446 = vpop.f32.mrb[0].mxu0
        %3447 = vmatprep.mubr.bf16.mxu0 0
        %3448 = vmatmul.mubr.bf16.gmra.mrb[0].mxu0 %v3314
        %v3449 = vpop.f32.mrb[0].mxu0
        %v3450 = vadd.f32 %v3349, %v3449
        %v3451 = vpop.f32.mrb[0].mxu0
        %v3452 = vpop.f32.mrb[0].mxu0
        %v3453 = vadd.f32 %v3349, %v3452
        %v3454 = vpop.f32.mrb[0].mxu0
        %3455 = vmatprep.mubr.bf16.mxu0 0
        %3456 = vmatmul.mubr.bf16.gmra.mrb[0].mxu0 %v3315
        %v3457 = vpop.f32.mrb[0].mxu0
        %v3458 = vadd.f32 %v3349, %v3457
        %v3459 = vpop.f32.mrb[0].mxu0
        %v3460 = vpop.f32.mrb[0].mxu0
        %v3461 = vadd.f32 %v3349, %v3460
        %v3462 = vpop.f32.mrb[0].mxu0
        %3463 = vmatprep.mubr.bf16.mxu0 0
        %3464 = vmatmul.mubr.bf16.gmra.mrb[0].mxu0 %v3316
        %v3465 = vpop.f32.mrb[0].mxu0
        %v3466 = vadd.f32 %v3349, %v3465
        %v3467 = vpop.f32.mrb[0].mxu0
        %v3468 = vpop.f32.mrb[0].mxu0
        %v3469 = vadd.f32 %v3349, %v3468
        %v3470 = vpop.f32.mrb[0].mxu0
        %3471 = vmatprep.mubr.bf16.mxu0 0
        %3472 = vmatmul.mubr.bf16.gmra.mrb[0].mxu0 %v3317
        %v3473 = vpop.f32.mrb[0].mxu0
        %v3474 = vadd.f32 %v3349, %v3473
        %v3475 = vpop.f32.mrb[0].mxu0
        %v3476 = vpop.f32.mrb[0].mxu0
        %v3477 = vadd.f32 %v3349, %v3476
        %v3478 = vpop.f32.mrb[0].mxu0
        %3479 = vmatprep.mubr.bf16.mxu0 0
        %3480 = vmatmul.mubr.bf16.gmra.mrb[0].mxu0 %v3318
        %v3481 = vpop.f32.mrb[0].mxu0
        %v3482 = vadd.f32 %v3349, %v3481
        %v3483 = vpop.f32.mrb[0].mxu0
        %v3484 = vpop.f32.mrb[0].mxu0
        %v3485 = vadd.f32 %v3349, %v3484
        %v3486 = vpop.f32.mrb[0].mxu0
        %3487 = vmatprep.mubr.bf16.mxu0 0
        %3488 = vmatmul.mubr.bf16.gmra.mrb[0].mxu0 %v3319
        %v3489 = vpop.f32.mrb[0].mxu0
        %v3490 = vadd.f32 %v3349, %v3489
        %v3491 = vpop.f32.mrb[0].mxu0
        %v3492 = vpop.f32.mrb[0].mxu0
        %v3493 = vadd.f32 %v3349, %v3492
        %v3494 = vpop.f32.mrb[0].mxu0
        %3495 = vmatprep.mubr.bf16.mxu0 0
        %3496 = vmatmul.mubr.bf16.gmra.mrb[0].mxu0 %v3320
        %v3497 = vpop.f32.mrb[0].mxu0
        %v3498 = vadd.f32 %v3349, %v3497
        %v3499 = vpop.f32.mrb[0].mxu0
        %v3500 = vpop.f32.mrb[0].mxu0
        %v3501 = vadd.f32 %v3349, %v3500
        %v3502 = vpop.f32.mrb[0].mxu0
        %3503 = vmatprep.mubr.bf16.mxu0 0
        %3504 = vmatmul.mubr.bf16.gmra.mrb[0].mxu0 %v3321
        %v3505 = vpop.f32.mrb[0].mxu0
        %v3506 = vadd.f32 %v3349, %v3505
        %v3507 = vpop.f32.mrb[0].mxu0
        %v3508 = vpop.f32.mrb[0].mxu0
        %v3509 = vadd.f32 %v3349, %v3508
        %v3510 = vpop.f32.mrb[0].mxu0
        %3511 = vmatprep.mubr.bf16.mxu0 0
        %3512 = vmatmul.mubr.bf16.gmra.mrb[0].mxu0 %v3322
        %v3513 = vpop.f32.mrb[0].mxu0
        %v3514 = vadd.f32 %v3349, %v3513
        %v3515 = vpop.f32.mrb[0].mxu0
        %v3516 = vpop.f32.mrb[0].mxu0
        %v3517 = vadd.f32 %v3349, %v3516
        %v3518 = vpop.f32.mrb[0].mxu0
        %3519 = vmatprep.mubr.bf16.mxu0 0
        %3520 = vmatmul.mubr.bf16.gmra.mrb[0].mxu0 %v3323
        %v3521 = vpop.f32.mrb[0].mxu0
        %v3522 = vadd.f32 %v3349, %v3521
        %v3523 = vpop.f32.mrb[0].mxu0
        %v3524 = vpop.f32.mrb[0].mxu0
        %v3525 = vadd.f32 %v3349, %v3524
        %v3526 = vpop.f32.mrb[0].mxu0
        %3527 = vmatprep.mubr.bf16.mxu0 0
        %3528 = vmatmul.mubr.bf16.gmra.mrb[0].mxu0 %v3324
        %v3529 = vpop.f32.mrb[0].mxu0
        %v3530 = vadd.f32 %v3349, %v3529
        %v3531 = vpop.f32.mrb[0].mxu0
        %v3532 = vpop.f32.mrb[0].mxu0
        %v3533 = vadd.f32 %v3349, %v3532
        %v3534 = vpop.f32.mrb[0].mxu0
        %3535 = vmatprep.mubr.bf16.mxu0 0
        %3536 = vmatmul.mubr.bf16.gmra.mrb[0].mxu0 %v3325
        %v3537 = vpop.f32.mrb[0].mxu0
        %v3538 = vadd.f32 %v3349, %v3537
        %v3539 = vpop.f32.mrb[0].mxu0
        %v3540 = vpop.f32.mrb[0].mxu0
        %v3541 = vadd.f32 %v3349, %v3540
        %v3542 = vpop.f32.mrb[0].mxu0
        %3543 = vmatprep.mubr.bf16.mxu0 0
        %3544 = vmatmul.mubr.bf16.gmra.mrb[0].mxu0 %v3326
        %v3545 = vpop.f32.mrb[0].mxu0
        %v3546 = vadd.f32 %v3349, %v3545
        %v3547 = vpop.f32.mrb[0].mxu0
        %v3548 = vpop.f32.mrb[0].mxu0
        %v3549 = vadd.f32 %v3349, %v3548
        %v3550 = vpop.f32.mrb[0].mxu0
        %3551 = vmatprep.mubr.bf16.mxu0 0
        %3552 = vmatmul.mubr.bf16.gmra.mrb[0].mxu0 %v3327
        %v3553 = vpop.f32.mrb[0].mxu0
        %v3554 = vadd.f32 %v3349, %v3553
        %v3555 = vpop.f32.mrb[0].mxu0
        %v3556 = vpop.f32.mrb[0].mxu0
        %v3557 = vadd.f32 %v3349, %v3556
        %v3558 = vpop.f32.mrb[0].mxu0
        %3559 = vdwg.mxu0
        %3560 = vst [vmem:[%s685] sm:$0xff] %v3434
        %3561 = vst [vmem:[%s685 + $0x8] sm:$0xff] %v3437
        %3562 = vst [vmem:[%s685 + $0x10] sm:$0xff] %v3442
        %3563 = vst [vmem:[%s685 + $0x18] sm:$0xff] %v3445
        %3564 = vst [vmem:[%s685 + $0x20] sm:$0xff] %v3450
        %3565 = vst [vmem:[%s685 + $0x28] sm:$0xff] %v3453
        %3566 = vst [vmem:[%s685 + $0x30] sm:$0xff] %v3458
        %3567 = vst [vmem:[%s685 + $0x38] sm:$0xff] %v3461
        %3568 = vst [vmem:[%s685 + $0x40] sm:$0xff] %v3466
        %3569 = vst [vmem:[%s685 + $0x48] sm:$0xff] %v3469
        %3570 = vst [vmem:[%s685 + $0x50] sm:$0xff] %v3474
        %3571 = vst [vmem:[%s685 + $0x58] sm:$0xff] %v3477
        %3572 = vst [vmem:[%s685 + $0x60] sm:$0xff] %v3482
        %3573 = vst [vmem:[%s685 + $0x68] sm:$0xff] %v3485
        %3574 = vst [vmem:[%s685 + $0x70] sm:$0xff] %v3490
        %3575 = vst [vmem:[%s685 + $0x78] sm:$0xff] %v3493
        %3576 = vst [vmem:[%s685 + $0x80] sm:$0xff] %v3498
        %3577 = vst [vmem:[%s685 + $0x88] sm:$0xff] %v3501
        %3578 = vst [vmem:[%s685 + $0x90] sm:$0xff] %v3506
        %3579 = vst [vmem:[%s685 + $0x98] sm:$0xff] %v3509
        %3580 = vst [vmem:[%s685 + $0xa0] sm:$0xff] %v3514
        %3581 = vst [vmem:[%s685 + $0xa8] sm:$0xff] %v3517
        %3582 = vst [vmem:[%s685 + $0xb0] sm:$0xff] %v3522
        %3583 = vst [vmem:[%s685 + $0xb8] sm:$0xff] %v3525
        %3584 = vst [vmem:[%s685 + $0xc0] sm:$0xff] %v3530
        %3585 = vst [vmem:[%s685 + $0xc8] sm:$0xff] %v3533
        %3586 = vst [vmem:[%s685 + $0xd0] sm:$0xff] %v3538
        %3587 = vst [vmem:[%s685 + $0xd8] sm:$0xff] %v3541
        %3588 = vst [vmem:[%s685 + $0xe0] sm:$0xff] %v3546
        %3589 = vst [vmem:[%s685 + $0xe8] sm:$0xff] %v3549
        %3590 = vst [vmem:[%s685 + $0xf0] sm:$0xff] %v3554
        %3591 = vst [vmem:[%s685 + $0xf8] sm:$0xff] %v3557
        %s3592 = sand.u32 %s276, 1
        %s3593 = scalar_lea.sflag [#allocation6], %s3592
        %s3594 = sand.u32 %s276, 1
        %s3595 = smul.addr %s3594, 256
        %s3596 = scalar_lea.vmem [#allocation5], %s3595
        // Predicated region
        $region106: #{tpu_custom_call.1} parent=100 // pred_check
          %p3597 = pneg %p286
        $region107: #{tpu_custom_call.1} parent=100 // pred_check_branch
          %3599 = sbr.rel (%p3597) target = $region109
        $region108: #{tpu_custom_call.1} parent=100 // pred_region
          %s3600 = smul.u32 32, %s32
          %s3602 = ssub.s32 4096, 4096
          %3603 = vsyncadd %s3593, %s3602
          %s3604 = smul.addr %s3600, 128
          %s3605 = scalar_lea.hbm %s12, %s3604
          %s3606 = sshll.u32 %s3596, 4
          %s3607 = int_to_ptr.vmem [resolvable:$true] %s3606
          %3612 = dma.vmem_to_hbm [thread:$0]  %s3607, 4096, %s3605, %s3593, 128, 128, 8
        $region109: #{tpu_custom_call.1} parent=100 // pred_fallthru
          _
      $region101: #{tpu_custom_call.1} parent=5 // pred_fallthru
        _
      %p3613 = scmp.le.s32.totalorder 2, %s27
      // Predicated region
      $region110: #{tpu_custom_call.1} parent=5 // pred_check
        %p3614 = pneg %p3613
      $region111: #{tpu_custom_call.1} parent=5 // pred_check_branch
        %3616 = sbr.rel (%p3614) target = $region113
      $region112: #{tpu_custom_call.1} parent=5 // pred_region
        %s3617 = ssub.s32 %s27, 2
        // Predicated region
        $region114: #{tpu_custom_call.1} parent=112 // pred_check
          %p3618 = pneg %p292
        $region115: #{tpu_custom_call.1} parent=112 // pred_check_branch
          %3620 = sbr.rel (%p3618) target = $region117
        $region116: #{tpu_custom_call.1} parent=112 // pred_region
          %s3621 = sand.u32 %s277, 1
          %s3622 = scalar_lea.sflag [#allocation6], %s3621
          %s3623 = sand.u32 %s277, 1
          %s3624 = smul.addr %s3623, 256
          %s3625 = scalar_lea.vmem [#allocation5], %s3624
          %3626 = dma.done %s3622, 4096
        $region117: #{tpu_custom_call.1} parent=112 // pred_fallthru
          _
      $region113: #{tpu_custom_call.1} parent=5 // pred_fallthru
        _
    $region6: #{tpu_custom_call.1} parent=1 // loop_footer
      %s31 = sadd.s32 1, %s27
    $region7: #{tpu_custom_call.1} parent=1 // loop_footer_branch
      %26 = sbr.rel target = $region3
    $region8: #{tpu_custom_call.1} parent=1 // loop_exit
      _
    %3627 = vsyncpa [#allocation6], 1
    %s3628 = scalar_lea.sflag [#allocation6], 1
    %3629 = vsyncpa %s3628, 1

</llo_original>
